<compile_context>
chip_gen: v7x
topology: tpu7x:2x2x1
jax: 0.10.0
libtpu: 0.0.40
codegen_flags: <defaults>
</compile_context>

<pallas_src>
import functools

import jax
import jax.numpy as jnp
from jax.experimental import pallas as pl
from jax.experimental.pallas import tpu as pltpu


def _circle_loss_kernel(x_ref, y_ref, yneg_ref, lse_n_ref, lse_p_ref,
                        m_n_ref, s_n_ref, m_p_ref, s_p_ref,
                        *, m, gamma):
    t = pl.program_id(1)
    last = pl.num_programs(1) - 1

    @pl.when(t == 0)
    def _init():
        m_n_ref[...] = jnp.full_like(m_n_ref, -jnp.inf)
        s_n_ref[...] = jnp.zeros_like(s_n_ref)
        m_p_ref[...] = jnp.full_like(m_p_ref, -jnp.inf)
        s_p_ref[...] = jnp.zeros_like(s_p_ref)

    x = x_ref[...].astype(jnp.float32)        # (TB, D)
    y = y_ref[...].astype(jnp.float32)        # (TB, D)
    yn = yneg_ref[...].astype(jnp.float32)    # (TB, K, D)
    TB, K, D = yn.shape

    delta_p = 1.0 - m
    delta_n = m
    hi = jax.lax.Precision.HIGHEST            # exact f32 matmuls on the MXU

    # ---- positive pairs: lane-dense (1, TB), D-reduction on the MXU ----
    sq_p = jnp.square(x - y)                                           # (TB, D)
    dpos2 = jnp.einsum("od,bd->ob", jnp.ones((1, D), jnp.float32), sq_p,
                       preferred_element_type=jnp.float32, precision=hi)
    sp = jnp.exp(jnp.sqrt(dpos2) * -0.5)                               # (1, TB)
    ap = jnp.maximum(1.0 + m - sp, 0.0)        # clamp_min(-sp + 1 + m, 0)
    logit_p = -ap * (sp - delta_p) * gamma                             # (1, TB)

    # ---- negative pairs: lane-dense (TB, 1, K), no x_rep, MXU reduction ----
    diff = yn - x[:, None, :]                                          # (TB, K, D)
    sq_n = diff * diff
    dneg2 = jnp.einsum("bod,bkd->bok", jnp.ones((TB, 1, D), jnp.float32),
                       sq_n, preferred_element_type=jnp.float32, precision=hi)
    sn = jnp.exp(jnp.sqrt(dneg2) * -0.5)                               # (TB, 1, K)
    an = jnp.maximum(sn + m, 0.0)              # clamp_min(sn + m, 0)
    logit_n = an * (sn - delta_n) * gamma                              # (TB, 1, K)

    # ---- online logsumexp accumulation (running max + rescaled sum) ----
    def _accumulate(logit, m_ref, s_ref):
        m_full = jnp.max(logit, keepdims=True)          # (1,...,1), same rank
        m_tile = m_full.reshape(1, 1)
        s_tile = jnp.sum(jnp.exp(logit - m_full), keepdims=True).reshape(1, 1)
        m_old = m_ref[...]
        m_new = jnp.maximum(m_old, m_tile)
        s_ref[...] = (s_ref[...] * jnp.exp(m_old - m_new)
                      + s_tile * jnp.exp(m_tile - m_new))
        m_ref[...] = m_new

    _accumulate(logit_n, m_n_ref, s_n_ref)
    _accumulate(logit_p, m_p_ref, s_p_ref)

    # ---- finalize: emit this split's partial logsumexps ----
    @pl.when(t == last)
    def _finalize():
        lse_n = m_n_ref[...] + jnp.log(s_n_ref[...])     # (1, 1)
        lse_p = m_p_ref[...] + jnp.log(s_p_ref[...])
        lse_n_ref[...] = jnp.broadcast_to(lse_n, lse_n_ref.shape)
        lse_p_ref[...] = jnp.broadcast_to(lse_p, lse_p_ref.shape)


def _vmem_working_set_bytes(tb, K, D, itemsize):
    """Double-buffered input tiles (x, y, y_neg) + in-kernel f32 intermediates
    (f32 cast of the y_neg tile, diff, diff^2) + small fixed overhead."""
    in_tiles = 2 * tb * (K + 2) * D * itemsize
    f32_live = 3 * tb * K * D * 4
    return in_tiles + f32_live + (256 << 10)


def _choose_batch_tile(B, K, D, itemsize, budget_bytes):
    """Largest batch tile TB dividing B (TB % 8 == 0 or TB == B) whose working
    set fits the budget, preferring >=2 grid steps and >=512-row y_neg tiles."""
    cands = sorted({tb for tb in range(8, B + 1, 8) if B % tb == 0} | {B})
    fitting = [tb for tb in cands
               if _vmem_working_set_bytes(tb, K, D, itemsize) <= budget_bytes]
    if not fitting:
        return cands[0]                       # smallest legal tile
    multi = [tb for tb in fitting if B // tb >= 2]   # keep DMA/compute overlap
    big = [tb for tb in multi if tb * K >= 512]      # >= ~0.25 MiB y_neg tiles
    pool = big or multi or fitting
    return max(pool)


def circle_loss4(x, y, y_neg, *, m, gamma, batch_tile=None, core_splits=None,
                 vmem_budget_bytes=20 * 1024 * 1024,
                 vmem_limit_bytes=32 * 1024 * 1024):
    """Pallas implementation of CircleLoss4.forward. Returns shape (1,) f32."""
    B, D = x.shape
    BK, Dn = y_neg.shape
    assert Dn == D and BK % B == 0
    K = BK // B
    y_neg3 = y_neg.reshape(B, K, D)           # rows contiguous -> free reshape

    itemsize = jnp.dtype(y_neg.dtype).itemsize
    if batch_tile is None:
        batch_tile = _choose_batch_tile(B, K, D, itemsize, vmem_budget_bytes)
    TB = batch_tile
    assert B % TB == 0, "batch_tile must divide the batch size"
    assert TB % 8 == 0 or TB == B, "batch_tile must be a multiple of 8 (or == B)"
    num_tiles = B // TB

    if core_splits is None:                   # shard the stream across 2 TCs (v7x)
        core_splits = 2 if (num_tiles % 2 == 0 and num_tiles >= 2) else 1
    assert num_tiles % core_splits == 0
    tps = num_tiles // core_splits
    grid = (core_splits, tps)

    cost = pl.CostEstimate(
        flops=int(5 * (BK + B) * D + 12 * (BK + B)),
        transcendentals=int(3 * (BK + B)),
        bytes_accessed=int((BK + 2 * B) * D * itemsize
                           + 2 * core_splits * 8 * 128 * 4),
    )

    out_block = pl.BlockSpec((8, 128), lambda c, t: (c, 0))
    # TODO(synk): if profiling shows exposed y_neg DMA at small tiles, add
    #             pipeline_mode=pl.Buffered(3) to the y_neg BlockSpec.
    lse_n_parts, lse_p_parts = pl.pallas_call(
        functools.partial(_circle_loss_kernel, m=float(m), gamma=float(gamma)),
        out_shape=(jax.ShapeDtypeStruct((core_splits * 8, 128), jnp.float32),
                   jax.ShapeDtypeStruct((core_splits * 8, 128), jnp.float32)),
        grid=grid,
        in_specs=[
            pl.BlockSpec((TB, D), lambda c, t: (c * tps + t, 0)),       # x
            pl.BlockSpec((TB, D), lambda c, t: (c * tps + t, 0)),       # y
            pl.BlockSpec((TB, K, D), lambda c, t: (c * tps + t, 0, 0)),  # y_neg
        ],
        out_specs=(out_block, out_block),
        scratch_shapes=[pltpu.VMEM((1, 1), jnp.float32)] * 4,  # m_n, s_n, m_p, s_p
        compiler_params=pltpu.CompilerParams(
            dimension_semantics=("parallel", "arbitrary"),
            vmem_limit_bytes=int(vmem_limit_bytes)),
        cost_estimate=cost,
    )(x, y, y_neg3)

    # Exact combine of the per-split partial logsumexps + stable softplus.
    lse_n = jax.nn.logsumexp(lse_n_parts.reshape(core_splits, 8, 128)[:, 0, 0])
    lse_p = jax.nn.logsumexp(lse_p_parts.reshape(core_splits, 8, 128)[:, 0, 0])
    return jax.nn.softplus(lse_n + lse_p).reshape(1)


def _reference(x, y, y_neg, m, gamma):
    """Pure-JAX reference mirroring the PyTorch forward (Euclidean manifold)."""
    B, D = x.shape
    K = y_neg.shape[0] // B
    dist_pos = jnp.sqrt(jnp.sum((x - y) ** 2, axis=-1)).reshape(-1, 1)
    x_neg = jnp.repeat(x, K, axis=0)                 # == x.repeat(1, K).reshape
    dist_neg = jnp.sqrt(jnp.sum((x_neg - y_neg) ** 2, axis=-1)).reshape(B, -1)
    sp = jnp.exp(-dist_pos / 2.0)
    sn = jnp.exp(-dist_neg / 2.0)
    ap = jnp.maximum(-sp + 1.0 + m, 0.0)
    an = jnp.maximum(sn + m, 0.0)
    delta_p, delta_n = 1.0 - m, m
    logit_p = -ap * (sp - delta_p) * gamma
    logit_n = an * (sn - delta_n) * gamma
    z = (jax.nn.logsumexp(logit_n.reshape(-1, 1), axis=0)
         + jax.nn.logsumexp(logit_p, axis=0))
    return jax.nn.softplus(z)


if __name__ == "__main__":
    key = jax.random.PRNGKey(0)
    B, K, D = 16, 32, 128         # batch, negatives-per-sample, embedding dim
    m, gamma = 0.25, 64.0         # deterministic hyper-params from __init__

    kx, ky, kn = jax.random.split(key, 3)
    x = jax.random.normal(kx, (B, D), dtype=jnp.float32)
    y = jax.random.normal(ky, (B, D), dtype=jnp.float32)
    y_neg = jax.random.normal(kn, (B * K, D), dtype=jnp.float32)

    ref = _reference(x, y, y_neg, m, gamma)

    # 2-way core split (grid (2, 1)): the v7x two-TensorCore path.
    out_split = circle_loss4(x, y, y_neg, m=m, gamma=gamma, batch_tile=8)
    jax.block_until_ready(out_split)
    assert out_split.shape == (1,)
    assert jnp.allclose(out_split, ref, rtol=1e-4, atol=1e-4), (out_split, ref)

    # Single split, multi-step stream (grid (1, 2)): exercises the online LSE
    # accumulation across batch tiles.
    out_stream = circle_loss4(x, y, y_neg, m=m, gamma=gamma,
                              batch_tile=8, core_splits=1)
    jax.block_until_ready(out_stream)
    assert jnp.allclose(out_stream, ref, rtol=1e-4, atol=1e-4), (out_stream, ref)

    # Single whole-batch tile (grid (1, 1)).
    out_one = circle_loss4(x, y, y_neg, m=m, gamma=gamma, batch_tile=16)
    jax.block_until_ready(out_one)
    assert jnp.allclose(out_one, ref, rtol=1e-4, atol=1e-4), (out_one, ref)

    # Default path: automatic tile / split selection under the VMEM budget.
    out_auto = circle_loss4(x, y, y_neg, m=m, gamma=gamma)
    jax.block_until_ready(out_auto)
    assert jnp.allclose(out_auto, ref, rtol=1e-4, atol=1e-4), (out_auto, ref)

    print("KERNEL_OK")
</pallas_src>

<mosaic_0001>
module attributes {stable_mosaic.version = 11 : i64} {
  func.func @_circle_loss_kernel(%arg0: i32, %arg1: i32, %arg2: memref<8x128xf32, #tpu.memory_space<vmem>>, %arg3: memref<8x128xf32, #tpu.memory_space<vmem>>, %arg4: memref<8x32x128xf32, #tpu.memory_space<vmem>>, %arg5: memref<8x128xf32, #tpu.memory_space<vmem>>, %arg6: memref<8x128xf32, #tpu.memory_space<vmem>>, %arg7: memref<1x1xf32, #tpu.memory_space<vmem>>, %arg8: memref<1x1xf32, #tpu.memory_space<vmem>>, %arg9: memref<1x1xf32, #tpu.memory_space<vmem>>, %arg10: memref<1x1xf32, #tpu.memory_space<vmem>>) attributes {dimension_semantics = [#tpu.dimension_semantics<parallel>, #tpu.dimension_semantics<arbitrary>], iteration_bounds = array<i64: 2, 1>, scalar_prefetch = 0 : i64, scratch_operands = 4 : i64, tpu.core_type = #tpu.core_type<tc>, window_params = [{transform_indices = @transform_0, window_bounds = array<i64: 8, 128>}, {transform_indices = @transform_1, window_bounds = array<i64: 8, 128>}, {transform_indices = @transform_2, window_bounds = array<i64: 8, 32, 128>}, {transform_indices = @transform_3, window_bounds = array<i64: 8, 128>}, {transform_indices = @transform_4, window_bounds = array<i64: 8, 128>}]} {
    %c0_i32 = arith.constant 0 : i32
    %0 = arith.cmpi eq, %arg1, %c0_i32 : i32
    %1 = arith.extui %0 : i1 to i32
    %c0_i32_0 = arith.constant 0 : i32
    %2 = arith.cmpi ne, %1, %c0_i32_0 : i32
    scf.if %2 {
      %cst_43 = arith.constant 0xFF800000 : f32
      %99 = vector.broadcast %cst_43 : f32 to vector<1x1xf32>
      %c0_44 = arith.constant 0 : index
      %c0_45 = arith.constant 0 : index
      %100 = vector.load %arg7[%c0_44, %c0_45] : memref<1x1xf32, #tpu.memory_space<vmem>>, vector<1x1xf32>
      tpu.vector_store %arg7[%c0_44, %c0_45], %99 {strides = array<i32>} : memref<1x1xf32, #tpu.memory_space<vmem>>, vector<1x1xf32>,
      %cst_46 = arith.constant 0.000000e+00 : f32
      %101 = vector.broadcast %cst_46 : f32 to vector<1x1xf32>
      %c0_47 = arith.constant 0 : index
      %c0_48 = arith.constant 0 : index
      %102 = vector.load %arg8[%c0_47, %c0_48] : memref<1x1xf32, #tpu.memory_space<vmem>>, vector<1x1xf32>
      tpu.vector_store %arg8[%c0_47, %c0_48], %101 {strides = array<i32>} : memref<1x1xf32, #tpu.memory_space<vmem>>, vector<1x1xf32>,
      %cst_49 = arith.constant 0xFF800000 : f32
      %103 = vector.broadcast %cst_49 : f32 to vector<1x1xf32>
      %c0_50 = arith.constant 0 : index
      %c0_51 = arith.constant 0 : index
      %104 = vector.load %arg9[%c0_50, %c0_51] : memref<1x1xf32, #tpu.memory_space<vmem>>, vector<1x1xf32>
      tpu.vector_store %arg9[%c0_50, %c0_51], %103 {strides = array<i32>} : memref<1x1xf32, #tpu.memory_space<vmem>>, vector<1x1xf32>,
      %cst_52 = arith.constant 0.000000e+00 : f32
      %105 = vector.broadcast %cst_52 : f32 to vector<1x1xf32>
      %c0_53 = arith.constant 0 : index
      %c0_54 = arith.constant 0 : index
      %106 = vector.load %arg10[%c0_53, %c0_54] : memref<1x1xf32, #tpu.memory_space<vmem>>, vector<1x1xf32>
      tpu.vector_store %arg10[%c0_53, %c0_54], %105 {strides = array<i32>} : memref<1x1xf32, #tpu.memory_space<vmem>>, vector<1x1xf32>,
    } else {
    }
    %c0 = arith.constant 0 : index
    %c0_1 = arith.constant 0 : index
    %3 = vector.load %arg2[%c0, %c0_1] : memref<8x128xf32, #tpu.memory_space<vmem>>, vector<8x128xf32>
    %c0_2 = arith.constant 0 : index
    %c0_3 = arith.constant 0 : index
    %4 = vector.load %arg3[%c0_2, %c0_3] : memref<8x128xf32, #tpu.memory_space<vmem>>, vector<8x128xf32>
    %c0_4 = arith.constant 0 : index
    %c0_5 = arith.constant 0 : index
    %c0_6 = arith.constant 0 : index
    %5 = vector.load %arg4[%c0_4, %c0_5, %c0_6] : memref<8x32x128xf32, #tpu.memory_space<vmem>>, vector<8x32x128xf32>
    %6 = arith.subf %3, %4 : vector<8x128xf32>
    %7 = arith.mulf %6, %6 : vector<8x128xf32>
    %cst = arith.constant 1.000000e+00 : f32
    %8 = vector.broadcast %cst : f32 to vector<1x128xf32>
    "tpu.trace_start"() <{level = 10 : i32, message = "od,bd->ob"}> : () -> ()
    %cst_7 = arith.constant dense<0.000000e+00> : vector<1x8xf32>
    %9 = tpu.matmul %8, %7, %cst_7 {dimension_numbers = #tpu.dot_dimension_numbers<[1], [1], [0], [0], [0, 0, 1, 0], [], []>, precision = #tpu.contract_precision<fp32>} : vector<1x128xf32>, vector<8x128xf32>, vector<1x8xf32> -> vector<1x8xf32>
    "tpu.trace_stop"() : () -> ()
    %10 = math.sqrt %9 : vector<1x8xf32>
    %cst_8 = arith.constant -5.000000e-01 : f32
    %11 = vector.broadcast %cst_8 : f32 to vector<1x8xf32>
    %12 = arith.mulf %10, %11 : vector<1x8xf32>
    %13 = math.exp %12 : vector<1x8xf32>
    %cst_9 = arith.constant 1.250000e+00 : f32
    %14 = vector.broadcast %cst_9 : f32 to vector<1x8xf32>
    %15 = arith.subf %14, %13 : vector<1x8xf32>
    %cst_10 = arith.constant 0.000000e+00 : f32
    %16 = vector.broadcast %cst_10 : f32 to vector<1x8xf32>
    %17 = arith.maximumf %15, %16 : vector<1x8xf32>
    %cst_11 = arith.constant 0.000000e+00 : f32
    %18 = vector.broadcast %cst_11 : f32 to vector<1x8xf32>
    %19 = arith.subf %18, %17 : vector<1x8xf32>
    %cst_12 = arith.constant 7.500000e-01 : f32
    %20 = vector.broadcast %cst_12 : f32 to vector<1x8xf32>
    %21 = arith.subf %13, %20 : vector<1x8xf32>
    %22 = arith.mulf %19, %21 : vector<1x8xf32>
    %cst_13 = arith.constant 6.400000e+01 : f32
    %23 = vector.broadcast %cst_13 : f32 to vector<1x8xf32>
    %24 = arith.mulf %22, %23 : vector<1x8xf32>
    %25 = vector.shape_cast %3 : vector<8x128xf32> to vector<8x1x128xf32>
    %26 = vector.broadcast %25 : vector<8x1x128xf32> to vector<8x32x128xf32>
    %27 = arith.subf %5, %26 : vector<8x32x128xf32>
    %28 = arith.mulf %27, %27 : vector<8x32x128xf32>
    %cst_14 = arith.constant 1.000000e+00 : f32
    %29 = vector.broadcast %cst_14 : f32 to vector<8x1x128xf32>
    "tpu.trace_start"() <{level = 10 : i32, message = "bod,bkd->bok"}> : () -> ()
    %cst_15 = arith.constant dense<0.000000e+00> : vector<8x1x32xf32>
    %30 = tpu.matmul %29, %28, %cst_15 {dimension_numbers = #tpu.dot_dimension_numbers<[2], [2], [1], [1], [0, 0, 0, 1, 1, 1], [0], [0]>, precision = #tpu.contract_precision<fp32>} : vector<8x1x128xf32>, vector<8x32x128xf32>, vector<8x1x32xf32> -> vector<8x1x32xf32>
    "tpu.trace_stop"() : () -> ()
    %31 = math.sqrt %30 : vector<8x1x32xf32>
    %cst_16 = arith.constant -5.000000e-01 : f32
    %32 = vector.broadcast %cst_16 : f32 to vector<8x1x32xf32>
    %33 = arith.mulf %31, %32 : vector<8x1x32xf32>
    %34 = math.exp %33 : vector<8x1x32xf32>
    %cst_17 = arith.constant 2.500000e-01 : f32
    %35 = vector.broadcast %cst_17 : f32 to vector<8x1x32xf32>
    %36 = arith.addf %34, %35 : vector<8x1x32xf32>
    %cst_18 = arith.constant 0.000000e+00 : f32
    %37 = vector.broadcast %cst_18 : f32 to vector<8x1x32xf32>
    %38 = arith.maximumf %36, %37 : vector<8x1x32xf32>
    %cst_19 = arith.constant 2.500000e-01 : f32
    %39 = vector.broadcast %cst_19 : f32 to vector<8x1x32xf32>
    %40 = arith.subf %34, %39 : vector<8x1x32xf32>
    %41 = arith.mulf %38, %40 : vector<8x1x32xf32>
    %cst_20 = arith.constant 6.400000e+01 : f32
    %42 = vector.broadcast %cst_20 : f32 to vector<8x1x32xf32>
    %43 = arith.mulf %41, %42 : vector<8x1x32xf32>
    %44 = vector.shape_cast %43 : vector<8x1x32xf32> to vector<1x8x1x32xf32>
    %cst_21 = arith.constant dense<0xFF800000> : vector<1xf32>
    %45 = vector.multi_reduction <maximumf>, %44, %cst_21 [1, 2, 3] : vector<1x8x1x32xf32> to vector<1xf32>
    %46 = vector.shape_cast %45 : vector<1xf32> to vector<1x1x1x1xf32>
    %47 = vector.extract %46[0, 0, 0, 0] : f32 from vector<1x1x1x1xf32>
    %48 = vector.broadcast %47 : f32 to vector<1x1x1xf32>
    %49 = vector.shape_cast %48 : vector<1x1x1xf32> to vector<1x1xf32>
    %50 = vector.broadcast %48 : vector<1x1x1xf32> to vector<8x1x32xf32>
    %51 = arith.subf %43, %50 : vector<8x1x32xf32>
    %52 = math.exp %51 : vector<8x1x32xf32>
    %53 = vector.shape_cast %52 : vector<8x1x32xf32> to vector<1x8x1x32xf32>
    %cst_22 = arith.constant dense<0.000000e+00> : vector<1xf32>
    %54 = vector.multi_reduction <add>, %53, %cst_22 [1, 2, 3] : vector<1x8x1x32xf32> to vector<1xf32>
    %55 = vector.shape_cast %54 : vector<1xf32> to vector<1x1x1x1xf32>
    %56 = vector.extract %55[0, 0, 0, 0] : f32 from vector<1x1x1x1xf32>
    %57 = vector.broadcast %56 : f32 to vector<1x1x1xf32>
    %58 = vector.shape_cast %57 : vector<1x1x1xf32> to vector<1x1xf32>
    %c0_23 = arith.constant 0 : index
    %c0_24 = arith.constant 0 : index
    %59 = vector.load %arg7[%c0_23, %c0_24] : memref<1x1xf32, #tpu.memory_space<vmem>>, vector<1x1xf32>
    %60 = arith.maximumf %59, %49 : vector<1x1xf32>
    %c0_25 = arith.constant 0 : index
    %c0_26 = arith.constant 0 : index
    %61 = vector.load %arg8[%c0_25, %c0_26] : memref<1x1xf32, #tpu.memory_space<vmem>>, vector<1x1xf32>
    %62 = arith.subf %59, %60 : vector<1x1xf32>
    %63 = math.exp %62 : vector<1x1xf32>
    %64 = arith.mulf %61, %63 : vector<1x1xf32>
    %65 = arith.subf %49, %60 : vector<1x1xf32>
    %66 = math.exp %65 : vector<1x1xf32>
    %67 = arith.mulf %58, %66 : vector<1x1xf32>
    %68 = arith.addf %64, %67 : vector<1x1xf32>
    %c0_27 = arith.constant 0 : index
    %c0_28 = arith.constant 0 : index
    %69 = vector.load %arg8[%c0_27, %c0_28] : memref<1x1xf32, #tpu.memory_space<vmem>>, vector<1x1xf32>
    tpu.vector_store %arg8[%c0_27, %c0_28], %68 {strides = array<i32>} : memref<1x1xf32, #tpu.memory_space<vmem>>, vector<1x1xf32>,
    %c0_29 = arith.constant 0 : index
    %c0_30 = arith.constant 0 : index
    %70 = vector.load %arg7[%c0_29, %c0_30] : memref<1x1xf32, #tpu.memory_space<vmem>>, vector<1x1xf32>
    tpu.vector_store %arg7[%c0_29, %c0_30], %60 {strides = array<i32>} : memref<1x1xf32, #tpu.memory_space<vmem>>, vector<1x1xf32>,
    %71 = vector.shape_cast %24 : vector<1x8xf32> to vector<1x1x8xf32>
    %cst_31 = arith.constant dense<0xFF800000> : vector<1xf32>
    %72 = vector.multi_reduction <maximumf>, %71, %cst_31 [1, 2] : vector<1x1x8xf32> to vector<1xf32>
    %73 = vector.shape_cast %72 : vector<1xf32> to vector<1x1x1xf32>
    %74 = vector.extract %73[0, 0, 0] : f32 from vector<1x1x1xf32>
    %75 = vector.broadcast %74 : f32 to vector<1x1xf32>
    %76 = vector.broadcast %75 : vector<1x1xf32> to vector<1x8xf32>
    %77 = arith.subf %24, %76 : vector<1x8xf32>
    %78 = math.exp %77 : vector<1x8xf32>
    %79 = vector.shape_cast %78 : vector<1x8xf32> to vector<1x1x8xf32>
    %cst_32 = arith.constant dense<0.000000e+00> : vector<1xf32>
    %80 = vector.multi_reduction <add>, %79, %cst_32 [1, 2] : vector<1x1x8xf32> to vector<1xf32>
    %81 = vector.shape_cast %80 : vector<1xf32> to vector<1x1x1xf32>
    %82 = vector.extract %81[0, 0, 0] : f32 from vector<1x1x1xf32>
    %83 = vector.broadcast %82 : f32 to vector<1x1xf32>
    %c0_33 = arith.constant 0 : index
    %c0_34 = arith.constant 0 : index
    %84 = vector.load %arg9[%c0_33, %c0_34] : memref<1x1xf32, #tpu.memory_space<vmem>>, vector<1x1xf32>
    %85 = arith.maximumf %84, %75 : vector<1x1xf32>
    %c0_35 = arith.constant 0 : index
    %c0_36 = arith.constant 0 : index
    %86 = vector.load %arg10[%c0_35, %c0_36] : memref<1x1xf32, #tpu.memory_space<vmem>>, vector<1x1xf32>
    %87 = arith.subf %84, %85 : vector<1x1xf32>
    %88 = math.exp %87 : vector<1x1xf32>
    %89 = arith.mulf %86, %88 : vector<1x1xf32>
    %90 = arith.subf %75, %85 : vector<1x1xf32>
    %91 = math.exp %90 : vector<1x1xf32>
    %92 = arith.mulf %83, %91 : vector<1x1xf32>
    %93 = arith.addf %89, %92 : vector<1x1xf32>
    %c0_37 = arith.constant 0 : index
    %c0_38 = arith.constant 0 : index
    %94 = vector.load %arg10[%c0_37, %c0_38] : memref<1x1xf32, #tpu.memory_space<vmem>>, vector<1x1xf32>
    tpu.vector_store %arg10[%c0_37, %c0_38], %93 {strides = array<i32>} : memref<1x1xf32, #tpu.memory_space<vmem>>, vector<1x1xf32>,
    %c0_39 = arith.constant 0 : index
    %c0_40 = arith.constant 0 : index
    %95 = vector.load %arg9[%c0_39, %c0_40] : memref<1x1xf32, #tpu.memory_space<vmem>>, vector<1x1xf32>
    tpu.vector_store %arg9[%c0_39, %c0_40], %85 {strides = array<i32>} : memref<1x1xf32, #tpu.memory_space<vmem>>, vector<1x1xf32>,
    %c0_i32_41 = arith.constant 0 : i32
    %96 = arith.cmpi eq, %arg1, %c0_i32_41 : i32
    %97 = arith.extui %96 : i1 to i32
    %c0_i32_42 = arith.constant 0 : i32
    %98 = arith.cmpi ne, %97, %c0_i32_42 : i32
    scf.if %98 {
      %c0_43 = arith.constant 0 : index
      %c0_44 = arith.constant 0 : index
      %99 = vector.load %arg7[%c0_43, %c0_44] : memref<1x1xf32, #tpu.memory_space<vmem>>, vector<1x1xf32>
      %c0_45 = arith.constant 0 : index
      %c0_46 = arith.constant 0 : index
      %100 = vector.load %arg8[%c0_45, %c0_46] : memref<1x1xf32, #tpu.memory_space<vmem>>, vector<1x1xf32>
      %101 = math.log %100 : vector<1x1xf32>
      %102 = arith.addf %99, %101 : vector<1x1xf32>
      %c0_47 = arith.constant 0 : index
      %c0_48 = arith.constant 0 : index
      %103 = vector.load %arg9[%c0_47, %c0_48] : memref<1x1xf32, #tpu.memory_space<vmem>>, vector<1x1xf32>
      %c0_49 = arith.constant 0 : index
      %c0_50 = arith.constant 0 : index
      %104 = vector.load %arg10[%c0_49, %c0_50] : memref<1x1xf32, #tpu.memory_space<vmem>>, vector<1x1xf32>
      %105 = math.log %104 : vector<1x1xf32>
      %106 = arith.addf %103, %105 : vector<1x1xf32>
      %107 = vector.shape_cast %102 : vector<1x1xf32> to vector<1x1xf32>
      %108 = vector.broadcast %107 : vector<1x1xf32> to vector<8x128xf32>
      %c0_51 = arith.constant 0 : index
      %c0_52 = arith.constant 0 : index
      %109 = vector.load %arg5[%c0_51, %c0_52] : memref<8x128xf32, #tpu.memory_space<vmem>>, vector<8x128xf32>
      tpu.vector_store %arg5[%c0_51, %c0_52], %108 {strides = array<i32>} : memref<8x128xf32, #tpu.memory_space<vmem>>, vector<8x128xf32>,
      %110 = vector.shape_cast %106 : vector<1x1xf32> to vector<1x1xf32>
      %111 = vector.broadcast %110 : vector<1x1xf32> to vector<8x128xf32>
      %c0_53 = arith.constant 0 : index
      %c0_54 = arith.constant 0 : index
      %112 = vector.load %arg6[%c0_53, %c0_54] : memref<8x128xf32, #tpu.memory_space<vmem>>, vector<8x128xf32>
      tpu.vector_store %arg6[%c0_53, %c0_54], %111 {strides = array<i32>} : memref<8x128xf32, #tpu.memory_space<vmem>>, vector<8x128xf32>,
    } else {
    }
    return
  }
  func.func @transform_0(%arg0: i32, %arg1: i32) -> (i32, i32) {
    %c1_i32 = arith.constant 1 : i32
    %0 = arith.muli %arg0, %c1_i32 : i32
    %1 = arith.addi %0, %arg1 : i32
    %c0_i32 = arith.constant 0 : i32
    %c0_i32_0 = arith.constant 0 : i32
    return %1, %c0_i32 : i32, i32
  }
  func.func @transform_1(%arg0: i32, %arg1: i32) -> (i32, i32) {
    %c1_i32 = arith.constant 1 : i32
    %0 = arith.muli %arg0, %c1_i32 : i32
    %1 = arith.addi %0, %arg1 : i32
    %c0_i32 = arith.constant 0 : i32
    %c0_i32_0 = arith.constant 0 : i32
    return %1, %c0_i32 : i32, i32
  }
  func.func @transform_2(%arg0: i32, %arg1: i32) -> (i32, i32, i32) {
    %c1_i32 = arith.constant 1 : i32
    %0 = arith.muli %arg0, %c1_i32 : i32
    %1 = arith.addi %0, %arg1 : i32
    %c0_i32 = arith.constant 0 : i32
    %c0_i32_0 = arith.constant 0 : i32
    %c0_i32_1 = arith.constant 0 : i32
    return %1, %c0_i32, %c0_i32_0 : i32, i32, i32
  }
  func.func @transform_3(%arg0: i32, %arg1: i32) -> (i32, i32) {
    %c0_i32 = arith.constant 0 : i32
    %c0_i32_0 = arith.constant 0 : i32
    return %arg0, %c0_i32 : i32, i32
  }
  func.func @transform_4(%arg0: i32, %arg1: i32) -> (i32, i32) {
    %c0_i32 = arith.constant 0 : i32
    %c0_i32_0 = arith.constant 0 : i32
    return %arg0, %c0_i32 : i32, i32
  }
}

</mosaic_0001>

<llo_original>
// kernel: tpu_custom_call.1
$region0: #{tpu_custom_call.1}
  #allocation0 [shape = 'u32[]', space=smem, size = 0x4, offset = 0x4, fixed_abs, tag = 'smem constant byte address 0x4 - core index']
  #allocation1 [shape = 'u32[144,128]{1,0:T(1,128)}', space=vmem, size = 0x12000, scoped, tag = 'internal scratch']
  #allocation2 [shape = 'f32[1,1]{1,0:T(1,128)}', space=vmem, size = 0x200, scoped, tag = 'scratch operand']
  #allocation3 [shape = 'f32[1,1]{1,0:T(1,128)}', space=vmem, size = 0x200, scoped, tag = 'scratch operand']
  #allocation4 [shape = 'f32[1,1]{1,0:T(1,128)}', space=vmem, size = 0x200, scoped, tag = 'scratch operand']
  #allocation5 [shape = 'f32[1,1]{1,0:T(1,128)}', space=vmem, size = 0x200, scoped, tag = 'scratch operand']
  %s0 = inlined_call_operand.hbm [shape: f32[16,128], index: 0, kind: input, shape index: {}]
  %s1 = inlined_call_operand.hbm [shape: f32[16,128], index: 1, kind: input, shape index: {}]
  %s2 = inlined_call_operand.hbm [shape: f32[16,32,128], index: 2, kind: input, shape index: {}]
  %s3 = inlined_call_operand.hbm [shape: f32[16,128], index: 3, kind: output, shape index: {0}]
  %s4 = inlined_call_operand.hbm [shape: f32[16,128], index: 4, kind: output, shape index: {1}]
  %5 = xla_tuple %s3, %s4
  %s6 = sld [smem:[#allocation0]]
  $region73: #{tpu_custom_call.1} parent=0
    _
  %s8 = ssub.s32 1, %s6
  %s9 = scalar_select 0, %s8, %s6
  $region1: #{tpu_custom_call.1} parent=0
    #allocation6 [shape = 'u8[8192]{0}', space=vmem, size = 0x2000, scoped, tag = 'input window, operand 0']
    #allocation7 [shape = 's32[2]{0}', space=sflag, size = 0x8, scoped, tag = 'scoped memory for tpu_custom_call.1']
    #allocation8 [shape = 's32[2]{0}', space=sflag, size = 0x8, scoped, tag = 'scoped memory for tpu_custom_call.1']
    #allocation9 [shape = 'u8[8192]{0}', space=vmem, size = 0x2000, scoped, tag = 'input window, operand 1']
    #allocation10 [shape = 's32[2]{0}', space=sflag, size = 0x8, scoped, tag = 'scoped memory for tpu_custom_call.1']
    #allocation11 [shape = 'u8[262144]{0}', space=vmem, size = 0x40000, scoped, tag = 'input window, operand 2']
    #allocation12 [shape = 'u8[8192]{0}', space=vmem, size = 0x2000, scoped, tag = 'output window, operand 0']
    #allocation13 [shape = 'u8[8192]{0}', space=vmem, size = 0x2000, scoped, tag = 'output window, operand 1']
    #allocation14 [shape = 's32[2]{0}', space=sflag, size = 0x8, scoped, tag = 'scoped memory for tpu_custom_call.1']
    %10 = vsyncpa [#allocation7], 0
    %s11 = scalar_lea.sflag [#allocation7], 1
    %12 = vsyncpa %s11, 0
    %13 = vsyncpa [#allocation10], 0
    %s14 = scalar_lea.sflag [#allocation10], 1
    %15 = vsyncpa %s14, 0
    %16 = vsyncpa [#allocation8], 0
    %s17 = scalar_lea.sflag [#allocation8], 1
    %18 = vsyncpa %s17, 0
    %19 = vsyncpa [#allocation14], 0
    %s20 = scalar_lea.sflag [#allocation14], 1
    %21 = vsyncpa %s20, 0
    loop: start=0, step=1, limit=4
    $region2: #{tpu_custom_call.1} parent=1 // loop_pre_header
      _
    $region3: #{tpu_custom_call.1} parent=1 // loop_header
      %s23 = sphi 0, %s27
      %p24 = scmp.ge.s32.totalorder %s23, 4
      %s30 = sphi 0, %s42
      %s31 = sphi 0, %s38
      %s32 = sphi 0, %s30
      %s33 = sphi 0, %s31
      %s34 = sphi 0, %s32
      %s35 = sphi 0, %s33
      %s47 = sphi 0, %s49
      %s50 = sphi 0, %s47
      %s51 = sphi 0, %s50
      %s67 = sphi 0, %s51
      %s75 = sphi 0, %s77
      %s78 = sphi 0, %s75
      %s79 = sphi 0, %s78
      %s95 = sphi 0, %s79
      %s103 = sphi 0, %s105
      %s106 = sphi 0, %s103
      %s107 = sphi 0, %s106
      %s123 = sphi 0, %s107
      %s129 = sphi 0, %s131
      %s132 = sphi 0, %s129
      %s133 = sphi 0, %s132
      %s149 = sphi 0, %s133
      %s155 = sphi 0, %s157
      %s158 = sphi 0, %s155
      %s159 = sphi 0, %s158
      %s175 = sphi 0, %s159
    $region4: #{tpu_custom_call.1} parent=1 // loop_header_branch
      %26 = sbr.rel (%p24) target = $region8
    $region5: #{tpu_custom_call.1} parent=1 // loop_body
      %s28 = ssub.s32 %s23, 1
      %s29 = ssub.s32 %s23, 2
      %s36 = sadd.s32 1, %s31
      %p37 = scmp.ge.s32.totalorder %s36, 1
      %s38 = scalar_select %p37, 0, %s36
      %s39 = sadd.s32 1, %s30
      %s40 = scalar_select %p37, %s39, %s30
      %p41 = scmp.ge.s32.totalorder %s40, 2
      %s42 = scalar_select %p41, 0, %s40
      %s43 = sadd.s32 %s30, %s31
      %s44 = sadd.s32 %s42, %s38
      %s45 = ssub.s32 %s43, %s44
      %p46 = scmp.eq.s32.totalorder %s45, 0
      %s48 = sadd.s32 %s47, 1
      %s49 = scalar_select %p46, %s47, %s48
      %p52 = pneg %p46
      %p53 = scmp.eq.s32.totalorder %s23, 1
      %p54 = por %p52, %p53
      %p55 = scmp.ne.s32.totalorder %s47, %s50
      %p56 = scmp.eq.s32.totalorder %s23, 0
      %p57 = por %p55, %p56
      %p58 = scmp.ne.s32.totalorder %s47, %s50
      %p59 = scmp.eq.s32.totalorder %s28, 1
      %p60 = por %p58, %p59
      %p61 = scmp.ne.s32.totalorder %s50, %s51
      %p62 = scmp.eq.s32.totalorder %s28, 0
      %p63 = por %p61, %p62
      %p64 = scmp.ne.s32.totalorder %s50, %s51
      %p65 = scmp.eq.s32.totalorder %s29, 1
      %p66 = por %p64, %p65
      %p68 = scmp.ne.s32.totalorder %s51, %s67
      %p69 = scmp.eq.s32.totalorder %s29, 0
      %p70 = por %p68, %p69
      %s71 = sadd.s32 %s30, %s31
      %s72 = sadd.s32 %s42, %s38
      %s73 = ssub.s32 %s71, %s72
      %p74 = scmp.eq.s32.totalorder %s73, 0
      %s76 = sadd.s32 %s75, 1
      %s77 = scalar_select %p74, %s75, %s76
      %p80 = pneg %p74
      %p81 = scmp.eq.s32.totalorder %s23, 1
      %p82 = por %p80, %p81
      %p83 = scmp.ne.s32.totalorder %s75, %s78
      %p84 = scmp.eq.s32.totalorder %s23, 0
      %p85 = por %p83, %p84
      %p86 = scmp.ne.s32.totalorder %s75, %s78
      %p87 = scmp.eq.s32.totalorder %s28, 1
      %p88 = por %p86, %p87
      %p89 = scmp.ne.s32.totalorder %s78, %s79
      %p90 = scmp.eq.s32.totalorder %s28, 0
      %p91 = por %p89, %p90
      %p92 = scmp.ne.s32.totalorder %s78, %s79
      %p93 = scmp.eq.s32.totalorder %s29, 1
      %p94 = por %p92, %p93
      %p96 = scmp.ne.s32.totalorder %s79, %s95
      %p97 = scmp.eq.s32.totalorder %s29, 0
      %p98 = por %p96, %p97
      %s99 = sadd.s32 %s30, %s31
      %s100 = sadd.s32 %s42, %s38
      %s101 = ssub.s32 %s99, %s100
      %p102 = scmp.eq.s32.totalorder %s101, 0
      %s104 = sadd.s32 %s103, 1
      %s105 = scalar_select %p102, %s103, %s104
      %p108 = pneg %p102
      %p109 = scmp.eq.s32.totalorder %s23, 1
      %p110 = por %p108, %p109
      %p111 = scmp.ne.s32.totalorder %s103, %s106
      %p112 = scmp.eq.s32.totalorder %s23, 0
      %p113 = por %p111, %p112
      %p114 = scmp.ne.s32.totalorder %s103, %s106
      %p115 = scmp.eq.s32.totalorder %s28, 1
      %p116 = por %p114, %p115
      %p117 = scmp.ne.s32.totalorder %s106, %s107
      %p118 = scmp.eq.s32.totalorder %s28, 0
      %p119 = por %p117, %p118
      %p120 = scmp.ne.s32.totalorder %s106, %s107
      %p121 = scmp.eq.s32.totalorder %s29, 1
      %p122 = por %p120, %p121
      %p124 = scmp.ne.s32.totalorder %s107, %s123
      %p125 = scmp.eq.s32.totalorder %s29, 0
      %p126 = por %p124, %p125
      %s127 = ssub.s32 %s30, %s42
      %p128 = scmp.eq.s32.totalorder %s127, 0
      %s130 = sadd.s32 %s129, 1
      %s131 = scalar_select %p128, %s129, %s130
      %p134 = pneg %p128
      %p135 = scmp.eq.s32.totalorder %s23, 1
      %p136 = por %p134, %p135
      %p137 = scmp.ne.s32.totalorder %s129, %s132
      %p138 = scmp.eq.s32.totalorder %s23, 0
      %p139 = por %p137, %p138
      %p140 = scmp.ne.s32.totalorder %s129, %s132
      %p141 = scmp.eq.s32.totalorder %s28, 1
      %p142 = por %p140, %p141
      %p143 = scmp.ne.s32.totalorder %s132, %s133
      %p144 = scmp.eq.s32.totalorder %s28, 0
      %p145 = por %p143, %p144
      %p146 = scmp.ne.s32.totalorder %s132, %s133
      %p147 = scmp.eq.s32.totalorder %s29, 1
      %p148 = por %p146, %p147
      %p150 = scmp.ne.s32.totalorder %s133, %s149
      %p151 = scmp.eq.s32.totalorder %s29, 0
      %p152 = por %p150, %p151
      %s153 = ssub.s32 %s30, %s42
      %p154 = scmp.eq.s32.totalorder %s153, 0
      %s156 = sadd.s32 %s155, 1
      %s157 = scalar_select %p154, %s155, %s156
      %p160 = pneg %p154
      %p161 = scmp.eq.s32.totalorder %s23, 1
      %p162 = por %p160, %p161
      %p163 = scmp.ne.s32.totalorder %s155, %s158
      %p164 = scmp.eq.s32.totalorder %s23, 0
      %p165 = por %p163, %p164
      %p166 = scmp.ne.s32.totalorder %s155, %s158
      %p167 = scmp.eq.s32.totalorder %s28, 1
      %p168 = por %p166, %p167
      %p169 = scmp.ne.s32.totalorder %s158, %s159
      %p170 = scmp.eq.s32.totalorder %s28, 0
      %p171 = por %p169, %p170
      %p172 = scmp.ne.s32.totalorder %s158, %s159
      %p173 = scmp.eq.s32.totalorder %s29, 1
      %p174 = por %p172, %p173
      %p176 = scmp.ne.s32.totalorder %s159, %s175
      %p177 = scmp.eq.s32.totalorder %s29, 0
      %p178 = por %p176, %p177
      %p179 = scmp.le.s32.totalorder 1, %s23
      %p180 = scmp.lt.s32.totalorder %s23, 3
      %p181 = pnand %p179, %p180
      %p182 = pneg %p181
      // Predicated region
      $region9: #{tpu_custom_call.1} parent=5 // pred_check
        _
      $region10: #{tpu_custom_call.1} parent=5 // pred_check_branch
        %184 = sbr.rel (%p181) target = $region12
      $region11: #{tpu_custom_call.1} parent=5 // pred_region
        %s185 = ssub.s32 %s23, 1
      $region12: #{tpu_custom_call.1} parent=5 // pred_fallthru
        _
      %p186 = scmp.lt.s32.totalorder %s23, 2
      // Predicated region
      $region13: #{tpu_custom_call.1} parent=5 // pred_check
        %p187 = pneg %p186
      $region14: #{tpu_custom_call.1} parent=5 // pred_check_branch
        %189 = sbr.rel (%p187) target = $region16
      $region15: #{tpu_custom_call.1} parent=5 // pred_region
        // Predicated region
        $region17: #{tpu_custom_call.1} parent=15 // pred_check
          %p190 = pneg %p57
        $region18: #{tpu_custom_call.1} parent=15 // pred_check_branch
          %192 = sbr.rel (%p190) target = $region20
        $region19: #{tpu_custom_call.1} parent=15 // pred_region
          %s193 = sand.u32 %s47, 1
          %s194 = scalar_lea.sflag [#allocation7], %s193
          %s195 = sand.u32 %s47, 1
          %s196 = smul.addr %s195, 8
          %s197 = scalar_lea.vmem [#allocation6], %s196
          %s198 = sadd.s32 %s30, %s31
          %s200 = ssub.s32 128, 128
          %201 = vsyncadd %s194, %s200
          %s202 = smul.addr %s198, 128
          %s203 = scalar_lea.hbm %s0, %s202
          %s205 = sshll.u32 %s197, 4
          %s206 = int_to_ptr.vmem [resolvable:$true] %s205
          %208 = dma.hbm_to_vmem [thread:$0]  %s203, 128, %s206, %s194
        $region20: #{tpu_custom_call.1} parent=15 // pred_fallthru
          _
        // Predicated region
        $region21: #{tpu_custom_call.1} parent=15 // pred_check
          %p209 = pneg %p85
        $region22: #{tpu_custom_call.1} parent=15 // pred_check_branch
          %211 = sbr.rel (%p209) target = $region24
        $region23: #{tpu_custom_call.1} parent=15 // pred_region
          %s212 = sand.u32 %s23, 1
          %s213 = scalar_lea.sflag [#allocation10], %s212
          %s214 = sand.u32 %s75, 1
          %s215 = smul.addr %s214, 8
          %s216 = scalar_lea.vmem [#allocation9], %s215
          %s217 = sadd.s32 %s30, %s31
          %s219 = ssub.s32 128, 128
          %220 = vsyncadd %s213, %s219
          %s221 = smul.addr %s217, 128
          %s222 = scalar_lea.hbm %s1, %s221
          %s224 = sshll.u32 %s216, 4
          %s225 = int_to_ptr.vmem [resolvable:$true] %s224
          %227 = dma.hbm_to_vmem [thread:$0]  %s222, 128, %s225, %s213
        $region24: #{tpu_custom_call.1} parent=15 // pred_fallthru
          _
        // Predicated region
        $region25: #{tpu_custom_call.1} parent=15 // pred_check
          %p228 = pneg %p113
        $region26: #{tpu_custom_call.1} parent=15 // pred_check_branch
          %230 = sbr.rel (%p228) target = $region28
        $region27: #{tpu_custom_call.1} parent=15 // pred_region
          %s231 = sand.u32 %s23, 1
          %s232 = scalar_lea.sflag [#allocation10], %s231
          %s233 = sand.u32 %s103, 1
          %s234 = smul.addr %s233, 256
          %s235 = scalar_lea.vmem [#allocation11], %s234
          %s236 = sadd.s32 %s30, %s31
          %s237 = smul.u32 8, %s236
          %s239 = ssub.s32 4096, 4096
          %240 = vsyncadd %s232, %s239
          %s241 = smul.addr %s237, 4
          %s242 = smul.addr %s241, 128
          %s243 = scalar_lea.hbm %s2, %s242
          %s244 = sshll.u32 %s235, 4
          %s245 = int_to_ptr.vmem [resolvable:$true] %s244
          %250 = dma.hbm_to_vmem [thread:$0]  %s243, 4096, %s245, %s232, 128, 128, 8
        $region28: #{tpu_custom_call.1} parent=15 // pred_fallthru
          _
      $region16: #{tpu_custom_call.1} parent=5 // pred_fallthru
        _
      %p251 = scmp.le.s32.totalorder 1, %s23
      %p252 = scmp.lt.s32.totalorder %s23, 3
      %p253 = pnand %p251, %p252
      %p254 = pneg %p253
      // Predicated region
      $region29: #{tpu_custom_call.1} parent=5 // pred_check
        _
      $region30: #{tpu_custom_call.1} parent=5 // pred_check_branch
        %256 = sbr.rel (%p253) target = $region32
      $region31: #{tpu_custom_call.1} parent=5 // pred_region
        %s257 = ssub.s32 %s23, 1
        %s258 = sand.u32 %s50, 1
        %s259 = scalar_lea.sflag [#allocation7], %s258
        %s260 = sand.u32 %s50, 1
        %s261 = smul.addr %s260, 8
        %s262 = scalar_lea.vmem [#allocation6], %s261
        // Predicated region
        $region33: #{tpu_custom_call.1} parent=31 // pred_check
          %p263 = pneg %p63
        $region34: #{tpu_custom_call.1} parent=31 // pred_check_branch
          %265 = sbr.rel (%p263) target = $region36
        $region35: #{tpu_custom_call.1} parent=31 // pred_region
          %266 = dma.done %s259, 128
        $region36: #{tpu_custom_call.1} parent=31 // pred_fallthru
          _
        %s267 = sand.u32 %s28, 1
        %s268 = scalar_lea.sflag [#allocation10], %s267
        %s269 = sand.u32 %s78, 1
        %s270 = smul.addr %s269, 8
        %s271 = scalar_lea.vmem [#allocation9], %s270
        // Predicated region
        $region37: #{tpu_custom_call.1} parent=31 // pred_check
          %p272 = pneg %p91
        $region38: #{tpu_custom_call.1} parent=31 // pred_check_branch
          %274 = sbr.rel (%p272) target = $region40
        $region39: #{tpu_custom_call.1} parent=31 // pred_region
          %275 = dma.done %s268, 128
        $region40: #{tpu_custom_call.1} parent=31 // pred_fallthru
          _
        %s276 = sand.u32 %s28, 1
        %s277 = scalar_lea.sflag [#allocation10], %s276
        %s278 = sand.u32 %s106, 1
        %s279 = smul.addr %s278, 256
        %s280 = scalar_lea.vmem [#allocation11], %s279
        // Predicated region
        $region41: #{tpu_custom_call.1} parent=31 // pred_check
          %p281 = pneg %p119
        $region42: #{tpu_custom_call.1} parent=31 // pred_check_branch
          %283 = sbr.rel (%p281) target = $region44
        $region43: #{tpu_custom_call.1} parent=31 // pred_region
          %284 = dma.done %s277, 4096
        $region44: #{tpu_custom_call.1} parent=31 // pred_fallthru
          _
        %s285 = sand.u32 %s50, 1
        %s286 = scalar_lea.sflag [#allocation7], %s285
        %s287 = sand.u32 %s50, 1
        %s288 = smul.addr %s287, 8
        %s289 = scalar_lea.vmem [#allocation6], %s288
        %p290 = pneg %p63
        %p291 = pneg %p60
        %s292 = sand.u32 %s28, 1
        %s293 = scalar_lea.sflag [#allocation10], %s292
        %s294 = sand.u32 %s78, 1
        %s295 = smul.addr %s294, 8
        %s296 = scalar_lea.vmem [#allocation9], %s295
        %p297 = pneg %p91
        %p298 = pneg %p88
        %s299 = sand.u32 %s28, 1
        %s300 = scalar_lea.sflag [#allocation10], %s299
        %s301 = sand.u32 %s106, 1
        %s302 = smul.addr %s301, 256
        %s303 = scalar_lea.vmem [#allocation11], %s302
        %p304 = pneg %p119
        %p305 = pneg %p116
        %p306 = pneg %p145
        %p307 = pneg %p142
        %s308 = sand.u32 %s132, 1
        %s309 = scalar_lea.sflag [#allocation8], %s308
        %s310 = sand.u32 %s132, 1
        %s311 = smul.addr %s310, 8
        %s312 = scalar_lea.vmem [#allocation12], %s311
        %p313 = pneg %p171
        %p314 = pneg %p168
        %s315 = sand.u32 %s158, 1
        %s316 = scalar_lea.sflag [#allocation14], %s315
        %s317 = sand.u32 %s158, 1
        %s318 = smul.addr %s317, 8
        %s319 = scalar_lea.vmem [#allocation13], %s318
        %s320 = sadd.s32 %s32, %s33
        %s321 = sadd.s32 %s32, %s33
        %s322 = sadd.s32 %s32, %s33
        %s323 = smul.u32 8, %s322
        %p324 = scmp.eq.s32.totalorder %s33, 0
        // Predicated region
        $region45: #{tpu_custom_call.1} parent=31 // pred_check
          %p325 = pneg %p324
        $region46: #{tpu_custom_call.1} parent=31 // pred_check_branch
          %327 = sbr.rel (%p325) target = $region48
        $region47: #{tpu_custom_call.1} parent=31 // pred_region
          %vm328 = vcmask 0
          %329 = vst.msk [vmem:[#allocation2] sm:$0x1] %vm328, -inf
          %330 = vst.msk [vmem:[#allocation3] sm:$0x1] %vm328, 0.0
          %331 = vst.msk [vmem:[#allocation4] sm:$0x1] %vm328, -inf
          %332 = vst.msk [vmem:[#allocation5] sm:$0x1] %vm328, 0.0
        $region48: #{tpu_custom_call.1} parent=31 // pred_fallthru
          _
        %v333 = vld [vmem:[%s262] sm:$0xff]
        %v334 = vld [vmem:[%s271] sm:$0xff]
        %v335 = vld [vmem:[%s280] sm:$0xff]
        %v336 = vld [vmem:[%s280 + $0x8] sm:$0xff]
        %v337 = vld [vmem:[%s280 + $0x10] sm:$0xff]
        %v338 = vld [vmem:[%s280 + $0x18] sm:$0xff]
        %v339 = vld [vmem:[%s280 + $0x20] sm:$0xff]
        %v340 = vld [vmem:[%s280 + $0x28] sm:$0xff]
        %v341 = vld [vmem:[%s280 + $0x30] sm:$0xff]
        %v342 = vld [vmem:[%s280 + $0x38] sm:$0xff]
        %v343 = vld [vmem:[%s280 + $0x40] sm:$0xff]
        %v344 = vld [vmem:[%s280 + $0x48] sm:$0xff]
        %v345 = vld [vmem:[%s280 + $0x50] sm:$0xff]
        %v346 = vld [vmem:[%s280 + $0x58] sm:$0xff]
        %v347 = vld [vmem:[%s280 + $0x60] sm:$0xff]
        %v348 = vld [vmem:[%s280 + $0x68] sm:$0xff]
        %v349 = vld [vmem:[%s280 + $0x70] sm:$0xff]
        %v350 = vld [vmem:[%s280 + $0x78] sm:$0xff]
        %v351 = vld [vmem:[%s280 + $0x80] sm:$0xff]
        %v352 = vld [vmem:[%s280 + $0x88] sm:$0xff]
        %v353 = vld [vmem:[%s280 + $0x90] sm:$0xff]
        %v354 = vld [vmem:[%s280 + $0x98] sm:$0xff]
        %v355 = vld [vmem:[%s280 + $0xa0] sm:$0xff]
        %v356 = vld [vmem:[%s280 + $0xa8] sm:$0xff]
        %v357 = vld [vmem:[%s280 + $0xb0] sm:$0xff]
        %v358 = vld [vmem:[%s280 + $0xb8] sm:$0xff]
        %v359 = vld [vmem:[%s280 + $0xc0] sm:$0xff]
        %v360 = vld [vmem:[%s280 + $0xc8] sm:$0xff]
        %v361 = vld [vmem:[%s280 + $0xd0] sm:$0xff]
        %v362 = vld [vmem:[%s280 + $0xd8] sm:$0xff]
        %v363 = vld [vmem:[%s280 + $0xe0] sm:$0xff]
        %v364 = vld [vmem:[%s280 + $0xe8] sm:$0xff]
        %v365 = vld [vmem:[%s280 + $0xf0] sm:$0xff]
        %v366 = vld [vmem:[%s280 + $0xf8] sm:$0xff]
        %v367 = vsub.f32 %v333, %v334
        %v368 = vmul.f32 %v367, %v367
        %369 = vmatprep.subr.mxu0 0.0
        %v370 = vand.u32 %v368, 4294901760
        %371 = vmatpush1.xpose.msra.mxu0 %v370
        %372 = vmatprep.subr.mxu0 0.0
        %373 = vmatpush1.xpose.msra.mxu0 0.0
        %374 = vmatprep.subr.mxu0 0.0
        %375 = vmatpush1.xpose.msra.mxu0 0.0
        %376 = vmatprep.subr.mxu0 0.0
        %377 = vmatpush1.xpose.msra.mxu0 0.0
        %378 = vmatprep.subr.mxu0 0.0
        %379 = vmatpush1.xpose.msra.mxu0 0.0
        %380 = vmatprep.subr.mxu0 0.0
        %381 = vmatpush1.xpose.msra.mxu0 0.0
        %382 = vmatprep.subr.mxu0 0.0
        %383 = vmatpush1.xpose.msra.mxu0 0.0
        %384 = vmatprep.subr.mxu0 0.0
        %385 = vmatpush1.xpose.msra.mxu0 0.0
        %386 = vmatprep.subr.mxu0 0.0
        %387 = vmatpush1.xpose.msra.mxu0 0.0
        %388 = vmatprep.subr.mxu0 0.0
        %389 = vmatpush1.xpose.msra.mxu0 0.0
        %390 = vmatprep.subr.mxu0 0.0
        %391 = vmatpush1.xpose.msra.mxu0 0.0
        %392 = vmatprep.subr.mxu0 0.0
        %393 = vmatpush1.xpose.msra.mxu0 0.0
        %394 = vmatprep.subr.mxu0 0.0
        %395 = vmatpush1.xpose.msra.mxu0 0.0
        %396 = vmatprep.subr.mxu0 0.0
        %397 = vmatpush1.xpose.msra.mxu0 0.0
        %398 = vmatprep.subr.mxu0 0.0
        %399 = vmatpush1.xpose.msra.mxu0 0.0
        %400 = vmatprep.subr.mxu0 0.0
        %401 = vmatpush1.xpose.msra.mxu0 0.0
        %402 = vmatprep.subr.mxu0 0.0
        %403 = vmatpush1.xpose.msra.mxu0 0.0
        %404 = vmatprep.subr.mxu0 0.0
        %405 = vmatpush1.xpose.msra.mxu0 0.0
        %406 = vmatprep.subr.mxu0 0.0
        %407 = vmatpush1.xpose.msra.mxu0 0.0
        %408 = vmatprep.subr.mxu0 0.0
        %409 = vmatpush1.xpose.msra.mxu0 0.0
        %410 = vmatprep.subr.mxu0 0.0
        %411 = vmatpush1.xpose.msra.mxu0 0.0
        %412 = vmatprep.subr.mxu0 0.0
        %413 = vmatpush1.xpose.msra.mxu0 0.0
        %414 = vmatprep.subr.mxu0 0.0
        %415 = vmatpush1.xpose.msra.mxu0 0.0
        %416 = vmatprep.subr.mxu0 0.0
        %417 = vmatpush1.xpose.msra.mxu0 0.0
        %418 = vmatprep.subr.mxu0 0.0
        %419 = vmatpush1.xpose.msra.mxu0 0.0
        %420 = vmatprep.subr.mxu0 0.0
        %421 = vmatpush1.xpose.msra.mxu0 0.0
        %422 = vmatprep.subr.mxu0 0.0
        %423 = vmatpush1.xpose.msra.mxu0 0.0
        %424 = vmatprep.subr.mxu0 0.0
        %425 = vmatpush1.xpose.msra.mxu0 0.0
        %426 = vmatprep.subr.mxu0 0.0
        %427 = vmatpush1.xpose.msra.mxu0 0.0
        %428 = vmatprep.subr.mxu0 0.0
        %429 = vmatpush1.xpose.msra.mxu0 0.0
        %430 = vmatprep.subr.mxu0 0.0
        %431 = vmatpush1.xpose.msra.mxu0 0.0
        %432 = vmatprep.subr.mxu0 0.0
        %433 = vmatpush1.xpose.msra.mxu0 0.0
        %434 = vmatprep.mubr.f32.mxu0 0.0
        %435 = vmatmul.mubr.f32.gmra.mrb[0].mxu0 0.0
        %v436 = vpop.f32.mrb[0].mxu0
        %v437 = vadd.f32 0.0, %v436
        %v438 = vpop.f32.mrb[0].mxu0
        %439 = vdwg.mxu0
        %440 = vmatprep.subr.mxu0 0.0
        %v441 = vand.u32 %v368, 4294901760
        %v442 = vsub.f32 %v368, %v441
        %v443 = vand.u32 %v442, 4294901760
        %v444 = vsub.f32 %v442, %v443
        %v445 = vand.u32 %v444, 4294901760
        %446 = vmatpush1.xpose.msra.mxu0 %v445
        %447 = vmatprep.subr.mxu0 0.0
        %448 = vmatpush1.xpose.msra.mxu0 0.0
        %449 = vmatprep.subr.mxu0 0.0
        %450 = vmatpush1.xpose.msra.mxu0 0.0
        %451 = vmatprep.subr.mxu0 0.0
        %452 = vmatpush1.xpose.msra.mxu0 0.0
        %453 = vmatprep.subr.mxu0 0.0
        %454 = vmatpush1.xpose.msra.mxu0 0.0
        %455 = vmatprep.subr.mxu0 0.0
        %456 = vmatpush1.xpose.msra.mxu0 0.0
        %457 = vmatprep.subr.mxu0 0.0
        %458 = vmatpush1.xpose.msra.mxu0 0.0
        %459 = vmatprep.subr.mxu0 0.0
        %460 = vmatpush1.xpose.msra.mxu0 0.0
        %461 = vmatprep.subr.mxu0 0.0
        %462 = vmatpush1.xpose.msra.mxu0 0.0
        %463 = vmatprep.subr.mxu0 0.0
        %464 = vmatpush1.xpose.msra.mxu0 0.0
        %465 = vmatprep.subr.mxu0 0.0
        %466 = vmatpush1.xpose.msra.mxu0 0.0
        %467 = vmatprep.subr.mxu0 0.0
        %468 = vmatpush1.xpose.msra.mxu0 0.0
        %469 = vmatprep.subr.mxu0 0.0
        %470 = vmatpush1.xpose.msra.mxu0 0.0
        %471 = vmatprep.subr.mxu0 0.0
        %472 = vmatpush1.xpose.msra.mxu0 0.0
        %473 = vmatprep.subr.mxu0 0.0
        %474 = vmatpush1.xpose.msra.mxu0 0.0
        %475 = vmatprep.subr.mxu0 0.0
        %476 = vmatpush1.xpose.msra.mxu0 0.0
        %477 = vmatprep.subr.mxu0 0.0
        %478 = vmatpush1.xpose.msra.mxu0 0.0
        %479 = vmatprep.subr.mxu0 0.0
        %480 = vmatpush1.xpose.msra.mxu0 0.0
        %481 = vmatprep.subr.mxu0 0.0
        %482 = vmatpush1.xpose.msra.mxu0 0.0
        %483 = vmatprep.subr.mxu0 0.0
        %484 = vmatpush1.xpose.msra.mxu0 0.0
        %485 = vmatprep.subr.mxu0 0.0
        %486 = vmatpush1.xpose.msra.mxu0 0.0
        %487 = vmatprep.subr.mxu0 0.0
        %488 = vmatpush1.xpose.msra.mxu0 0.0
        %489 = vmatprep.subr.mxu0 0.0
        %490 = vmatpush1.xpose.msra.mxu0 0.0
        %491 = vmatprep.subr.mxu0 0.0
        %492 = vmatpush1.xpose.msra.mxu0 0.0
        %493 = vmatprep.subr.mxu0 0.0
        %494 = vmatpush1.xpose.msra.mxu0 0.0
        %495 = vmatprep.subr.mxu0 0.0
        %496 = vmatpush1.xpose.msra.mxu0 0.0
        %497 = vmatprep.subr.mxu0 0.0
        %498 = vmatpush1.xpose.msra.mxu0 0.0
        %499 = vmatprep.subr.mxu0 0.0
        %500 = vmatpush1.xpose.msra.mxu0 0.0
        %501 = vmatprep.subr.mxu0 0.0
        %502 = vmatpush1.xpose.msra.mxu0 0.0
        %503 = vmatprep.subr.mxu0 0.0
        %504 = vmatpush1.xpose.msra.mxu0 0.0
        %505 = vmatprep.subr.mxu0 0.0
        %506 = vmatpush1.xpose.msra.mxu0 0.0
        %507 = vmatprep.subr.mxu0 0.0
        %508 = vmatpush1.xpose.msra.mxu0 0.0
        %509 = vmatprep.mubr.f32.mxu0 0.0
        %510 = vmatmul.mubr.f32.gmra.mrb[0].mxu0 1.0
        %v511 = vpop.f32.mrb[0].mxu0
        %v512 = vadd.f32 %v437, %v511
        %v513 = vpop.f32.mrb[0].mxu0
        %514 = vdwg.mxu0
        %515 = vmatprep.subr.mxu0 0.0
        %v516 = vand.u32 %v368, 4294901760
        %v517 = vsub.f32 %v368, %v516
        %518 = vmatpush1.xpose.msra.mxu0 %v517
        %519 = vmatprep.subr.mxu0 0.0
        %520 = vmatpush1.xpose.msra.mxu0 0.0
        %521 = vmatprep.subr.mxu0 0.0
        %522 = vmatpush1.xpose.msra.mxu0 0.0
        %523 = vmatprep.subr.mxu0 0.0
        %524 = vmatpush1.xpose.msra.mxu0 0.0
        %525 = vmatprep.subr.mxu0 0.0
        %526 = vmatpush1.xpose.msra.mxu0 0.0
        %527 = vmatprep.subr.mxu0 0.0
        %528 = vmatpush1.xpose.msra.mxu0 0.0
        %529 = vmatprep.subr.mxu0 0.0
        %530 = vmatpush1.xpose.msra.mxu0 0.0
        %531 = vmatprep.subr.mxu0 0.0
        %532 = vmatpush1.xpose.msra.mxu0 0.0
        %533 = vmatprep.subr.mxu0 0.0
        %534 = vmatpush1.xpose.msra.mxu0 0.0
        %535 = vmatprep.subr.mxu0 0.0
        %536 = vmatpush1.xpose.msra.mxu0 0.0
        %537 = vmatprep.subr.mxu0 0.0
        %538 = vmatpush1.xpose.msra.mxu0 0.0
        %539 = vmatprep.subr.mxu0 0.0
        %540 = vmatpush1.xpose.msra.mxu0 0.0
        %541 = vmatprep.subr.mxu0 0.0
        %542 = vmatpush1.xpose.msra.mxu0 0.0
        %543 = vmatprep.subr.mxu0 0.0
        %544 = vmatpush1.xpose.msra.mxu0 0.0
        %545 = vmatprep.subr.mxu0 0.0
        %546 = vmatpush1.xpose.msra.mxu0 0.0
        %547 = vmatprep.subr.mxu0 0.0
        %548 = vmatpush1.xpose.msra.mxu0 0.0
        %549 = vmatprep.subr.mxu0 0.0
        %550 = vmatpush1.xpose.msra.mxu0 0.0
        %551 = vmatprep.subr.mxu0 0.0
        %552 = vmatpush1.xpose.msra.mxu0 0.0
        %553 = vmatprep.subr.mxu0 0.0
        %554 = vmatpush1.xpose.msra.mxu0 0.0
        %555 = vmatprep.subr.mxu0 0.0
        %556 = vmatpush1.xpose.msra.mxu0 0.0
        %557 = vmatprep.subr.mxu0 0.0
        %558 = vmatpush1.xpose.msra.mxu0 0.0
        %559 = vmatprep.subr.mxu0 0.0
        %560 = vmatpush1.xpose.msra.mxu0 0.0
        %561 = vmatprep.subr.mxu0 0.0
        %562 = vmatpush1.xpose.msra.mxu0 0.0
        %563 = vmatprep.subr.mxu0 0.0
        %564 = vmatpush1.xpose.msra.mxu0 0.0
        %565 = vmatprep.subr.mxu0 0.0
        %566 = vmatpush1.xpose.msra.mxu0 0.0
        %567 = vmatprep.subr.mxu0 0.0
        %568 = vmatpush1.xpose.msra.mxu0 0.0
        %569 = vmatprep.subr.mxu0 0.0
        %570 = vmatpush1.xpose.msra.mxu0 0.0
        %571 = vmatprep.subr.mxu0 0.0
        %572 = vmatpush1.xpose.msra.mxu0 0.0
        %573 = vmatprep.subr.mxu0 0.0
        %574 = vmatpush1.xpose.msra.mxu0 0.0
        %575 = vmatprep.subr.mxu0 0.0
        %576 = vmatpush1.xpose.msra.mxu0 0.0
        %577 = vmatprep.subr.mxu0 0.0
        %578 = vmatpush1.xpose.msra.mxu0 0.0
        %579 = vmatprep.subr.mxu0 0.0
        %580 = vmatpush1.xpose.msra.mxu0 0.0
        %581 = vmatprep.mubr.f32.mxu0 0.0
        %582 = vmatmul.mubr.f32.gmra.mrb[0].mxu0 0.0
        %v583 = vpop.f32.mrb[0].mxu0
        %v584 = vadd.f32 %v512, %v583
        %v585 = vpop.f32.mrb[0].mxu0
        %586 = vdwg.mxu0
        %587 = vmatprep.subr.mxu0 0.0
        %v588 = vand.u32 %v368, 4294901760
        %589 = vmatpush1.xpose.msra.mxu0 %v588
        %590 = vmatprep.subr.mxu0 0.0
        %591 = vmatpush1.xpose.msra.mxu0 0.0
        %592 = vmatprep.subr.mxu0 0.0
        %593 = vmatpush1.xpose.msra.mxu0 0.0
        %594 = vmatprep.subr.mxu0 0.0
        %595 = vmatpush1.xpose.msra.mxu0 0.0
        %596 = vmatprep.subr.mxu0 0.0
        %597 = vmatpush1.xpose.msra.mxu0 0.0
        %598 = vmatprep.subr.mxu0 0.0
        %599 = vmatpush1.xpose.msra.mxu0 0.0
        %600 = vmatprep.subr.mxu0 0.0
        %601 = vmatpush1.xpose.msra.mxu0 0.0
        %602 = vmatprep.subr.mxu0 0.0
        %603 = vmatpush1.xpose.msra.mxu0 0.0
        %604 = vmatprep.subr.mxu0 0.0
        %605 = vmatpush1.xpose.msra.mxu0 0.0
        %606 = vmatprep.subr.mxu0 0.0
        %607 = vmatpush1.xpose.msra.mxu0 0.0
        %608 = vmatprep.subr.mxu0 0.0
        %609 = vmatpush1.xpose.msra.mxu0 0.0
        %610 = vmatprep.subr.mxu0 0.0
        %611 = vmatpush1.xpose.msra.mxu0 0.0
        %612 = vmatprep.subr.mxu0 0.0
        %613 = vmatpush1.xpose.msra.mxu0 0.0
        %614 = vmatprep.subr.mxu0 0.0
        %615 = vmatpush1.xpose.msra.mxu0 0.0
        %616 = vmatprep.subr.mxu0 0.0
        %617 = vmatpush1.xpose.msra.mxu0 0.0
        %618 = vmatprep.subr.mxu0 0.0
        %619 = vmatpush1.xpose.msra.mxu0 0.0
        %620 = vmatprep.subr.mxu0 0.0
        %621 = vmatpush1.xpose.msra.mxu0 0.0
        %622 = vmatprep.subr.mxu0 0.0
        %623 = vmatpush1.xpose.msra.mxu0 0.0
        %624 = vmatprep.subr.mxu0 0.0
        %625 = vmatpush1.xpose.msra.mxu0 0.0
        %626 = vmatprep.subr.mxu0 0.0
        %627 = vmatpush1.xpose.msra.mxu0 0.0
        %628 = vmatprep.subr.mxu0 0.0
        %629 = vmatpush1.xpose.msra.mxu0 0.0
        %630 = vmatprep.subr.mxu0 0.0
        %631 = vmatpush1.xpose.msra.mxu0 0.0
        %632 = vmatprep.subr.mxu0 0.0
        %633 = vmatpush1.xpose.msra.mxu0 0.0
        %634 = vmatprep.subr.mxu0 0.0
        %635 = vmatpush1.xpose.msra.mxu0 0.0
        %636 = vmatprep.subr.mxu0 0.0
        %637 = vmatpush1.xpose.msra.mxu0 0.0
        %638 = vmatprep.subr.mxu0 0.0
        %639 = vmatpush1.xpose.msra.mxu0 0.0
        %640 = vmatprep.subr.mxu0 0.0
        %641 = vmatpush1.xpose.msra.mxu0 0.0
        %642 = vmatprep.subr.mxu0 0.0
        %643 = vmatpush1.xpose.msra.mxu0 0.0
        %644 = vmatprep.subr.mxu0 0.0
        %645 = vmatpush1.xpose.msra.mxu0 0.0
        %646 = vmatprep.subr.mxu0 0.0
        %647 = vmatpush1.xpose.msra.mxu0 0.0
        %648 = vmatprep.subr.mxu0 0.0
        %649 = vmatpush1.xpose.msra.mxu0 0.0
        %650 = vmatprep.subr.mxu0 0.0
        %651 = vmatpush1.xpose.msra.mxu0 0.0
        %652 = vmatprep.mubr.f32.mxu0 0.0
        %653 = vmatmul.mubr.f32.gmra.mrb[0].mxu0 0.0
        %v654 = vpop.f32.mrb[0].mxu0
        %v655 = vadd.f32 %v584, %v654
        %v656 = vpop.f32.mrb[0].mxu0
        %657 = vdwg.mxu0
        %658 = vmatprep.subr.mxu0 0.0
        %v659 = vand.u32 %v368, 4294901760
        %v660 = vsub.f32 %v368, %v659
        %v661 = vand.u32 %v660, 4294901760
        %662 = vmatpush1.xpose.msra.mxu0 %v661
        %663 = vmatprep.subr.mxu0 0.0
        %664 = vmatpush1.xpose.msra.mxu0 0.0
        %665 = vmatprep.subr.mxu0 0.0
        %666 = vmatpush1.xpose.msra.mxu0 0.0
        %667 = vmatprep.subr.mxu0 0.0
        %668 = vmatpush1.xpose.msra.mxu0 0.0
        %669 = vmatprep.subr.mxu0 0.0
        %670 = vmatpush1.xpose.msra.mxu0 0.0
        %671 = vmatprep.subr.mxu0 0.0
        %672 = vmatpush1.xpose.msra.mxu0 0.0
        %673 = vmatprep.subr.mxu0 0.0
        %674 = vmatpush1.xpose.msra.mxu0 0.0
        %675 = vmatprep.subr.mxu0 0.0
        %676 = vmatpush1.xpose.msra.mxu0 0.0
        %677 = vmatprep.subr.mxu0 0.0
        %678 = vmatpush1.xpose.msra.mxu0 0.0
        %679 = vmatprep.subr.mxu0 0.0
        %680 = vmatpush1.xpose.msra.mxu0 0.0
        %681 = vmatprep.subr.mxu0 0.0
        %682 = vmatpush1.xpose.msra.mxu0 0.0
        %683 = vmatprep.subr.mxu0 0.0
        %684 = vmatpush1.xpose.msra.mxu0 0.0
        %685 = vmatprep.subr.mxu0 0.0
        %686 = vmatpush1.xpose.msra.mxu0 0.0
        %687 = vmatprep.subr.mxu0 0.0
        %688 = vmatpush1.xpose.msra.mxu0 0.0
        %689 = vmatprep.subr.mxu0 0.0
        %690 = vmatpush1.xpose.msra.mxu0 0.0
        %691 = vmatprep.subr.mxu0 0.0
        %692 = vmatpush1.xpose.msra.mxu0 0.0
        %693 = vmatprep.subr.mxu0 0.0
        %694 = vmatpush1.xpose.msra.mxu0 0.0
        %695 = vmatprep.subr.mxu0 0.0
        %696 = vmatpush1.xpose.msra.mxu0 0.0
        %697 = vmatprep.subr.mxu0 0.0
        %698 = vmatpush1.xpose.msra.mxu0 0.0
        %699 = vmatprep.subr.mxu0 0.0
        %700 = vmatpush1.xpose.msra.mxu0 0.0
        %701 = vmatprep.subr.mxu0 0.0
        %702 = vmatpush1.xpose.msra.mxu0 0.0
        %703 = vmatprep.subr.mxu0 0.0
        %704 = vmatpush1.xpose.msra.mxu0 0.0
        %705 = vmatprep.subr.mxu0 0.0
        %706 = vmatpush1.xpose.msra.mxu0 0.0
        %707 = vmatprep.subr.mxu0 0.0
        %708 = vmatpush1.xpose.msra.mxu0 0.0
        %709 = vmatprep.subr.mxu0 0.0
        %710 = vmatpush1.xpose.msra.mxu0 0.0
        %711 = vmatprep.subr.mxu0 0.0
        %712 = vmatpush1.xpose.msra.mxu0 0.0
        %713 = vmatprep.subr.mxu0 0.0
        %714 = vmatpush1.xpose.msra.mxu0 0.0
        %715 = vmatprep.subr.mxu0 0.0
        %716 = vmatpush1.xpose.msra.mxu0 0.0
        %717 = vmatprep.subr.mxu0 0.0
        %718 = vmatpush1.xpose.msra.mxu0 0.0
        %719 = vmatprep.subr.mxu0 0.0
        %720 = vmatpush1.xpose.msra.mxu0 0.0
        %721 = vmatprep.subr.mxu0 0.0
        %722 = vmatpush1.xpose.msra.mxu0 0.0
        %723 = vmatprep.subr.mxu0 0.0
        %724 = vmatpush1.xpose.msra.mxu0 0.0
        %725 = vmatprep.mubr.f32.mxu0 0.0
        %726 = vmatmul.mubr.f32.gmra.mrb[0].mxu0 1.0
        %v727 = vpop.f32.mrb[0].mxu0
        %v728 = vadd.f32 %v655, %v727
        %v729 = vpop.f32.mrb[0].mxu0
        %730 = vdwg.mxu0
        %731 = vmatprep.subr.mxu0 0.0
        %v732 = vand.u32 %v368, 4294901760
        %733 = vmatpush1.xpose.msra.mxu0 %v732
        %734 = vmatprep.subr.mxu0 0.0
        %735 = vmatpush1.xpose.msra.mxu0 0.0
        %736 = vmatprep.subr.mxu0 0.0
        %737 = vmatpush1.xpose.msra.mxu0 0.0
        %738 = vmatprep.subr.mxu0 0.0
        %739 = vmatpush1.xpose.msra.mxu0 0.0
        %740 = vmatprep.subr.mxu0 0.0
        %741 = vmatpush1.xpose.msra.mxu0 0.0
        %742 = vmatprep.subr.mxu0 0.0
        %743 = vmatpush1.xpose.msra.mxu0 0.0
        %744 = vmatprep.subr.mxu0 0.0
        %745 = vmatpush1.xpose.msra.mxu0 0.0
        %746 = vmatprep.subr.mxu0 0.0
        %747 = vmatpush1.xpose.msra.mxu0 0.0
        %748 = vmatprep.subr.mxu0 0.0
        %749 = vmatpush1.xpose.msra.mxu0 0.0
        %750 = vmatprep.subr.mxu0 0.0
        %751 = vmatpush1.xpose.msra.mxu0 0.0
        %752 = vmatprep.subr.mxu0 0.0
        %753 = vmatpush1.xpose.msra.mxu0 0.0
        %754 = vmatprep.subr.mxu0 0.0
        %755 = vmatpush1.xpose.msra.mxu0 0.0
        %756 = vmatprep.subr.mxu0 0.0
        %757 = vmatpush1.xpose.msra.mxu0 0.0
        %758 = vmatprep.subr.mxu0 0.0
        %759 = vmatpush1.xpose.msra.mxu0 0.0
        %760 = vmatprep.subr.mxu0 0.0
        %761 = vmatpush1.xpose.msra.mxu0 0.0
        %762 = vmatprep.subr.mxu0 0.0
        %763 = vmatpush1.xpose.msra.mxu0 0.0
        %764 = vmatprep.subr.mxu0 0.0
        %765 = vmatpush1.xpose.msra.mxu0 0.0
        %766 = vmatprep.subr.mxu0 0.0
        %767 = vmatpush1.xpose.msra.mxu0 0.0
        %768 = vmatprep.subr.mxu0 0.0
        %769 = vmatpush1.xpose.msra.mxu0 0.0
        %770 = vmatprep.subr.mxu0 0.0
        %771 = vmatpush1.xpose.msra.mxu0 0.0
        %772 = vmatprep.subr.mxu0 0.0
        %773 = vmatpush1.xpose.msra.mxu0 0.0
        %774 = vmatprep.subr.mxu0 0.0
        %775 = vmatpush1.xpose.msra.mxu0 0.0
        %776 = vmatprep.subr.mxu0 0.0
        %777 = vmatpush1.xpose.msra.mxu0 0.0
        %778 = vmatprep.subr.mxu0 0.0
        %779 = vmatpush1.xpose.msra.mxu0 0.0
        %780 = vmatprep.subr.mxu0 0.0
        %781 = vmatpush1.xpose.msra.mxu0 0.0
        %782 = vmatprep.subr.mxu0 0.0
        %783 = vmatpush1.xpose.msra.mxu0 0.0
        %784 = vmatprep.subr.mxu0 0.0
        %785 = vmatpush1.xpose.msra.mxu0 0.0
        %786 = vmatprep.subr.mxu0 0.0
        %787 = vmatpush1.xpose.msra.mxu0 0.0
        %788 = vmatprep.subr.mxu0 0.0
        %789 = vmatpush1.xpose.msra.mxu0 0.0
        %790 = vmatprep.subr.mxu0 0.0
        %791 = vmatpush1.xpose.msra.mxu0 0.0
        %792 = vmatprep.subr.mxu0 0.0
        %793 = vmatpush1.xpose.msra.mxu0 0.0
        %794 = vmatprep.subr.mxu0 0.0
        %795 = vmatpush1.xpose.msra.mxu0 0.0
        %796 = vmatprep.mubr.f32.mxu0 0.0
        %797 = vmatmul.mubr.f32.gmra.mrb[0].mxu0 1.0
        %v798 = vpop.f32.mrb[0].mxu0
        %v799 = vadd.f32 %v728, %v798
        %v800 = vpop.f32.mrb[0].mxu0
        %801 = vdwg.mxu0
        %v802 = vrsqrt.pop %v799
        %v803 = vmul.f32 %v799, %v802
        %vm804 = vcmp.eq.f32.partialorder %v799, inf
        %v805 = vsel %vm804, %v799, %v803
        %vm806 = vcmp.eq.f32.partialorder %v799, 0.0
        %v807 = vand.u32 %v799, 2147483648
        %v808 = vsel %vm806, %v807, %v805
        %v809 = vmul.f32 %v808, -0.5
        %v810 = vmul.f32 %v809, 1.442695
        %v811 = vpow.pop %v810
        %v812 = vsub.f32 1.25, %v811
        %v813 = vmax.f32 %v812, 0.0
        %v814 = vsub.f32 0.0, %v813
        %v815 = vsub.f32 %v811, 0.75
        %v816 = vmul.f32 %v814, %v815
        %v817 = vmul.f32 %v816, 64.0
        %v819 = vcombine.high %v333, %v333
        %v821 = vunpack.c.l.s4 1966171168
        %v822 = vunpack.c.0.s8 %v821
        %v823 = vlaneseq
        %v824 = vshrl.u32 %v823, 7
        %v825 = vsub.s32 %v822, %v824
        %v826 = vrot.slane %v333, %v825
        %v828 = vunpack.c.l.s4 1966171168
        %v829 = vunpack.c.0.s8 %v828
        %v830 = vlaneseq
        %v831 = vshrl.u32 %v830, 7
        %v832 = vsub.s32 %v829, %v831
        %v833 = vrot.slane %v819, %v832
        %v834 = vcombine.high %v826, %v826
        %v835 = vcombine.high %v833, %v833
        %v837 = vunpack.c.l.s4 1966171168
        %v838 = vunpack.c.0.s8 %v837
        %v839 = vlaneseq
        %v840 = vshrl.u32 %v839, 7
        %v841 = vsub.s32 %v838, %v840
        %v842 = vrot.slane %v826, %v841
        %v844 = vunpack.c.l.s4 1966171168
        %v845 = vunpack.c.0.s8 %v844
        %v846 = vlaneseq
        %v847 = vshrl.u32 %v846, 7
        %v848 = vsub.s32 %v845, %v847
        %v849 = vrot.slane %v833, %v848
        %v851 = vunpack.c.l.s4 1966171168
        %v852 = vunpack.c.0.s8 %v851
        %v853 = vlaneseq
        %v854 = vshrl.u32 %v853, 7
        %v855 = vsub.s32 %v852, %v854
        %v856 = vrot.slane %v834, %v855
        %v858 = vunpack.c.l.s4 1966171168
        %v859 = vunpack.c.0.s8 %v858
        %v860 = vlaneseq
        %v861 = vshrl.u32 %v860, 7
        %v862 = vsub.s32 %v859, %v861
        %v863 = vrot.slane %v835, %v862
        %v864 = vcombine.high %v842, %v842
        %v865 = vcombine.high %v849, %v849
        %v866 = vcombine.high %v856, %v856
        %v867 = vcombine.high %v863, %v863
        %v868 = vlaneseq
        %v869 = vshrl.u32 %v868, 7
        %v870 = vsub.s32 0, %v869
        %v871 = vrot.slane %v842, %v870
        %v872 = vlaneseq
        %v873 = vshrl.u32 %v872, 7
        %v874 = vsub.s32 0, %v873
        %v875 = vrot.slane %v856, %v874
        %v876 = vlaneseq
        %v877 = vshrl.u32 %v876, 7
        %v878 = vsub.s32 0, %v877
        %v879 = vrot.slane %v864, %v878
        %v880 = vlaneseq
        %v881 = vshrl.u32 %v880, 7
        %v882 = vsub.s32 0, %v881
        %v883 = vrot.slane %v866, %v882
        %v884 = vlaneseq
        %v885 = vshrl.u32 %v884, 7
        %v886 = vsub.s32 0, %v885
        %v887 = vrot.slane %v849, %v886
        %v888 = vlaneseq
        %v889 = vshrl.u32 %v888, 7
        %v890 = vsub.s32 0, %v889
        %v891 = vrot.slane %v863, %v890
        %v892 = vlaneseq
        %v893 = vshrl.u32 %v892, 7
        %v894 = vsub.s32 0, %v893
        %v895 = vrot.slane %v865, %v894
        %v896 = vlaneseq
        %v897 = vshrl.u32 %v896, 7
        %v898 = vsub.s32 0, %v897
        %v899 = vrot.slane %v867, %v898
        %v908 = vsub.f32 %v335, %v871
        %v909 = vsub.f32 %v336, %v871
        %v910 = vsub.f32 %v337, %v871
        %v911 = vsub.f32 %v338, %v871
        %v912 = vsub.f32 %v339, %v875
        %v913 = vsub.f32 %v340, %v875
        %v914 = vsub.f32 %v341, %v875
        %v915 = vsub.f32 %v342, %v875
        %v916 = vsub.f32 %v343, %v879
        %v917 = vsub.f32 %v344, %v879
        %v918 = vsub.f32 %v345, %v879
        %v919 = vsub.f32 %v346, %v879
        %v920 = vsub.f32 %v347, %v883
        %v921 = vsub.f32 %v348, %v883
        %v922 = vsub.f32 %v349, %v883
        %v923 = vsub.f32 %v350, %v883
        %v924 = vsub.f32 %v351, %v887
        %v925 = vsub.f32 %v352, %v887
        %v926 = vsub.f32 %v353, %v887
        %v927 = vsub.f32 %v354, %v887
        %v928 = vsub.f32 %v355, %v891
        %v929 = vsub.f32 %v356, %v891
        %v930 = vsub.f32 %v357, %v891
        %v931 = vsub.f32 %v358, %v891
        %v932 = vsub.f32 %v359, %v895
        %v933 = vsub.f32 %v360, %v895
        %v934 = vsub.f32 %v361, %v895
        %v935 = vsub.f32 %v362, %v895
        %v936 = vsub.f32 %v363, %v899
        %v937 = vsub.f32 %v364, %v899
        %v938 = vsub.f32 %v365, %v899
        %v939 = vsub.f32 %v366, %v899
        %v940 = vmul.f32 %v908, %v908
        %v941 = vmul.f32 %v909, %v909
        %v942 = vmul.f32 %v910, %v910
        %v943 = vmul.f32 %v911, %v911
        %v944 = vmul.f32 %v912, %v912
        %v945 = vmul.f32 %v913, %v913
        %v946 = vmul.f32 %v914, %v914
        %v947 = vmul.f32 %v915, %v915
        %v948 = vmul.f32 %v916, %v916
        %v949 = vmul.f32 %v917, %v917
        %v950 = vmul.f32 %v918, %v918
        %v951 = vmul.f32 %v919, %v919
        %v952 = vmul.f32 %v920, %v920
        %v953 = vmul.f32 %v921, %v921
        %v954 = vmul.f32 %v922, %v922
        %v955 = vmul.f32 %v923, %v923
        %v956 = vmul.f32 %v924, %v924
        %v957 = vmul.f32 %v925, %v925
        %v958 = vmul.f32 %v926, %v926
        %v959 = vmul.f32 %v927, %v927
        %v960 = vmul.f32 %v928, %v928
        %v961 = vmul.f32 %v929, %v929
        %v962 = vmul.f32 %v930, %v930
        %v963 = vmul.f32 %v931, %v931
        %v964 = vmul.f32 %v932, %v932
        %v965 = vmul.f32 %v933, %v933
        %v966 = vmul.f32 %v934, %v934
        %v967 = vmul.f32 %v935, %v935
        %v968 = vmul.f32 %v936, %v936
        %v969 = vmul.f32 %v937, %v937
        %v970 = vmul.f32 %v938, %v938
        %v971 = vmul.f32 %v939, %v939
        %972 = vmatprep.subr.mxu0 0.0
        %v973 = vand.u32 %v940, 4294901760
        %974 = vmatpush1.xpose.msra.mxu0 %v973
        %975 = vmatprep.subr.mxu0 0.0
        %v976 = vand.u32 %v941, 4294901760
        %977 = vmatpush1.xpose.msra.mxu0 %v976
        %978 = vmatprep.subr.mxu0 0.0
        %v979 = vand.u32 %v942, 4294901760
        %980 = vmatpush1.xpose.msra.mxu0 %v979
        %981 = vmatprep.subr.mxu0 0.0
        %v982 = vand.u32 %v943, 4294901760
        %983 = vmatpush1.xpose.msra.mxu0 %v982
        %984 = vmatprep.subr.mxu0 0.0
        %985 = vmatpush1.xpose.msra.mxu0 0.0
        %986 = vmatprep.subr.mxu0 0.0
        %987 = vmatpush1.xpose.msra.mxu0 0.0
        %988 = vmatprep.subr.mxu0 0.0
        %989 = vmatpush1.xpose.msra.mxu0 0.0
        %990 = vmatprep.subr.mxu0 0.0
        %991 = vmatpush1.xpose.msra.mxu0 0.0
        %992 = vmatprep.subr.mxu0 0.0
        %993 = vmatpush1.xpose.msra.mxu0 0.0
        %994 = vmatprep.subr.mxu0 0.0
        %995 = vmatpush1.xpose.msra.mxu0 0.0
        %996 = vmatprep.subr.mxu0 0.0
        %997 = vmatpush1.xpose.msra.mxu0 0.0
        %998 = vmatprep.subr.mxu0 0.0
        %999 = vmatpush1.xpose.msra.mxu0 0.0
        %1000 = vmatprep.subr.mxu0 0.0
        %1001 = vmatpush1.xpose.msra.mxu0 0.0
        %1002 = vmatprep.subr.mxu0 0.0
        %1003 = vmatpush1.xpose.msra.mxu0 0.0
        %1004 = vmatprep.subr.mxu0 0.0
        %1005 = vmatpush1.xpose.msra.mxu0 0.0
        %1006 = vmatprep.subr.mxu0 0.0
        %1007 = vmatpush1.xpose.msra.mxu0 0.0
        %1008 = vmatprep.subr.mxu0 0.0
        %1009 = vmatpush1.xpose.msra.mxu0 0.0
        %1010 = vmatprep.subr.mxu0 0.0
        %1011 = vmatpush1.xpose.msra.mxu0 0.0
        %1012 = vmatprep.subr.mxu0 0.0
        %1013 = vmatpush1.xpose.msra.mxu0 0.0
        %1014 = vmatprep.subr.mxu0 0.0
        %1015 = vmatpush1.xpose.msra.mxu0 0.0
        %1016 = vmatprep.subr.mxu0 0.0
        %1017 = vmatpush1.xpose.msra.mxu0 0.0
        %1018 = vmatprep.subr.mxu0 0.0
        %1019 = vmatpush1.xpose.msra.mxu0 0.0
        %1020 = vmatprep.subr.mxu0 0.0
        %1021 = vmatpush1.xpose.msra.mxu0 0.0
        %1022 = vmatprep.subr.mxu0 0.0
        %1023 = vmatpush1.xpose.msra.mxu0 0.0
        %1024 = vmatprep.subr.mxu0 0.0
        %1025 = vmatpush1.xpose.msra.mxu0 0.0
        %1026 = vmatprep.subr.mxu0 0.0
        %1027 = vmatpush1.xpose.msra.mxu0 0.0
        %1028 = vmatprep.subr.mxu0 0.0
        %1029 = vmatpush1.xpose.msra.mxu0 0.0
        %1030 = vmatprep.subr.mxu0 0.0
        %1031 = vmatpush1.xpose.msra.mxu0 0.0
        %1032 = vmatprep.subr.mxu0 0.0
        %1033 = vmatpush1.xpose.msra.mxu0 0.0
        %1034 = vmatprep.subr.mxu0 0.0
        %1035 = vmatpush1.xpose.msra.mxu0 0.0
        %1036 = vmatprep.subr.mxu0 0.0
        %1037 = vmatpush1.xpose.msra.mxu0 0.0
        %1038 = vmatprep.subr.mxu0 0.0
        %1039 = vmatpush1.xpose.msra.mxu0 0.0
        %1040 = vmatprep.mubr.f32.mxu0 0.0
        %1041 = vmatmul.mubr.f32.gmra.mrb[0].mxu0 0.0
        %v1042 = vpop.f32.mrb[0].mxu0
        %v1043 = vadd.f32 0.0, %v1042
        %v1044 = vpop.f32.mrb[0].mxu0
        %1045 = vdwg.mxu0
        %1046 = vmatprep.subr.mxu0 0.0
        %v1047 = vand.u32 %v940, 4294901760
        %v1048 = vsub.f32 %v940, %v1047
        %v1049 = vand.u32 %v1048, 4294901760
        %v1050 = vsub.f32 %v1048, %v1049
        %v1051 = vand.u32 %v1050, 4294901760
        %1052 = vmatpush1.xpose.msra.mxu0 %v1051
        %1053 = vmatprep.subr.mxu0 0.0
        %v1054 = vand.u32 %v941, 4294901760
        %v1055 = vsub.f32 %v941, %v1054
        %v1056 = vand.u32 %v1055, 4294901760
        %v1057 = vsub.f32 %v1055, %v1056
        %v1058 = vand.u32 %v1057, 4294901760
        %1059 = vmatpush1.xpose.msra.mxu0 %v1058
        %1060 = vmatprep.subr.mxu0 0.0
        %v1061 = vand.u32 %v942, 4294901760
        %v1062 = vsub.f32 %v942, %v1061
        %v1063 = vand.u32 %v1062, 4294901760
        %v1064 = vsub.f32 %v1062, %v1063
        %v1065 = vand.u32 %v1064, 4294901760
        %1066 = vmatpush1.xpose.msra.mxu0 %v1065
        %1067 = vmatprep.subr.mxu0 0.0
        %v1068 = vand.u32 %v943, 4294901760
        %v1069 = vsub.f32 %v943, %v1068
        %v1070 = vand.u32 %v1069, 4294901760
        %v1071 = vsub.f32 %v1069, %v1070
        %v1072 = vand.u32 %v1071, 4294901760
        %1073 = vmatpush1.xpose.msra.mxu0 %v1072
        %1074 = vmatprep.subr.mxu0 0.0
        %1075 = vmatpush1.xpose.msra.mxu0 0.0
        %1076 = vmatprep.subr.mxu0 0.0
        %1077 = vmatpush1.xpose.msra.mxu0 0.0
        %1078 = vmatprep.subr.mxu0 0.0
        %1079 = vmatpush1.xpose.msra.mxu0 0.0
        %1080 = vmatprep.subr.mxu0 0.0
        %1081 = vmatpush1.xpose.msra.mxu0 0.0
        %1082 = vmatprep.subr.mxu0 0.0
        %1083 = vmatpush1.xpose.msra.mxu0 0.0
        %1084 = vmatprep.subr.mxu0 0.0
        %1085 = vmatpush1.xpose.msra.mxu0 0.0
        %1086 = vmatprep.subr.mxu0 0.0
        %1087 = vmatpush1.xpose.msra.mxu0 0.0
        %1088 = vmatprep.subr.mxu0 0.0
        %1089 = vmatpush1.xpose.msra.mxu0 0.0
        %1090 = vmatprep.subr.mxu0 0.0
        %1091 = vmatpush1.xpose.msra.mxu0 0.0
        %1092 = vmatprep.subr.mxu0 0.0
        %1093 = vmatpush1.xpose.msra.mxu0 0.0
        %1094 = vmatprep.subr.mxu0 0.0
        %1095 = vmatpush1.xpose.msra.mxu0 0.0
        %1096 = vmatprep.subr.mxu0 0.0
        %1097 = vmatpush1.xpose.msra.mxu0 0.0
        %1098 = vmatprep.subr.mxu0 0.0
        %1099 = vmatpush1.xpose.msra.mxu0 0.0
        %1100 = vmatprep.subr.mxu0 0.0
        %1101 = vmatpush1.xpose.msra.mxu0 0.0
        %1102 = vmatprep.subr.mxu0 0.0
        %1103 = vmatpush1.xpose.msra.mxu0 0.0
        %1104 = vmatprep.subr.mxu0 0.0
        %1105 = vmatpush1.xpose.msra.mxu0 0.0
        %1106 = vmatprep.subr.mxu0 0.0
        %1107 = vmatpush1.xpose.msra.mxu0 0.0
        %1108 = vmatprep.subr.mxu0 0.0
        %1109 = vmatpush1.xpose.msra.mxu0 0.0
        %1110 = vmatprep.subr.mxu0 0.0
        %1111 = vmatpush1.xpose.msra.mxu0 0.0
        %1112 = vmatprep.subr.mxu0 0.0
        %1113 = vmatpush1.xpose.msra.mxu0 0.0
        %1114 = vmatprep.subr.mxu0 0.0
        %1115 = vmatpush1.xpose.msra.mxu0 0.0
        %1116 = vmatprep.subr.mxu0 0.0
        %1117 = vmatpush1.xpose.msra.mxu0 0.0
        %1118 = vmatprep.subr.mxu0 0.0
        %1119 = vmatpush1.xpose.msra.mxu0 0.0
        %1120 = vmatprep.subr.mxu0 0.0
        %1121 = vmatpush1.xpose.msra.mxu0 0.0
        %1122 = vmatprep.subr.mxu0 0.0
        %1123 = vmatpush1.xpose.msra.mxu0 0.0
        %1124 = vmatprep.subr.mxu0 0.0
        %1125 = vmatpush1.xpose.msra.mxu0 0.0
        %1126 = vmatprep.subr.mxu0 0.0
        %1127 = vmatpush1.xpose.msra.mxu0 0.0
        %1128 = vmatprep.subr.mxu0 0.0
        %1129 = vmatpush1.xpose.msra.mxu0 0.0
        %1130 = vmatprep.mubr.f32.mxu0 0.0
        %1131 = vmatmul.mubr.f32.gmra.mrb[0].mxu0 1.0
        %v1132 = vpop.f32.mrb[0].mxu0
        %v1133 = vadd.f32 %v1043, %v1132
        %v1134 = vpop.f32.mrb[0].mxu0
        %1135 = vdwg.mxu0
        %1136 = vmatprep.subr.mxu0 0.0
        %v1137 = vand.u32 %v940, 4294901760
        %v1138 = vsub.f32 %v940, %v1137
        %1139 = vmatpush1.xpose.msra.mxu0 %v1138
        %1140 = vmatprep.subr.mxu0 0.0
        %v1141 = vand.u32 %v941, 4294901760
        %v1142 = vsub.f32 %v941, %v1141
        %1143 = vmatpush1.xpose.msra.mxu0 %v1142
        %1144 = vmatprep.subr.mxu0 0.0
        %v1145 = vand.u32 %v942, 4294901760
        %v1146 = vsub.f32 %v942, %v1145
        %1147 = vmatpush1.xpose.msra.mxu0 %v1146
        %1148 = vmatprep.subr.mxu0 0.0
        %v1149 = vand.u32 %v943, 4294901760
        %v1150 = vsub.f32 %v943, %v1149
        %1151 = vmatpush1.xpose.msra.mxu0 %v1150
        %1152 = vmatprep.subr.mxu0 0.0
        %1153 = vmatpush1.xpose.msra.mxu0 0.0
        %1154 = vmatprep.subr.mxu0 0.0
        %1155 = vmatpush1.xpose.msra.mxu0 0.0
        %1156 = vmatprep.subr.mxu0 0.0
        %1157 = vmatpush1.xpose.msra.mxu0 0.0
        %1158 = vmatprep.subr.mxu0 0.0
        %1159 = vmatpush1.xpose.msra.mxu0 0.0
        %1160 = vmatprep.subr.mxu0 0.0
        %1161 = vmatpush1.xpose.msra.mxu0 0.0
        %1162 = vmatprep.subr.mxu0 0.0
        %1163 = vmatpush1.xpose.msra.mxu0 0.0
        %1164 = vmatprep.subr.mxu0 0.0
        %1165 = vmatpush1.xpose.msra.mxu0 0.0
        %1166 = vmatprep.subr.mxu0 0.0
        %1167 = vmatpush1.xpose.msra.mxu0 0.0
        %1168 = vmatprep.subr.mxu0 0.0
        %1169 = vmatpush1.xpose.msra.mxu0 0.0
        %1170 = vmatprep.subr.mxu0 0.0
        %1171 = vmatpush1.xpose.msra.mxu0 0.0
        %1172 = vmatprep.subr.mxu0 0.0
        %1173 = vmatpush1.xpose.msra.mxu0 0.0
        %1174 = vmatprep.subr.mxu0 0.0
        %1175 = vmatpush1.xpose.msra.mxu0 0.0
        %1176 = vmatprep.subr.mxu0 0.0
        %1177 = vmatpush1.xpose.msra.mxu0 0.0
        %1178 = vmatprep.subr.mxu0 0.0
        %1179 = vmatpush1.xpose.msra.mxu0 0.0
        %1180 = vmatprep.subr.mxu0 0.0
        %1181 = vmatpush1.xpose.msra.mxu0 0.0
        %1182 = vmatprep.subr.mxu0 0.0
        %1183 = vmatpush1.xpose.msra.mxu0 0.0
        %1184 = vmatprep.subr.mxu0 0.0
        %1185 = vmatpush1.xpose.msra.mxu0 0.0
        %1186 = vmatprep.subr.mxu0 0.0
        %1187 = vmatpush1.xpose.msra.mxu0 0.0
        %1188 = vmatprep.subr.mxu0 0.0
        %1189 = vmatpush1.xpose.msra.mxu0 0.0
        %1190 = vmatprep.subr.mxu0 0.0
        %1191 = vmatpush1.xpose.msra.mxu0 0.0
        %1192 = vmatprep.subr.mxu0 0.0
        %1193 = vmatpush1.xpose.msra.mxu0 0.0
        %1194 = vmatprep.subr.mxu0 0.0
        %1195 = vmatpush1.xpose.msra.mxu0 0.0
        %1196 = vmatprep.subr.mxu0 0.0
        %1197 = vmatpush1.xpose.msra.mxu0 0.0
        %1198 = vmatprep.subr.mxu0 0.0
        %1199 = vmatpush1.xpose.msra.mxu0 0.0
        %1200 = vmatprep.subr.mxu0 0.0
        %1201 = vmatpush1.xpose.msra.mxu0 0.0
        %1202 = vmatprep.subr.mxu0 0.0
        %1203 = vmatpush1.xpose.msra.mxu0 0.0
        %1204 = vmatprep.subr.mxu0 0.0
        %1205 = vmatpush1.xpose.msra.mxu0 0.0
        %1206 = vmatprep.subr.mxu0 0.0
        %1207 = vmatpush1.xpose.msra.mxu0 0.0
        %1208 = vmatprep.mubr.f32.mxu0 0.0
        %1209 = vmatmul.mubr.f32.gmra.mrb[0].mxu0 0.0
        %v1210 = vpop.f32.mrb[0].mxu0
        %v1211 = vadd.f32 %v1133, %v1210
        %v1212 = vpop.f32.mrb[0].mxu0
        %1213 = vdwg.mxu0
        %1214 = vmatprep.subr.mxu0 0.0
        %v1215 = vand.u32 %v940, 4294901760
        %1216 = vmatpush1.xpose.msra.mxu0 %v1215
        %1217 = vmatprep.subr.mxu0 0.0
        %v1218 = vand.u32 %v941, 4294901760
        %1219 = vmatpush1.xpose.msra.mxu0 %v1218
        %1220 = vmatprep.subr.mxu0 0.0
        %v1221 = vand.u32 %v942, 4294901760
        %1222 = vmatpush1.xpose.msra.mxu0 %v1221
        %1223 = vmatprep.subr.mxu0 0.0
        %v1224 = vand.u32 %v943, 4294901760
        %1225 = vmatpush1.xpose.msra.mxu0 %v1224
        %1226 = vmatprep.subr.mxu0 0.0
        %1227 = vmatpush1.xpose.msra.mxu0 0.0
        %1228 = vmatprep.subr.mxu0 0.0
        %1229 = vmatpush1.xpose.msra.mxu0 0.0
        %1230 = vmatprep.subr.mxu0 0.0
        %1231 = vmatpush1.xpose.msra.mxu0 0.0
        %1232 = vmatprep.subr.mxu0 0.0
        %1233 = vmatpush1.xpose.msra.mxu0 0.0
        %1234 = vmatprep.subr.mxu0 0.0
        %1235 = vmatpush1.xpose.msra.mxu0 0.0
        %1236 = vmatprep.subr.mxu0 0.0
        %1237 = vmatpush1.xpose.msra.mxu0 0.0
        %1238 = vmatprep.subr.mxu0 0.0
        %1239 = vmatpush1.xpose.msra.mxu0 0.0
        %1240 = vmatprep.subr.mxu0 0.0
        %1241 = vmatpush1.xpose.msra.mxu0 0.0
        %1242 = vmatprep.subr.mxu0 0.0
        %1243 = vmatpush1.xpose.msra.mxu0 0.0
        %1244 = vmatprep.subr.mxu0 0.0
        %1245 = vmatpush1.xpose.msra.mxu0 0.0
        %1246 = vmatprep.subr.mxu0 0.0
        %1247 = vmatpush1.xpose.msra.mxu0 0.0
        %1248 = vmatprep.subr.mxu0 0.0
        %1249 = vmatpush1.xpose.msra.mxu0 0.0
        %1250 = vmatprep.subr.mxu0 0.0
        %1251 = vmatpush1.xpose.msra.mxu0 0.0
        %1252 = vmatprep.subr.mxu0 0.0
        %1253 = vmatpush1.xpose.msra.mxu0 0.0
        %1254 = vmatprep.subr.mxu0 0.0
        %1255 = vmatpush1.xpose.msra.mxu0 0.0
        %1256 = vmatprep.subr.mxu0 0.0
        %1257 = vmatpush1.xpose.msra.mxu0 0.0
        %1258 = vmatprep.subr.mxu0 0.0
        %1259 = vmatpush1.xpose.msra.mxu0 0.0
        %1260 = vmatprep.subr.mxu0 0.0
        %1261 = vmatpush1.xpose.msra.mxu0 0.0
        %1262 = vmatprep.subr.mxu0 0.0
        %1263 = vmatpush1.xpose.msra.mxu0 0.0
        %1264 = vmatprep.subr.mxu0 0.0
        %1265 = vmatpush1.xpose.msra.mxu0 0.0
        %1266 = vmatprep.subr.mxu0 0.0
        %1267 = vmatpush1.xpose.msra.mxu0 0.0
        %1268 = vmatprep.subr.mxu0 0.0
        %1269 = vmatpush1.xpose.msra.mxu0 0.0
        %1270 = vmatprep.subr.mxu0 0.0
        %1271 = vmatpush1.xpose.msra.mxu0 0.0
        %1272 = vmatprep.subr.mxu0 0.0
        %1273 = vmatpush1.xpose.msra.mxu0 0.0
        %1274 = vmatprep.subr.mxu0 0.0
        %1275 = vmatpush1.xpose.msra.mxu0 0.0
        %1276 = vmatprep.subr.mxu0 0.0
        %1277 = vmatpush1.xpose.msra.mxu0 0.0
        %1278 = vmatprep.subr.mxu0 0.0
        %1279 = vmatpush1.xpose.msra.mxu0 0.0
        %1280 = vmatprep.subr.mxu0 0.0
        %1281 = vmatpush1.xpose.msra.mxu0 0.0
        %1282 = vmatprep.mubr.f32.mxu0 0.0
        %1283 = vmatmul.mubr.f32.gmra.mrb[0].mxu0 0.0
        %v1284 = vpop.f32.mrb[0].mxu0
        %v1285 = vadd.f32 %v1211, %v1284
        %v1286 = vpop.f32.mrb[0].mxu0
        %1287 = vdwg.mxu0
        %1288 = vmatprep.subr.mxu0 0.0
        %v1289 = vand.u32 %v940, 4294901760
        %v1290 = vsub.f32 %v940, %v1289
        %v1291 = vand.u32 %v1290, 4294901760
        %1292 = vmatpush1.xpose.msra.mxu0 %v1291
        %1293 = vmatprep.subr.mxu0 0.0
        %v1294 = vand.u32 %v941, 4294901760
        %v1295 = vsub.f32 %v941, %v1294
        %v1296 = vand.u32 %v1295, 4294901760
        %1297 = vmatpush1.xpose.msra.mxu0 %v1296
        %1298 = vmatprep.subr.mxu0 0.0
        %v1299 = vand.u32 %v942, 4294901760
        %v1300 = vsub.f32 %v942, %v1299
        %v1301 = vand.u32 %v1300, 4294901760
        %1302 = vmatpush1.xpose.msra.mxu0 %v1301
        %1303 = vmatprep.subr.mxu0 0.0
        %v1304 = vand.u32 %v943, 4294901760
        %v1305 = vsub.f32 %v943, %v1304
        %v1306 = vand.u32 %v1305, 4294901760
        %1307 = vmatpush1.xpose.msra.mxu0 %v1306
        %1308 = vmatprep.subr.mxu0 0.0
        %1309 = vmatpush1.xpose.msra.mxu0 0.0
        %1310 = vmatprep.subr.mxu0 0.0
        %1311 = vmatpush1.xpose.msra.mxu0 0.0
        %1312 = vmatprep.subr.mxu0 0.0
        %1313 = vmatpush1.xpose.msra.mxu0 0.0
        %1314 = vmatprep.subr.mxu0 0.0
        %1315 = vmatpush1.xpose.msra.mxu0 0.0
        %1316 = vmatprep.subr.mxu0 0.0
        %1317 = vmatpush1.xpose.msra.mxu0 0.0
        %1318 = vmatprep.subr.mxu0 0.0
        %1319 = vmatpush1.xpose.msra.mxu0 0.0
        %1320 = vmatprep.subr.mxu0 0.0
        %1321 = vmatpush1.xpose.msra.mxu0 0.0
        %1322 = vmatprep.subr.mxu0 0.0
        %1323 = vmatpush1.xpose.msra.mxu0 0.0
        %1324 = vmatprep.subr.mxu0 0.0
        %1325 = vmatpush1.xpose.msra.mxu0 0.0
        %1326 = vmatprep.subr.mxu0 0.0
        %1327 = vmatpush1.xpose.msra.mxu0 0.0
        %1328 = vmatprep.subr.mxu0 0.0
        %1329 = vmatpush1.xpose.msra.mxu0 0.0
        %1330 = vmatprep.subr.mxu0 0.0
        %1331 = vmatpush1.xpose.msra.mxu0 0.0
        %1332 = vmatprep.subr.mxu0 0.0
        %1333 = vmatpush1.xpose.msra.mxu0 0.0
        %1334 = vmatprep.subr.mxu0 0.0
        %1335 = vmatpush1.xpose.msra.mxu0 0.0
        %1336 = vmatprep.subr.mxu0 0.0
        %1337 = vmatpush1.xpose.msra.mxu0 0.0
        %1338 = vmatprep.subr.mxu0 0.0
        %1339 = vmatpush1.xpose.msra.mxu0 0.0
        %1340 = vmatprep.subr.mxu0 0.0
        %1341 = vmatpush1.xpose.msra.mxu0 0.0
        %1342 = vmatprep.subr.mxu0 0.0
        %1343 = vmatpush1.xpose.msra.mxu0 0.0
        %1344 = vmatprep.subr.mxu0 0.0
        %1345 = vmatpush1.xpose.msra.mxu0 0.0
        %1346 = vmatprep.subr.mxu0 0.0
        %1347 = vmatpush1.xpose.msra.mxu0 0.0
        %1348 = vmatprep.subr.mxu0 0.0
        %1349 = vmatpush1.xpose.msra.mxu0 0.0
        %1350 = vmatprep.subr.mxu0 0.0
        %1351 = vmatpush1.xpose.msra.mxu0 0.0
        %1352 = vmatprep.subr.mxu0 0.0
        %1353 = vmatpush1.xpose.msra.mxu0 0.0
        %1354 = vmatprep.subr.mxu0 0.0
        %1355 = vmatpush1.xpose.msra.mxu0 0.0
        %1356 = vmatprep.subr.mxu0 0.0
        %1357 = vmatpush1.xpose.msra.mxu0 0.0
        %1358 = vmatprep.subr.mxu0 0.0
        %1359 = vmatpush1.xpose.msra.mxu0 0.0
        %1360 = vmatprep.subr.mxu0 0.0
        %1361 = vmatpush1.xpose.msra.mxu0 0.0
        %1362 = vmatprep.subr.mxu0 0.0
        %1363 = vmatpush1.xpose.msra.mxu0 0.0
        %1364 = vmatprep.mubr.f32.mxu0 0.0
        %1365 = vmatmul.mubr.f32.gmra.mrb[0].mxu0 1.0
        %v1366 = vpop.f32.mrb[0].mxu0
        %v1367 = vadd.f32 %v1285, %v1366
        %v1368 = vpop.f32.mrb[0].mxu0
        %1369 = vdwg.mxu0
        %1370 = vmatprep.subr.mxu0 0.0
        %v1371 = vand.u32 %v940, 4294901760
        %1372 = vmatpush1.xpose.msra.mxu0 %v1371
        %1373 = vmatprep.subr.mxu0 0.0
        %v1374 = vand.u32 %v941, 4294901760
        %1375 = vmatpush1.xpose.msra.mxu0 %v1374
        %1376 = vmatprep.subr.mxu0 0.0
        %v1377 = vand.u32 %v942, 4294901760
        %1378 = vmatpush1.xpose.msra.mxu0 %v1377
        %1379 = vmatprep.subr.mxu0 0.0
        %v1380 = vand.u32 %v943, 4294901760
        %1381 = vmatpush1.xpose.msra.mxu0 %v1380
        %1382 = vmatprep.subr.mxu0 0.0
        %1383 = vmatpush1.xpose.msra.mxu0 0.0
        %1384 = vmatprep.subr.mxu0 0.0
        %1385 = vmatpush1.xpose.msra.mxu0 0.0
        %1386 = vmatprep.subr.mxu0 0.0
        %1387 = vmatpush1.xpose.msra.mxu0 0.0
        %1388 = vmatprep.subr.mxu0 0.0
        %1389 = vmatpush1.xpose.msra.mxu0 0.0
        %1390 = vmatprep.subr.mxu0 0.0
        %1391 = vmatpush1.xpose.msra.mxu0 0.0
        %1392 = vmatprep.subr.mxu0 0.0
        %1393 = vmatpush1.xpose.msra.mxu0 0.0
        %1394 = vmatprep.subr.mxu0 0.0
        %1395 = vmatpush1.xpose.msra.mxu0 0.0
        %1396 = vmatprep.subr.mxu0 0.0
        %1397 = vmatpush1.xpose.msra.mxu0 0.0
        %1398 = vmatprep.subr.mxu0 0.0
        %1399 = vmatpush1.xpose.msra.mxu0 0.0
        %1400 = vmatprep.subr.mxu0 0.0
        %1401 = vmatpush1.xpose.msra.mxu0 0.0
        %1402 = vmatprep.subr.mxu0 0.0
        %1403 = vmatpush1.xpose.msra.mxu0 0.0
        %1404 = vmatprep.subr.mxu0 0.0
        %1405 = vmatpush1.xpose.msra.mxu0 0.0
        %1406 = vmatprep.subr.mxu0 0.0
        %1407 = vmatpush1.xpose.msra.mxu0 0.0
        %1408 = vmatprep.subr.mxu0 0.0
        %1409 = vmatpush1.xpose.msra.mxu0 0.0
        %1410 = vmatprep.subr.mxu0 0.0
        %1411 = vmatpush1.xpose.msra.mxu0 0.0
        %1412 = vmatprep.subr.mxu0 0.0
        %1413 = vmatpush1.xpose.msra.mxu0 0.0
        %1414 = vmatprep.subr.mxu0 0.0
        %1415 = vmatpush1.xpose.msra.mxu0 0.0
        %1416 = vmatprep.subr.mxu0 0.0
        %1417 = vmatpush1.xpose.msra.mxu0 0.0
        %1418 = vmatprep.subr.mxu0 0.0
        %1419 = vmatpush1.xpose.msra.mxu0 0.0
        %1420 = vmatprep.subr.mxu0 0.0
        %1421 = vmatpush1.xpose.msra.mxu0 0.0
        %1422 = vmatprep.subr.mxu0 0.0
        %1423 = vmatpush1.xpose.msra.mxu0 0.0
        %1424 = vmatprep.subr.mxu0 0.0
        %1425 = vmatpush1.xpose.msra.mxu0 0.0
        %1426 = vmatprep.subr.mxu0 0.0
        %1427 = vmatpush1.xpose.msra.mxu0 0.0
        %1428 = vmatprep.subr.mxu0 0.0
        %1429 = vmatpush1.xpose.msra.mxu0 0.0
        %1430 = vmatprep.subr.mxu0 0.0
        %1431 = vmatpush1.xpose.msra.mxu0 0.0
        %1432 = vmatprep.subr.mxu0 0.0
        %1433 = vmatpush1.xpose.msra.mxu0 0.0
        %1434 = vmatprep.subr.mxu0 0.0
        %1435 = vmatpush1.xpose.msra.mxu0 0.0
        %1436 = vmatprep.subr.mxu0 0.0
        %1437 = vmatpush1.xpose.msra.mxu0 0.0
        %1438 = vmatprep.mubr.f32.mxu0 0.0
        %1439 = vmatmul.mubr.f32.gmra.mrb[0].mxu0 1.0
        %v1440 = vpop.f32.mrb[0].mxu0
        %v1441 = vadd.f32 %v1367, %v1440
        %v1442 = vpop.f32.mrb[0].mxu0
        %1443 = vdwg.mxu0
        %1444 = vmatprep.subr.mxu0 0.0
        %v1445 = vand.u32 %v944, 4294901760
        %1446 = vmatpush1.xpose.msra.mxu0 %v1445
        %1447 = vmatprep.subr.mxu0 0.0
        %v1448 = vand.u32 %v945, 4294901760
        %1449 = vmatpush1.xpose.msra.mxu0 %v1448
        %1450 = vmatprep.subr.mxu0 0.0
        %v1451 = vand.u32 %v946, 4294901760
        %1452 = vmatpush1.xpose.msra.mxu0 %v1451
        %1453 = vmatprep.subr.mxu0 0.0
        %v1454 = vand.u32 %v947, 4294901760
        %1455 = vmatpush1.xpose.msra.mxu0 %v1454
        %1456 = vmatprep.subr.mxu0 0.0
        %1457 = vmatpush1.xpose.msra.mxu0 0.0
        %1458 = vmatprep.subr.mxu0 0.0
        %1459 = vmatpush1.xpose.msra.mxu0 0.0
        %1460 = vmatprep.subr.mxu0 0.0
        %1461 = vmatpush1.xpose.msra.mxu0 0.0
        %1462 = vmatprep.subr.mxu0 0.0
        %1463 = vmatpush1.xpose.msra.mxu0 0.0
        %1464 = vmatprep.subr.mxu0 0.0
        %1465 = vmatpush1.xpose.msra.mxu0 0.0
        %1466 = vmatprep.subr.mxu0 0.0
        %1467 = vmatpush1.xpose.msra.mxu0 0.0
        %1468 = vmatprep.subr.mxu0 0.0
        %1469 = vmatpush1.xpose.msra.mxu0 0.0
        %1470 = vmatprep.subr.mxu0 0.0
        %1471 = vmatpush1.xpose.msra.mxu0 0.0
        %1472 = vmatprep.subr.mxu0 0.0
        %1473 = vmatpush1.xpose.msra.mxu0 0.0
        %1474 = vmatprep.subr.mxu0 0.0
        %1475 = vmatpush1.xpose.msra.mxu0 0.0
        %1476 = vmatprep.subr.mxu0 0.0
        %1477 = vmatpush1.xpose.msra.mxu0 0.0
        %1478 = vmatprep.subr.mxu0 0.0
        %1479 = vmatpush1.xpose.msra.mxu0 0.0
        %1480 = vmatprep.subr.mxu0 0.0
        %1481 = vmatpush1.xpose.msra.mxu0 0.0
        %1482 = vmatprep.subr.mxu0 0.0
        %1483 = vmatpush1.xpose.msra.mxu0 0.0
        %1484 = vmatprep.subr.mxu0 0.0
        %1485 = vmatpush1.xpose.msra.mxu0 0.0
        %1486 = vmatprep.subr.mxu0 0.0
        %1487 = vmatpush1.xpose.msra.mxu0 0.0
        %1488 = vmatprep.subr.mxu0 0.0
        %1489 = vmatpush1.xpose.msra.mxu0 0.0
        %1490 = vmatprep.subr.mxu0 0.0
        %1491 = vmatpush1.xpose.msra.mxu0 0.0
        %1492 = vmatprep.subr.mxu0 0.0
        %1493 = vmatpush1.xpose.msra.mxu0 0.0
        %1494 = vmatprep.subr.mxu0 0.0
        %1495 = vmatpush1.xpose.msra.mxu0 0.0
        %1496 = vmatprep.subr.mxu0 0.0
        %1497 = vmatpush1.xpose.msra.mxu0 0.0
        %1498 = vmatprep.subr.mxu0 0.0
        %1499 = vmatpush1.xpose.msra.mxu0 0.0
        %1500 = vmatprep.subr.mxu0 0.0
        %1501 = vmatpush1.xpose.msra.mxu0 0.0
        %1502 = vmatprep.subr.mxu0 0.0
        %1503 = vmatpush1.xpose.msra.mxu0 0.0
        %1504 = vmatprep.subr.mxu0 0.0
        %1505 = vmatpush1.xpose.msra.mxu0 0.0
        %1506 = vmatprep.subr.mxu0 0.0
        %1507 = vmatpush1.xpose.msra.mxu0 0.0
        %1508 = vmatprep.subr.mxu0 0.0
        %1509 = vmatpush1.xpose.msra.mxu0 0.0
        %1510 = vmatprep.subr.mxu0 0.0
        %1511 = vmatpush1.xpose.msra.mxu0 0.0
        %1512 = vmatprep.mubr.f32.mxu0 0.0
        %1513 = vmatmul.mubr.f32.gmra.mrb[0].mxu0 0.0
        %v1514 = vpop.f32.mrb[0].mxu0
        %v1515 = vadd.f32 0.0, %v1514
        %v1516 = vpop.f32.mrb[0].mxu0
        %1517 = vdwg.mxu0
        %1518 = vmatprep.subr.mxu0 0.0
        %v1519 = vand.u32 %v944, 4294901760
        %v1520 = vsub.f32 %v944, %v1519
        %v1521 = vand.u32 %v1520, 4294901760
        %v1522 = vsub.f32 %v1520, %v1521
        %v1523 = vand.u32 %v1522, 4294901760
        %1524 = vmatpush1.xpose.msra.mxu0 %v1523
        %1525 = vmatprep.subr.mxu0 0.0
        %v1526 = vand.u32 %v945, 4294901760
        %v1527 = vsub.f32 %v945, %v1526
        %v1528 = vand.u32 %v1527, 4294901760
        %v1529 = vsub.f32 %v1527, %v1528
        %v1530 = vand.u32 %v1529, 4294901760
        %1531 = vmatpush1.xpose.msra.mxu0 %v1530
        %1532 = vmatprep.subr.mxu0 0.0
        %v1533 = vand.u32 %v946, 4294901760
        %v1534 = vsub.f32 %v946, %v1533
        %v1535 = vand.u32 %v1534, 4294901760
        %v1536 = vsub.f32 %v1534, %v1535
        %v1537 = vand.u32 %v1536, 4294901760
        %1538 = vmatpush1.xpose.msra.mxu0 %v1537
        %1539 = vmatprep.subr.mxu0 0.0
        %v1540 = vand.u32 %v947, 4294901760
        %v1541 = vsub.f32 %v947, %v1540
        %v1542 = vand.u32 %v1541, 4294901760
        %v1543 = vsub.f32 %v1541, %v1542
        %v1544 = vand.u32 %v1543, 4294901760
        %1545 = vmatpush1.xpose.msra.mxu0 %v1544
        %1546 = vmatprep.subr.mxu0 0.0
        %1547 = vmatpush1.xpose.msra.mxu0 0.0
        %1548 = vmatprep.subr.mxu0 0.0
        %1549 = vmatpush1.xpose.msra.mxu0 0.0
        %1550 = vmatprep.subr.mxu0 0.0
        %1551 = vmatpush1.xpose.msra.mxu0 0.0
        %1552 = vmatprep.subr.mxu0 0.0
        %1553 = vmatpush1.xpose.msra.mxu0 0.0
        %1554 = vmatprep.subr.mxu0 0.0
        %1555 = vmatpush1.xpose.msra.mxu0 0.0
        %1556 = vmatprep.subr.mxu0 0.0
        %1557 = vmatpush1.xpose.msra.mxu0 0.0
        %1558 = vmatprep.subr.mxu0 0.0
        %1559 = vmatpush1.xpose.msra.mxu0 0.0
        %1560 = vmatprep.subr.mxu0 0.0
        %1561 = vmatpush1.xpose.msra.mxu0 0.0
        %1562 = vmatprep.subr.mxu0 0.0
        %1563 = vmatpush1.xpose.msra.mxu0 0.0
        %1564 = vmatprep.subr.mxu0 0.0
        %1565 = vmatpush1.xpose.msra.mxu0 0.0
        %1566 = vmatprep.subr.mxu0 0.0
        %1567 = vmatpush1.xpose.msra.mxu0 0.0
        %1568 = vmatprep.subr.mxu0 0.0
        %1569 = vmatpush1.xpose.msra.mxu0 0.0
        %1570 = vmatprep.subr.mxu0 0.0
        %1571 = vmatpush1.xpose.msra.mxu0 0.0
        %1572 = vmatprep.subr.mxu0 0.0
        %1573 = vmatpush1.xpose.msra.mxu0 0.0
        %1574 = vmatprep.subr.mxu0 0.0
        %1575 = vmatpush1.xpose.msra.mxu0 0.0
        %1576 = vmatprep.subr.mxu0 0.0
        %1577 = vmatpush1.xpose.msra.mxu0 0.0
        %1578 = vmatprep.subr.mxu0 0.0
        %1579 = vmatpush1.xpose.msra.mxu0 0.0
        %1580 = vmatprep.subr.mxu0 0.0
        %1581 = vmatpush1.xpose.msra.mxu0 0.0
        %1582 = vmatprep.subr.mxu0 0.0
        %1583 = vmatpush1.xpose.msra.mxu0 0.0
        %1584 = vmatprep.subr.mxu0 0.0
        %1585 = vmatpush1.xpose.msra.mxu0 0.0
        %1586 = vmatprep.subr.mxu0 0.0
        %1587 = vmatpush1.xpose.msra.mxu0 0.0
        %1588 = vmatprep.subr.mxu0 0.0
        %1589 = vmatpush1.xpose.msra.mxu0 0.0
        %1590 = vmatprep.subr.mxu0 0.0
        %1591 = vmatpush1.xpose.msra.mxu0 0.0
        %1592 = vmatprep.subr.mxu0 0.0
        %1593 = vmatpush1.xpose.msra.mxu0 0.0
        %1594 = vmatprep.subr.mxu0 0.0
        %1595 = vmatpush1.xpose.msra.mxu0 0.0
        %1596 = vmatprep.subr.mxu0 0.0
        %1597 = vmatpush1.xpose.msra.mxu0 0.0
        %1598 = vmatprep.subr.mxu0 0.0
        %1599 = vmatpush1.xpose.msra.mxu0 0.0
        %1600 = vmatprep.subr.mxu0 0.0
        %1601 = vmatpush1.xpose.msra.mxu0 0.0
        %1602 = vmatprep.mubr.f32.mxu0 0.0
        %1603 = vmatmul.mubr.f32.gmra.mrb[0].mxu0 1.0
        %v1604 = vpop.f32.mrb[0].mxu0
        %v1605 = vadd.f32 %v1515, %v1604
        %v1606 = vpop.f32.mrb[0].mxu0
        %1607 = vdwg.mxu0
        %1608 = vmatprep.subr.mxu0 0.0
        %v1609 = vand.u32 %v944, 4294901760
        %v1610 = vsub.f32 %v944, %v1609
        %1611 = vmatpush1.xpose.msra.mxu0 %v1610
        %1612 = vmatprep.subr.mxu0 0.0
        %v1613 = vand.u32 %v945, 4294901760
        %v1614 = vsub.f32 %v945, %v1613
        %1615 = vmatpush1.xpose.msra.mxu0 %v1614
        %1616 = vmatprep.subr.mxu0 0.0
        %v1617 = vand.u32 %v946, 4294901760
        %v1618 = vsub.f32 %v946, %v1617
        %1619 = vmatpush1.xpose.msra.mxu0 %v1618
        %1620 = vmatprep.subr.mxu0 0.0
        %v1621 = vand.u32 %v947, 4294901760
        %v1622 = vsub.f32 %v947, %v1621
        %1623 = vmatpush1.xpose.msra.mxu0 %v1622
        %1624 = vmatprep.subr.mxu0 0.0
        %1625 = vmatpush1.xpose.msra.mxu0 0.0
        %1626 = vmatprep.subr.mxu0 0.0
        %1627 = vmatpush1.xpose.msra.mxu0 0.0
        %1628 = vmatprep.subr.mxu0 0.0
        %1629 = vmatpush1.xpose.msra.mxu0 0.0
        %1630 = vmatprep.subr.mxu0 0.0
        %1631 = vmatpush1.xpose.msra.mxu0 0.0
        %1632 = vmatprep.subr.mxu0 0.0
        %1633 = vmatpush1.xpose.msra.mxu0 0.0
        %1634 = vmatprep.subr.mxu0 0.0
        %1635 = vmatpush1.xpose.msra.mxu0 0.0
        %1636 = vmatprep.subr.mxu0 0.0
        %1637 = vmatpush1.xpose.msra.mxu0 0.0
        %1638 = vmatprep.subr.mxu0 0.0
        %1639 = vmatpush1.xpose.msra.mxu0 0.0
        %1640 = vmatprep.subr.mxu0 0.0
        %1641 = vmatpush1.xpose.msra.mxu0 0.0
        %1642 = vmatprep.subr.mxu0 0.0
        %1643 = vmatpush1.xpose.msra.mxu0 0.0
        %1644 = vmatprep.subr.mxu0 0.0
        %1645 = vmatpush1.xpose.msra.mxu0 0.0
        %1646 = vmatprep.subr.mxu0 0.0
        %1647 = vmatpush1.xpose.msra.mxu0 0.0
        %1648 = vmatprep.subr.mxu0 0.0
        %1649 = vmatpush1.xpose.msra.mxu0 0.0
        %1650 = vmatprep.subr.mxu0 0.0
        %1651 = vmatpush1.xpose.msra.mxu0 0.0
        %1652 = vmatprep.subr.mxu0 0.0
        %1653 = vmatpush1.xpose.msra.mxu0 0.0
        %1654 = vmatprep.subr.mxu0 0.0
        %1655 = vmatpush1.xpose.msra.mxu0 0.0
        %1656 = vmatprep.subr.mxu0 0.0
        %1657 = vmatpush1.xpose.msra.mxu0 0.0
        %1658 = vmatprep.subr.mxu0 0.0
        %1659 = vmatpush1.xpose.msra.mxu0 0.0
        %1660 = vmatprep.subr.mxu0 0.0
        %1661 = vmatpush1.xpose.msra.mxu0 0.0
        %1662 = vmatprep.subr.mxu0 0.0
        %1663 = vmatpush1.xpose.msra.mxu0 0.0
        %1664 = vmatprep.subr.mxu0 0.0
        %1665 = vmatpush1.xpose.msra.mxu0 0.0
        %1666 = vmatprep.subr.mxu0 0.0
        %1667 = vmatpush1.xpose.msra.mxu0 0.0
        %1668 = vmatprep.subr.mxu0 0.0
        %1669 = vmatpush1.xpose.msra.mxu0 0.0
        %1670 = vmatprep.subr.mxu0 0.0
        %1671 = vmatpush1.xpose.msra.mxu0 0.0
        %1672 = vmatprep.subr.mxu0 0.0
        %1673 = vmatpush1.xpose.msra.mxu0 0.0
        %1674 = vmatprep.subr.mxu0 0.0
        %1675 = vmatpush1.xpose.msra.mxu0 0.0
        %1676 = vmatprep.subr.mxu0 0.0
        %1677 = vmatpush1.xpose.msra.mxu0 0.0
        %1678 = vmatprep.subr.mxu0 0.0
        %1679 = vmatpush1.xpose.msra.mxu0 0.0
        %1680 = vmatprep.mubr.f32.mxu0 0.0
        %1681 = vmatmul.mubr.f32.gmra.mrb[0].mxu0 0.0
        %v1682 = vpop.f32.mrb[0].mxu0
        %v1683 = vadd.f32 %v1605, %v1682
        %v1684 = vpop.f32.mrb[0].mxu0
        %1685 = vdwg.mxu0
        %1686 = vmatprep.subr.mxu0 0.0
        %v1687 = vand.u32 %v944, 4294901760
        %1688 = vmatpush1.xpose.msra.mxu0 %v1687
        %1689 = vmatprep.subr.mxu0 0.0
        %v1690 = vand.u32 %v945, 4294901760
        %1691 = vmatpush1.xpose.msra.mxu0 %v1690
        %1692 = vmatprep.subr.mxu0 0.0
        %v1693 = vand.u32 %v946, 4294901760
        %1694 = vmatpush1.xpose.msra.mxu0 %v1693
        %1695 = vmatprep.subr.mxu0 0.0
        %v1696 = vand.u32 %v947, 4294901760
        %1697 = vmatpush1.xpose.msra.mxu0 %v1696
        %1698 = vmatprep.subr.mxu0 0.0
        %1699 = vmatpush1.xpose.msra.mxu0 0.0
        %1700 = vmatprep.subr.mxu0 0.0
        %1701 = vmatpush1.xpose.msra.mxu0 0.0
        %1702 = vmatprep.subr.mxu0 0.0
        %1703 = vmatpush1.xpose.msra.mxu0 0.0
        %1704 = vmatprep.subr.mxu0 0.0
        %1705 = vmatpush1.xpose.msra.mxu0 0.0
        %1706 = vmatprep.subr.mxu0 0.0
        %1707 = vmatpush1.xpose.msra.mxu0 0.0
        %1708 = vmatprep.subr.mxu0 0.0
        %1709 = vmatpush1.xpose.msra.mxu0 0.0
        %1710 = vmatprep.subr.mxu0 0.0
        %1711 = vmatpush1.xpose.msra.mxu0 0.0
        %1712 = vmatprep.subr.mxu0 0.0
        %1713 = vmatpush1.xpose.msra.mxu0 0.0
        %1714 = vmatprep.subr.mxu0 0.0
        %1715 = vmatpush1.xpose.msra.mxu0 0.0
        %1716 = vmatprep.subr.mxu0 0.0
        %1717 = vmatpush1.xpose.msra.mxu0 0.0
        %1718 = vmatprep.subr.mxu0 0.0
        %1719 = vmatpush1.xpose.msra.mxu0 0.0
        %1720 = vmatprep.subr.mxu0 0.0
        %1721 = vmatpush1.xpose.msra.mxu0 0.0
        %1722 = vmatprep.subr.mxu0 0.0
        %1723 = vmatpush1.xpose.msra.mxu0 0.0
        %1724 = vmatprep.subr.mxu0 0.0
        %1725 = vmatpush1.xpose.msra.mxu0 0.0
        %1726 = vmatprep.subr.mxu0 0.0
        %1727 = vmatpush1.xpose.msra.mxu0 0.0
        %1728 = vmatprep.subr.mxu0 0.0
        %1729 = vmatpush1.xpose.msra.mxu0 0.0
        %1730 = vmatprep.subr.mxu0 0.0
        %1731 = vmatpush1.xpose.msra.mxu0 0.0
        %1732 = vmatprep.subr.mxu0 0.0
        %1733 = vmatpush1.xpose.msra.mxu0 0.0
        %1734 = vmatprep.subr.mxu0 0.0
        %1735 = vmatpush1.xpose.msra.mxu0 0.0
        %1736 = vmatprep.subr.mxu0 0.0
        %1737 = vmatpush1.xpose.msra.mxu0 0.0
        %1738 = vmatprep.subr.mxu0 0.0
        %1739 = vmatpush1.xpose.msra.mxu0 0.0
        %1740 = vmatprep.subr.mxu0 0.0
        %1741 = vmatpush1.xpose.msra.mxu0 0.0
        %1742 = vmatprep.subr.mxu0 0.0
        %1743 = vmatpush1.xpose.msra.mxu0 0.0
        %1744 = vmatprep.subr.mxu0 0.0
        %1745 = vmatpush1.xpose.msra.mxu0 0.0
        %1746 = vmatprep.subr.mxu0 0.0
        %1747 = vmatpush1.xpose.msra.mxu0 0.0
        %1748 = vmatprep.subr.mxu0 0.0
        %1749 = vmatpush1.xpose.msra.mxu0 0.0
        %1750 = vmatprep.subr.mxu0 0.0
        %1751 = vmatpush1.xpose.msra.mxu0 0.0
        %1752 = vmatprep.subr.mxu0 0.0
        %1753 = vmatpush1.xpose.msra.mxu0 0.0
        %1754 = vmatprep.mubr.f32.mxu0 0.0
        %1755 = vmatmul.mubr.f32.gmra.mrb[0].mxu0 0.0
        %v1756 = vpop.f32.mrb[0].mxu0
        %v1757 = vadd.f32 %v1683, %v1756
        %v1758 = vpop.f32.mrb[0].mxu0
        %1759 = vdwg.mxu0
        %1760 = vmatprep.subr.mxu0 0.0
        %v1761 = vand.u32 %v944, 4294901760
        %v1762 = vsub.f32 %v944, %v1761
        %v1763 = vand.u32 %v1762, 4294901760
        %1764 = vmatpush1.xpose.msra.mxu0 %v1763
        %1765 = vmatprep.subr.mxu0 0.0
        %v1766 = vand.u32 %v945, 4294901760
        %v1767 = vsub.f32 %v945, %v1766
        %v1768 = vand.u32 %v1767, 4294901760
        %1769 = vmatpush1.xpose.msra.mxu0 %v1768
        %1770 = vmatprep.subr.mxu0 0.0
        %v1771 = vand.u32 %v946, 4294901760
        %v1772 = vsub.f32 %v946, %v1771
        %v1773 = vand.u32 %v1772, 4294901760
        %1774 = vmatpush1.xpose.msra.mxu0 %v1773
        %1775 = vmatprep.subr.mxu0 0.0
        %v1776 = vand.u32 %v947, 4294901760
        %v1777 = vsub.f32 %v947, %v1776
        %v1778 = vand.u32 %v1777, 4294901760
        %1779 = vmatpush1.xpose.msra.mxu0 %v1778
        %1780 = vmatprep.subr.mxu0 0.0
        %1781 = vmatpush1.xpose.msra.mxu0 0.0
        %1782 = vmatprep.subr.mxu0 0.0
        %1783 = vmatpush1.xpose.msra.mxu0 0.0
        %1784 = vmatprep.subr.mxu0 0.0
        %1785 = vmatpush1.xpose.msra.mxu0 0.0
        %1786 = vmatprep.subr.mxu0 0.0
        %1787 = vmatpush1.xpose.msra.mxu0 0.0
        %1788 = vmatprep.subr.mxu0 0.0
        %1789 = vmatpush1.xpose.msra.mxu0 0.0
        %1790 = vmatprep.subr.mxu0 0.0
        %1791 = vmatpush1.xpose.msra.mxu0 0.0
        %1792 = vmatprep.subr.mxu0 0.0
        %1793 = vmatpush1.xpose.msra.mxu0 0.0
        %1794 = vmatprep.subr.mxu0 0.0
        %1795 = vmatpush1.xpose.msra.mxu0 0.0
        %1796 = vmatprep.subr.mxu0 0.0
        %1797 = vmatpush1.xpose.msra.mxu0 0.0
        %1798 = vmatprep.subr.mxu0 0.0
        %1799 = vmatpush1.xpose.msra.mxu0 0.0
        %1800 = vmatprep.subr.mxu0 0.0
        %1801 = vmatpush1.xpose.msra.mxu0 0.0
        %1802 = vmatprep.subr.mxu0 0.0
        %1803 = vmatpush1.xpose.msra.mxu0 0.0
        %1804 = vmatprep.subr.mxu0 0.0
        %1805 = vmatpush1.xpose.msra.mxu0 0.0
        %1806 = vmatprep.subr.mxu0 0.0
        %1807 = vmatpush1.xpose.msra.mxu0 0.0
        %1808 = vmatprep.subr.mxu0 0.0
        %1809 = vmatpush1.xpose.msra.mxu0 0.0
        %1810 = vmatprep.subr.mxu0 0.0
        %1811 = vmatpush1.xpose.msra.mxu0 0.0
        %1812 = vmatprep.subr.mxu0 0.0
        %1813 = vmatpush1.xpose.msra.mxu0 0.0
        %1814 = vmatprep.subr.mxu0 0.0
        %1815 = vmatpush1.xpose.msra.mxu0 0.0
        %1816 = vmatprep.subr.mxu0 0.0
        %1817 = vmatpush1.xpose.msra.mxu0 0.0
        %1818 = vmatprep.subr.mxu0 0.0
        %1819 = vmatpush1.xpose.msra.mxu0 0.0
        %1820 = vmatprep.subr.mxu0 0.0
        %1821 = vmatpush1.xpose.msra.mxu0 0.0
        %1822 = vmatprep.subr.mxu0 0.0
        %1823 = vmatpush1.xpose.msra.mxu0 0.0
        %1824 = vmatprep.subr.mxu0 0.0
        %1825 = vmatpush1.xpose.msra.mxu0 0.0
        %1826 = vmatprep.subr.mxu0 0.0
        %1827 = vmatpush1.xpose.msra.mxu0 0.0
        %1828 = vmatprep.subr.mxu0 0.0
        %1829 = vmatpush1.xpose.msra.mxu0 0.0
        %1830 = vmatprep.subr.mxu0 0.0
        %1831 = vmatpush1.xpose.msra.mxu0 0.0
        %1832 = vmatprep.subr.mxu0 0.0
        %1833 = vmatpush1.xpose.msra.mxu0 0.0
        %1834 = vmatprep.subr.mxu0 0.0
        %1835 = vmatpush1.xpose.msra.mxu0 0.0
        %1836 = vmatprep.mubr.f32.mxu0 0.0
        %1837 = vmatmul.mubr.f32.gmra.mrb[0].mxu0 1.0
        %v1838 = vpop.f32.mrb[0].mxu0
        %v1839 = vadd.f32 %v1757, %v1838
        %v1840 = vpop.f32.mrb[0].mxu0
        %1841 = vdwg.mxu0
        %1842 = vmatprep.subr.mxu0 0.0
        %v1843 = vand.u32 %v944, 4294901760
        %1844 = vmatpush1.xpose.msra.mxu0 %v1843
        %1845 = vmatprep.subr.mxu0 0.0
        %v1846 = vand.u32 %v945, 4294901760
        %1847 = vmatpush1.xpose.msra.mxu0 %v1846
        %1848 = vmatprep.subr.mxu0 0.0
        %v1849 = vand.u32 %v946, 4294901760
        %1850 = vmatpush1.xpose.msra.mxu0 %v1849
        %1851 = vmatprep.subr.mxu0 0.0
        %v1852 = vand.u32 %v947, 4294901760
        %1853 = vmatpush1.xpose.msra.mxu0 %v1852
        %1854 = vmatprep.subr.mxu0 0.0
        %1855 = vmatpush1.xpose.msra.mxu0 0.0
        %1856 = vmatprep.subr.mxu0 0.0
        %1857 = vmatpush1.xpose.msra.mxu0 0.0
        %1858 = vmatprep.subr.mxu0 0.0
        %1859 = vmatpush1.xpose.msra.mxu0 0.0
        %1860 = vmatprep.subr.mxu0 0.0
        %1861 = vmatpush1.xpose.msra.mxu0 0.0
        %1862 = vmatprep.subr.mxu0 0.0
        %1863 = vmatpush1.xpose.msra.mxu0 0.0
        %1864 = vmatprep.subr.mxu0 0.0
        %1865 = vmatpush1.xpose.msra.mxu0 0.0
        %1866 = vmatprep.subr.mxu0 0.0
        %1867 = vmatpush1.xpose.msra.mxu0 0.0
        %1868 = vmatprep.subr.mxu0 0.0
        %1869 = vmatpush1.xpose.msra.mxu0 0.0
        %1870 = vmatprep.subr.mxu0 0.0
        %1871 = vmatpush1.xpose.msra.mxu0 0.0
        %1872 = vmatprep.subr.mxu0 0.0
        %1873 = vmatpush1.xpose.msra.mxu0 0.0
        %1874 = vmatprep.subr.mxu0 0.0
        %1875 = vmatpush1.xpose.msra.mxu0 0.0
        %1876 = vmatprep.subr.mxu0 0.0
        %1877 = vmatpush1.xpose.msra.mxu0 0.0
        %1878 = vmatprep.subr.mxu0 0.0
        %1879 = vmatpush1.xpose.msra.mxu0 0.0
        %1880 = vmatprep.subr.mxu0 0.0
        %1881 = vmatpush1.xpose.msra.mxu0 0.0
        %1882 = vmatprep.subr.mxu0 0.0
        %1883 = vmatpush1.xpose.msra.mxu0 0.0
        %1884 = vmatprep.subr.mxu0 0.0
        %1885 = vmatpush1.xpose.msra.mxu0 0.0
        %1886 = vmatprep.subr.mxu0 0.0
        %1887 = vmatpush1.xpose.msra.mxu0 0.0
        %1888 = vmatprep.subr.mxu0 0.0
        %1889 = vmatpush1.xpose.msra.mxu0 0.0
        %1890 = vmatprep.subr.mxu0 0.0
        %1891 = vmatpush1.xpose.msra.mxu0 0.0
        %1892 = vmatprep.subr.mxu0 0.0
        %1893 = vmatpush1.xpose.msra.mxu0 0.0
        %1894 = vmatprep.subr.mxu0 0.0
        %1895 = vmatpush1.xpose.msra.mxu0 0.0
        %1896 = vmatprep.subr.mxu0 0.0
        %1897 = vmatpush1.xpose.msra.mxu0 0.0
        %1898 = vmatprep.subr.mxu0 0.0
        %1899 = vmatpush1.xpose.msra.mxu0 0.0
        %1900 = vmatprep.subr.mxu0 0.0
        %1901 = vmatpush1.xpose.msra.mxu0 0.0
        %1902 = vmatprep.subr.mxu0 0.0
        %1903 = vmatpush1.xpose.msra.mxu0 0.0
        %1904 = vmatprep.subr.mxu0 0.0
        %1905 = vmatpush1.xpose.msra.mxu0 0.0
        %1906 = vmatprep.subr.mxu0 0.0
        %1907 = vmatpush1.xpose.msra.mxu0 0.0
        %1908 = vmatprep.subr.mxu0 0.0
        %1909 = vmatpush1.xpose.msra.mxu0 0.0
        %1910 = vmatprep.mubr.f32.mxu0 0.0
        %1911 = vmatmul.mubr.f32.gmra.mrb[0].mxu0 1.0
        %v1912 = vpop.f32.mrb[0].mxu0
        %v1913 = vadd.f32 %v1839, %v1912
        %v1914 = vpop.f32.mrb[0].mxu0
        %1915 = vdwg.mxu0
        %1916 = vmatprep.subr.mxu0 0.0
        %v1917 = vand.u32 %v948, 4294901760
        %1918 = vmatpush1.xpose.msra.mxu0 %v1917
        %1919 = vmatprep.subr.mxu0 0.0
        %v1920 = vand.u32 %v949, 4294901760
        %1921 = vmatpush1.xpose.msra.mxu0 %v1920
        %1922 = vmatprep.subr.mxu0 0.0
        %v1923 = vand.u32 %v950, 4294901760
        %1924 = vmatpush1.xpose.msra.mxu0 %v1923
        %1925 = vmatprep.subr.mxu0 0.0
        %v1926 = vand.u32 %v951, 4294901760
        %1927 = vmatpush1.xpose.msra.mxu0 %v1926
        %1928 = vmatprep.subr.mxu0 0.0
        %1929 = vmatpush1.xpose.msra.mxu0 0.0
        %1930 = vmatprep.subr.mxu0 0.0
        %1931 = vmatpush1.xpose.msra.mxu0 0.0
        %1932 = vmatprep.subr.mxu0 0.0
        %1933 = vmatpush1.xpose.msra.mxu0 0.0
        %1934 = vmatprep.subr.mxu0 0.0
        %1935 = vmatpush1.xpose.msra.mxu0 0.0
        %1936 = vmatprep.subr.mxu0 0.0
        %1937 = vmatpush1.xpose.msra.mxu0 0.0
        %1938 = vmatprep.subr.mxu0 0.0
        %1939 = vmatpush1.xpose.msra.mxu0 0.0
        %1940 = vmatprep.subr.mxu0 0.0
        %1941 = vmatpush1.xpose.msra.mxu0 0.0
        %1942 = vmatprep.subr.mxu0 0.0
        %1943 = vmatpush1.xpose.msra.mxu0 0.0
        %1944 = vmatprep.subr.mxu0 0.0
        %1945 = vmatpush1.xpose.msra.mxu0 0.0
        %1946 = vmatprep.subr.mxu0 0.0
        %1947 = vmatpush1.xpose.msra.mxu0 0.0
        %1948 = vmatprep.subr.mxu0 0.0
        %1949 = vmatpush1.xpose.msra.mxu0 0.0
        %1950 = vmatprep.subr.mxu0 0.0
        %1951 = vmatpush1.xpose.msra.mxu0 0.0
        %1952 = vmatprep.subr.mxu0 0.0
        %1953 = vmatpush1.xpose.msra.mxu0 0.0
        %1954 = vmatprep.subr.mxu0 0.0
        %1955 = vmatpush1.xpose.msra.mxu0 0.0
        %1956 = vmatprep.subr.mxu0 0.0
        %1957 = vmatpush1.xpose.msra.mxu0 0.0
        %1958 = vmatprep.subr.mxu0 0.0
        %1959 = vmatpush1.xpose.msra.mxu0 0.0
        %1960 = vmatprep.subr.mxu0 0.0
        %1961 = vmatpush1.xpose.msra.mxu0 0.0
        %1962 = vmatprep.subr.mxu0 0.0
        %1963 = vmatpush1.xpose.msra.mxu0 0.0
        %1964 = vmatprep.subr.mxu0 0.0
        %1965 = vmatpush1.xpose.msra.mxu0 0.0
        %1966 = vmatprep.subr.mxu0 0.0
        %1967 = vmatpush1.xpose.msra.mxu0 0.0
        %1968 = vmatprep.subr.mxu0 0.0
        %1969 = vmatpush1.xpose.msra.mxu0 0.0
        %1970 = vmatprep.subr.mxu0 0.0
        %1971 = vmatpush1.xpose.msra.mxu0 0.0
        %1972 = vmatprep.subr.mxu0 0.0
        %1973 = vmatpush1.xpose.msra.mxu0 0.0
        %1974 = vmatprep.subr.mxu0 0.0
        %1975 = vmatpush1.xpose.msra.mxu0 0.0
        %1976 = vmatprep.subr.mxu0 0.0
        %1977 = vmatpush1.xpose.msra.mxu0 0.0
        %1978 = vmatprep.subr.mxu0 0.0
        %1979 = vmatpush1.xpose.msra.mxu0 0.0
        %1980 = vmatprep.subr.mxu0 0.0
        %1981 = vmatpush1.xpose.msra.mxu0 0.0
        %1982 = vmatprep.subr.mxu0 0.0
        %1983 = vmatpush1.xpose.msra.mxu0 0.0
        %1984 = vmatprep.mubr.f32.mxu0 0.0
        %1985 = vmatmul.mubr.f32.gmra.mrb[0].mxu0 0.0
        %v1986 = vpop.f32.mrb[0].mxu0
        %v1987 = vadd.f32 0.0, %v1986
        %v1988 = vpop.f32.mrb[0].mxu0
        %1989 = vdwg.mxu0
        %1990 = vmatprep.subr.mxu0 0.0
        %v1991 = vand.u32 %v948, 4294901760
        %v1992 = vsub.f32 %v948, %v1991
        %v1993 = vand.u32 %v1992, 4294901760
        %v1994 = vsub.f32 %v1992, %v1993
        %v1995 = vand.u32 %v1994, 4294901760
        %1996 = vmatpush1.xpose.msra.mxu0 %v1995
        %1997 = vmatprep.subr.mxu0 0.0
        %v1998 = vand.u32 %v949, 4294901760
        %v1999 = vsub.f32 %v949, %v1998
        %v2000 = vand.u32 %v1999, 4294901760
        %v2001 = vsub.f32 %v1999, %v2000
        %v2002 = vand.u32 %v2001, 4294901760
        %2003 = vmatpush1.xpose.msra.mxu0 %v2002
        %2004 = vmatprep.subr.mxu0 0.0
        %v2005 = vand.u32 %v950, 4294901760
        %v2006 = vsub.f32 %v950, %v2005
        %v2007 = vand.u32 %v2006, 4294901760
        %v2008 = vsub.f32 %v2006, %v2007
        %v2009 = vand.u32 %v2008, 4294901760
        %2010 = vmatpush1.xpose.msra.mxu0 %v2009
        %2011 = vmatprep.subr.mxu0 0.0
        %v2012 = vand.u32 %v951, 4294901760
        %v2013 = vsub.f32 %v951, %v2012
        %v2014 = vand.u32 %v2013, 4294901760
        %v2015 = vsub.f32 %v2013, %v2014
        %v2016 = vand.u32 %v2015, 4294901760
        %2017 = vmatpush1.xpose.msra.mxu0 %v2016
        %2018 = vmatprep.subr.mxu0 0.0
        %2019 = vmatpush1.xpose.msra.mxu0 0.0
        %2020 = vmatprep.subr.mxu0 0.0
        %2021 = vmatpush1.xpose.msra.mxu0 0.0
        %2022 = vmatprep.subr.mxu0 0.0
        %2023 = vmatpush1.xpose.msra.mxu0 0.0
        %2024 = vmatprep.subr.mxu0 0.0
        %2025 = vmatpush1.xpose.msra.mxu0 0.0
        %2026 = vmatprep.subr.mxu0 0.0
        %2027 = vmatpush1.xpose.msra.mxu0 0.0
        %2028 = vmatprep.subr.mxu0 0.0
        %2029 = vmatpush1.xpose.msra.mxu0 0.0
        %2030 = vmatprep.subr.mxu0 0.0
        %2031 = vmatpush1.xpose.msra.mxu0 0.0
        %2032 = vmatprep.subr.mxu0 0.0
        %2033 = vmatpush1.xpose.msra.mxu0 0.0
        %2034 = vmatprep.subr.mxu0 0.0
        %2035 = vmatpush1.xpose.msra.mxu0 0.0
        %2036 = vmatprep.subr.mxu0 0.0
        %2037 = vmatpush1.xpose.msra.mxu0 0.0
        %2038 = vmatprep.subr.mxu0 0.0
        %2039 = vmatpush1.xpose.msra.mxu0 0.0
        %2040 = vmatprep.subr.mxu0 0.0
        %2041 = vmatpush1.xpose.msra.mxu0 0.0
        %2042 = vmatprep.subr.mxu0 0.0
        %2043 = vmatpush1.xpose.msra.mxu0 0.0
        %2044 = vmatprep.subr.mxu0 0.0
        %2045 = vmatpush1.xpose.msra.mxu0 0.0
        %2046 = vmatprep.subr.mxu0 0.0
        %2047 = vmatpush1.xpose.msra.mxu0 0.0
        %2048 = vmatprep.subr.mxu0 0.0
        %2049 = vmatpush1.xpose.msra.mxu0 0.0
        %2050 = vmatprep.subr.mxu0 0.0
        %2051 = vmatpush1.xpose.msra.mxu0 0.0
        %2052 = vmatprep.subr.mxu0 0.0
        %2053 = vmatpush1.xpose.msra.mxu0 0.0
        %2054 = vmatprep.subr.mxu0 0.0
        %2055 = vmatpush1.xpose.msra.mxu0 0.0
        %2056 = vmatprep.subr.mxu0 0.0
        %2057 = vmatpush1.xpose.msra.mxu0 0.0
        %2058 = vmatprep.subr.mxu0 0.0
        %2059 = vmatpush1.xpose.msra.mxu0 0.0
        %2060 = vmatprep.subr.mxu0 0.0
        %2061 = vmatpush1.xpose.msra.mxu0 0.0
        %2062 = vmatprep.subr.mxu0 0.0
        %2063 = vmatpush1.xpose.msra.mxu0 0.0
        %2064 = vmatprep.subr.mxu0 0.0
        %2065 = vmatpush1.xpose.msra.mxu0 0.0
        %2066 = vmatprep.subr.mxu0 0.0
        %2067 = vmatpush1.xpose.msra.mxu0 0.0
        %2068 = vmatprep.subr.mxu0 0.0
        %2069 = vmatpush1.xpose.msra.mxu0 0.0
        %2070 = vmatprep.subr.mxu0 0.0
        %2071 = vmatpush1.xpose.msra.mxu0 0.0
        %2072 = vmatprep.subr.mxu0 0.0
        %2073 = vmatpush1.xpose.msra.mxu0 0.0
        %2074 = vmatprep.mubr.f32.mxu0 0.0
        %2075 = vmatmul.mubr.f32.gmra.mrb[0].mxu0 1.0
        %v2076 = vpop.f32.mrb[0].mxu0
        %v2077 = vadd.f32 %v1987, %v2076
        %v2078 = vpop.f32.mrb[0].mxu0
        %2079 = vdwg.mxu0
        %2080 = vmatprep.subr.mxu0 0.0
        %v2081 = vand.u32 %v948, 4294901760
        %v2082 = vsub.f32 %v948, %v2081
        %2083 = vmatpush1.xpose.msra.mxu0 %v2082
        %2084 = vmatprep.subr.mxu0 0.0
        %v2085 = vand.u32 %v949, 4294901760
        %v2086 = vsub.f32 %v949, %v2085
        %2087 = vmatpush1.xpose.msra.mxu0 %v2086
        %2088 = vmatprep.subr.mxu0 0.0
        %v2089 = vand.u32 %v950, 4294901760
        %v2090 = vsub.f32 %v950, %v2089
        %2091 = vmatpush1.xpose.msra.mxu0 %v2090
        %2092 = vmatprep.subr.mxu0 0.0
        %v2093 = vand.u32 %v951, 4294901760
        %v2094 = vsub.f32 %v951, %v2093
        %2095 = vmatpush1.xpose.msra.mxu0 %v2094
        %2096 = vmatprep.subr.mxu0 0.0
        %2097 = vmatpush1.xpose.msra.mxu0 0.0
        %2098 = vmatprep.subr.mxu0 0.0
        %2099 = vmatpush1.xpose.msra.mxu0 0.0
        %2100 = vmatprep.subr.mxu0 0.0
        %2101 = vmatpush1.xpose.msra.mxu0 0.0
        %2102 = vmatprep.subr.mxu0 0.0
        %2103 = vmatpush1.xpose.msra.mxu0 0.0
        %2104 = vmatprep.subr.mxu0 0.0
        %2105 = vmatpush1.xpose.msra.mxu0 0.0
        %2106 = vmatprep.subr.mxu0 0.0
        %2107 = vmatpush1.xpose.msra.mxu0 0.0
        %2108 = vmatprep.subr.mxu0 0.0
        %2109 = vmatpush1.xpose.msra.mxu0 0.0
        %2110 = vmatprep.subr.mxu0 0.0
        %2111 = vmatpush1.xpose.msra.mxu0 0.0
        %2112 = vmatprep.subr.mxu0 0.0
        %2113 = vmatpush1.xpose.msra.mxu0 0.0
        %2114 = vmatprep.subr.mxu0 0.0
        %2115 = vmatpush1.xpose.msra.mxu0 0.0
        %2116 = vmatprep.subr.mxu0 0.0
        %2117 = vmatpush1.xpose.msra.mxu0 0.0
        %2118 = vmatprep.subr.mxu0 0.0
        %2119 = vmatpush1.xpose.msra.mxu0 0.0
        %2120 = vmatprep.subr.mxu0 0.0
        %2121 = vmatpush1.xpose.msra.mxu0 0.0
        %2122 = vmatprep.subr.mxu0 0.0
        %2123 = vmatpush1.xpose.msra.mxu0 0.0
        %2124 = vmatprep.subr.mxu0 0.0
        %2125 = vmatpush1.xpose.msra.mxu0 0.0
        %2126 = vmatprep.subr.mxu0 0.0
        %2127 = vmatpush1.xpose.msra.mxu0 0.0
        %2128 = vmatprep.subr.mxu0 0.0
        %2129 = vmatpush1.xpose.msra.mxu0 0.0
        %2130 = vmatprep.subr.mxu0 0.0
        %2131 = vmatpush1.xpose.msra.mxu0 0.0
        %2132 = vmatprep.subr.mxu0 0.0
        %2133 = vmatpush1.xpose.msra.mxu0 0.0
        %2134 = vmatprep.subr.mxu0 0.0
        %2135 = vmatpush1.xpose.msra.mxu0 0.0
        %2136 = vmatprep.subr.mxu0 0.0
        %2137 = vmatpush1.xpose.msra.mxu0 0.0
        %2138 = vmatprep.subr.mxu0 0.0
        %2139 = vmatpush1.xpose.msra.mxu0 0.0
        %2140 = vmatprep.subr.mxu0 0.0
        %2141 = vmatpush1.xpose.msra.mxu0 0.0
        %2142 = vmatprep.subr.mxu0 0.0
        %2143 = vmatpush1.xpose.msra.mxu0 0.0
        %2144 = vmatprep.subr.mxu0 0.0
        %2145 = vmatpush1.xpose.msra.mxu0 0.0
        %2146 = vmatprep.subr.mxu0 0.0
        %2147 = vmatpush1.xpose.msra.mxu0 0.0
        %2148 = vmatprep.subr.mxu0 0.0
        %2149 = vmatpush1.xpose.msra.mxu0 0.0
        %2150 = vmatprep.subr.mxu0 0.0
        %2151 = vmatpush1.xpose.msra.mxu0 0.0
        %2152 = vmatprep.mubr.f32.mxu0 0.0
        %2153 = vmatmul.mubr.f32.gmra.mrb[0].mxu0 0.0
        %v2154 = vpop.f32.mrb[0].mxu0
        %v2155 = vadd.f32 %v2077, %v2154
        %v2156 = vpop.f32.mrb[0].mxu0
        %2157 = vdwg.mxu0
        %2158 = vmatprep.subr.mxu0 0.0
        %v2159 = vand.u32 %v948, 4294901760
        %2160 = vmatpush1.xpose.msra.mxu0 %v2159
        %2161 = vmatprep.subr.mxu0 0.0
        %v2162 = vand.u32 %v949, 4294901760
        %2163 = vmatpush1.xpose.msra.mxu0 %v2162
        %2164 = vmatprep.subr.mxu0 0.0
        %v2165 = vand.u32 %v950, 4294901760
        %2166 = vmatpush1.xpose.msra.mxu0 %v2165
        %2167 = vmatprep.subr.mxu0 0.0
        %v2168 = vand.u32 %v951, 4294901760
        %2169 = vmatpush1.xpose.msra.mxu0 %v2168
        %2170 = vmatprep.subr.mxu0 0.0
        %2171 = vmatpush1.xpose.msra.mxu0 0.0
        %2172 = vmatprep.subr.mxu0 0.0
        %2173 = vmatpush1.xpose.msra.mxu0 0.0
        %2174 = vmatprep.subr.mxu0 0.0
        %2175 = vmatpush1.xpose.msra.mxu0 0.0
        %2176 = vmatprep.subr.mxu0 0.0
        %2177 = vmatpush1.xpose.msra.mxu0 0.0
        %2178 = vmatprep.subr.mxu0 0.0
        %2179 = vmatpush1.xpose.msra.mxu0 0.0
        %2180 = vmatprep.subr.mxu0 0.0
        %2181 = vmatpush1.xpose.msra.mxu0 0.0
        %2182 = vmatprep.subr.mxu0 0.0
        %2183 = vmatpush1.xpose.msra.mxu0 0.0
        %2184 = vmatprep.subr.mxu0 0.0
        %2185 = vmatpush1.xpose.msra.mxu0 0.0
        %2186 = vmatprep.subr.mxu0 0.0
        %2187 = vmatpush1.xpose.msra.mxu0 0.0
        %2188 = vmatprep.subr.mxu0 0.0
        %2189 = vmatpush1.xpose.msra.mxu0 0.0
        %2190 = vmatprep.subr.mxu0 0.0
        %2191 = vmatpush1.xpose.msra.mxu0 0.0
        %2192 = vmatprep.subr.mxu0 0.0
        %2193 = vmatpush1.xpose.msra.mxu0 0.0
        %2194 = vmatprep.subr.mxu0 0.0
        %2195 = vmatpush1.xpose.msra.mxu0 0.0
        %2196 = vmatprep.subr.mxu0 0.0
        %2197 = vmatpush1.xpose.msra.mxu0 0.0
        %2198 = vmatprep.subr.mxu0 0.0
        %2199 = vmatpush1.xpose.msra.mxu0 0.0
        %2200 = vmatprep.subr.mxu0 0.0
        %2201 = vmatpush1.xpose.msra.mxu0 0.0
        %2202 = vmatprep.subr.mxu0 0.0
        %2203 = vmatpush1.xpose.msra.mxu0 0.0
        %2204 = vmatprep.subr.mxu0 0.0
        %2205 = vmatpush1.xpose.msra.mxu0 0.0
        %2206 = vmatprep.subr.mxu0 0.0
        %2207 = vmatpush1.xpose.msra.mxu0 0.0
        %2208 = vmatprep.subr.mxu0 0.0
        %2209 = vmatpush1.xpose.msra.mxu0 0.0
        %2210 = vmatprep.subr.mxu0 0.0
        %2211 = vmatpush1.xpose.msra.mxu0 0.0
        %2212 = vmatprep.subr.mxu0 0.0
        %2213 = vmatpush1.xpose.msra.mxu0 0.0
        %2214 = vmatprep.subr.mxu0 0.0
        %2215 = vmatpush1.xpose.msra.mxu0 0.0
        %2216 = vmatprep.subr.mxu0 0.0
        %2217 = vmatpush1.xpose.msra.mxu0 0.0
        %2218 = vmatprep.subr.mxu0 0.0
        %2219 = vmatpush1.xpose.msra.mxu0 0.0
        %2220 = vmatprep.subr.mxu0 0.0
        %2221 = vmatpush1.xpose.msra.mxu0 0.0
        %2222 = vmatprep.subr.mxu0 0.0
        %2223 = vmatpush1.xpose.msra.mxu0 0.0
        %2224 = vmatprep.subr.mxu0 0.0
        %2225 = vmatpush1.xpose.msra.mxu0 0.0
        %2226 = vmatprep.mubr.f32.mxu0 0.0
        %2227 = vmatmul.mubr.f32.gmra.mrb[0].mxu0 0.0
        %v2228 = vpop.f32.mrb[0].mxu0
        %v2229 = vadd.f32 %v2155, %v2228
        %v2230 = vpop.f32.mrb[0].mxu0
        %2231 = vdwg.mxu0
        %2232 = vmatprep.subr.mxu0 0.0
        %v2233 = vand.u32 %v948, 4294901760
        %v2234 = vsub.f32 %v948, %v2233
        %v2235 = vand.u32 %v2234, 4294901760
        %2236 = vmatpush1.xpose.msra.mxu0 %v2235
        %2237 = vmatprep.subr.mxu0 0.0
        %v2238 = vand.u32 %v949, 4294901760
        %v2239 = vsub.f32 %v949, %v2238
        %v2240 = vand.u32 %v2239, 4294901760
        %2241 = vmatpush1.xpose.msra.mxu0 %v2240
        %2242 = vmatprep.subr.mxu0 0.0
        %v2243 = vand.u32 %v950, 4294901760
        %v2244 = vsub.f32 %v950, %v2243
        %v2245 = vand.u32 %v2244, 4294901760
        %2246 = vmatpush1.xpose.msra.mxu0 %v2245
        %2247 = vmatprep.subr.mxu0 0.0
        %v2248 = vand.u32 %v951, 4294901760
        %v2249 = vsub.f32 %v951, %v2248
        %v2250 = vand.u32 %v2249, 4294901760
        %2251 = vmatpush1.xpose.msra.mxu0 %v2250
        %2252 = vmatprep.subr.mxu0 0.0
        %2253 = vmatpush1.xpose.msra.mxu0 0.0
        %2254 = vmatprep.subr.mxu0 0.0
        %2255 = vmatpush1.xpose.msra.mxu0 0.0
        %2256 = vmatprep.subr.mxu0 0.0
        %2257 = vmatpush1.xpose.msra.mxu0 0.0
        %2258 = vmatprep.subr.mxu0 0.0
        %2259 = vmatpush1.xpose.msra.mxu0 0.0
        %2260 = vmatprep.subr.mxu0 0.0
        %2261 = vmatpush1.xpose.msra.mxu0 0.0
        %2262 = vmatprep.subr.mxu0 0.0
        %2263 = vmatpush1.xpose.msra.mxu0 0.0
        %2264 = vmatprep.subr.mxu0 0.0
        %2265 = vmatpush1.xpose.msra.mxu0 0.0
        %2266 = vmatprep.subr.mxu0 0.0
        %2267 = vmatpush1.xpose.msra.mxu0 0.0
        %2268 = vmatprep.subr.mxu0 0.0
        %2269 = vmatpush1.xpose.msra.mxu0 0.0
        %2270 = vmatprep.subr.mxu0 0.0
        %2271 = vmatpush1.xpose.msra.mxu0 0.0
        %2272 = vmatprep.subr.mxu0 0.0
        %2273 = vmatpush1.xpose.msra.mxu0 0.0
        %2274 = vmatprep.subr.mxu0 0.0
        %2275 = vmatpush1.xpose.msra.mxu0 0.0
        %2276 = vmatprep.subr.mxu0 0.0
        %2277 = vmatpush1.xpose.msra.mxu0 0.0
        %2278 = vmatprep.subr.mxu0 0.0
        %2279 = vmatpush1.xpose.msra.mxu0 0.0
        %2280 = vmatprep.subr.mxu0 0.0
        %2281 = vmatpush1.xpose.msra.mxu0 0.0
        %2282 = vmatprep.subr.mxu0 0.0
        %2283 = vmatpush1.xpose.msra.mxu0 0.0
        %2284 = vmatprep.subr.mxu0 0.0
        %2285 = vmatpush1.xpose.msra.mxu0 0.0
        %2286 = vmatprep.subr.mxu0 0.0
        %2287 = vmatpush1.xpose.msra.mxu0 0.0
        %2288 = vmatprep.subr.mxu0 0.0
        %2289 = vmatpush1.xpose.msra.mxu0 0.0
        %2290 = vmatprep.subr.mxu0 0.0
        %2291 = vmatpush1.xpose.msra.mxu0 0.0
        %2292 = vmatprep.subr.mxu0 0.0
        %2293 = vmatpush1.xpose.msra.mxu0 0.0
        %2294 = vmatprep.subr.mxu0 0.0
        %2295 = vmatpush1.xpose.msra.mxu0 0.0
        %2296 = vmatprep.subr.mxu0 0.0
        %2297 = vmatpush1.xpose.msra.mxu0 0.0
        %2298 = vmatprep.subr.mxu0 0.0
        %2299 = vmatpush1.xpose.msra.mxu0 0.0
        %2300 = vmatprep.subr.mxu0 0.0
        %2301 = vmatpush1.xpose.msra.mxu0 0.0
        %2302 = vmatprep.subr.mxu0 0.0
        %2303 = vmatpush1.xpose.msra.mxu0 0.0
        %2304 = vmatprep.subr.mxu0 0.0
        %2305 = vmatpush1.xpose.msra.mxu0 0.0
        %2306 = vmatprep.subr.mxu0 0.0
        %2307 = vmatpush1.xpose.msra.mxu0 0.0
        %2308 = vmatprep.mubr.f32.mxu0 0.0
        %2309 = vmatmul.mubr.f32.gmra.mrb[0].mxu0 1.0
        %v2310 = vpop.f32.mrb[0].mxu0
        %v2311 = vadd.f32 %v2229, %v2310
        %v2312 = vpop.f32.mrb[0].mxu0
        %2313 = vdwg.mxu0
        %2314 = vmatprep.subr.mxu0 0.0
        %v2315 = vand.u32 %v948, 4294901760
        %2316 = vmatpush1.xpose.msra.mxu0 %v2315
        %2317 = vmatprep.subr.mxu0 0.0
        %v2318 = vand.u32 %v949, 4294901760
        %2319 = vmatpush1.xpose.msra.mxu0 %v2318
        %2320 = vmatprep.subr.mxu0 0.0
        %v2321 = vand.u32 %v950, 4294901760
        %2322 = vmatpush1.xpose.msra.mxu0 %v2321
        %2323 = vmatprep.subr.mxu0 0.0
        %v2324 = vand.u32 %v951, 4294901760
        %2325 = vmatpush1.xpose.msra.mxu0 %v2324
        %2326 = vmatprep.subr.mxu0 0.0
        %2327 = vmatpush1.xpose.msra.mxu0 0.0
        %2328 = vmatprep.subr.mxu0 0.0
        %2329 = vmatpush1.xpose.msra.mxu0 0.0
        %2330 = vmatprep.subr.mxu0 0.0
        %2331 = vmatpush1.xpose.msra.mxu0 0.0
        %2332 = vmatprep.subr.mxu0 0.0
        %2333 = vmatpush1.xpose.msra.mxu0 0.0
        %2334 = vmatprep.subr.mxu0 0.0
        %2335 = vmatpush1.xpose.msra.mxu0 0.0
        %2336 = vmatprep.subr.mxu0 0.0
        %2337 = vmatpush1.xpose.msra.mxu0 0.0
        %2338 = vmatprep.subr.mxu0 0.0
        %2339 = vmatpush1.xpose.msra.mxu0 0.0
        %2340 = vmatprep.subr.mxu0 0.0
        %2341 = vmatpush1.xpose.msra.mxu0 0.0
        %2342 = vmatprep.subr.mxu0 0.0
        %2343 = vmatpush1.xpose.msra.mxu0 0.0
        %2344 = vmatprep.subr.mxu0 0.0
        %2345 = vmatpush1.xpose.msra.mxu0 0.0
        %2346 = vmatprep.subr.mxu0 0.0
        %2347 = vmatpush1.xpose.msra.mxu0 0.0
        %2348 = vmatprep.subr.mxu0 0.0
        %2349 = vmatpush1.xpose.msra.mxu0 0.0
        %2350 = vmatprep.subr.mxu0 0.0
        %2351 = vmatpush1.xpose.msra.mxu0 0.0
        %2352 = vmatprep.subr.mxu0 0.0
        %2353 = vmatpush1.xpose.msra.mxu0 0.0
        %2354 = vmatprep.subr.mxu0 0.0
        %2355 = vmatpush1.xpose.msra.mxu0 0.0
        %2356 = vmatprep.subr.mxu0 0.0
        %2357 = vmatpush1.xpose.msra.mxu0 0.0
        %2358 = vmatprep.subr.mxu0 0.0
        %2359 = vmatpush1.xpose.msra.mxu0 0.0
        %2360 = vmatprep.subr.mxu0 0.0
        %2361 = vmatpush1.xpose.msra.mxu0 0.0
        %2362 = vmatprep.subr.mxu0 0.0
        %2363 = vmatpush1.xpose.msra.mxu0 0.0
        %2364 = vmatprep.subr.mxu0 0.0
        %2365 = vmatpush1.xpose.msra.mxu0 0.0
        %2366 = vmatprep.subr.mxu0 0.0
        %2367 = vmatpush1.xpose.msra.mxu0 0.0
        %2368 = vmatprep.subr.mxu0 0.0
        %2369 = vmatpush1.xpose.msra.mxu0 0.0
        %2370 = vmatprep.subr.mxu0 0.0
        %2371 = vmatpush1.xpose.msra.mxu0 0.0
        %2372 = vmatprep.subr.mxu0 0.0
        %2373 = vmatpush1.xpose.msra.mxu0 0.0
        %2374 = vmatprep.subr.mxu0 0.0
        %2375 = vmatpush1.xpose.msra.mxu0 0.0
        %2376 = vmatprep.subr.mxu0 0.0
        %2377 = vmatpush1.xpose.msra.mxu0 0.0
        %2378 = vmatprep.subr.mxu0 0.0
        %2379 = vmatpush1.xpose.msra.mxu0 0.0
        %2380 = vmatprep.subr.mxu0 0.0
        %2381 = vmatpush1.xpose.msra.mxu0 0.0
        %2382 = vmatprep.mubr.f32.mxu0 0.0
        %2383 = vmatmul.mubr.f32.gmra.mrb[0].mxu0 1.0
        %v2384 = vpop.f32.mrb[0].mxu0
        %v2385 = vadd.f32 %v2311, %v2384
        %v2386 = vpop.f32.mrb[0].mxu0
        %2387 = vdwg.mxu0
        %2388 = vmatprep.subr.mxu0 0.0
        %v2389 = vand.u32 %v952, 4294901760
        %2390 = vmatpush1.xpose.msra.mxu0 %v2389
        %2391 = vmatprep.subr.mxu0 0.0
        %v2392 = vand.u32 %v953, 4294901760
        %2393 = vmatpush1.xpose.msra.mxu0 %v2392
        %2394 = vmatprep.subr.mxu0 0.0
        %v2395 = vand.u32 %v954, 4294901760
        %2396 = vmatpush1.xpose.msra.mxu0 %v2395
        %2397 = vmatprep.subr.mxu0 0.0
        %v2398 = vand.u32 %v955, 4294901760
        %2399 = vmatpush1.xpose.msra.mxu0 %v2398
        %2400 = vmatprep.subr.mxu0 0.0
        %2401 = vmatpush1.xpose.msra.mxu0 0.0
        %2402 = vmatprep.subr.mxu0 0.0
        %2403 = vmatpush1.xpose.msra.mxu0 0.0
        %2404 = vmatprep.subr.mxu0 0.0
        %2405 = vmatpush1.xpose.msra.mxu0 0.0
        %2406 = vmatprep.subr.mxu0 0.0
        %2407 = vmatpush1.xpose.msra.mxu0 0.0
        %2408 = vmatprep.subr.mxu0 0.0
        %2409 = vmatpush1.xpose.msra.mxu0 0.0
        %2410 = vmatprep.subr.mxu0 0.0
        %2411 = vmatpush1.xpose.msra.mxu0 0.0
        %2412 = vmatprep.subr.mxu0 0.0
        %2413 = vmatpush1.xpose.msra.mxu0 0.0
        %2414 = vmatprep.subr.mxu0 0.0
        %2415 = vmatpush1.xpose.msra.mxu0 0.0
        %2416 = vmatprep.subr.mxu0 0.0
        %2417 = vmatpush1.xpose.msra.mxu0 0.0
        %2418 = vmatprep.subr.mxu0 0.0
        %2419 = vmatpush1.xpose.msra.mxu0 0.0
        %2420 = vmatprep.subr.mxu0 0.0
        %2421 = vmatpush1.xpose.msra.mxu0 0.0
        %2422 = vmatprep.subr.mxu0 0.0
        %2423 = vmatpush1.xpose.msra.mxu0 0.0
        %2424 = vmatprep.subr.mxu0 0.0
        %2425 = vmatpush1.xpose.msra.mxu0 0.0
        %2426 = vmatprep.subr.mxu0 0.0
        %2427 = vmatpush1.xpose.msra.mxu0 0.0
        %2428 = vmatprep.subr.mxu0 0.0
        %2429 = vmatpush1.xpose.msra.mxu0 0.0
        %2430 = vmatprep.subr.mxu0 0.0
        %2431 = vmatpush1.xpose.msra.mxu0 0.0
        %2432 = vmatprep.subr.mxu0 0.0
        %2433 = vmatpush1.xpose.msra.mxu0 0.0
        %2434 = vmatprep.subr.mxu0 0.0
        %2435 = vmatpush1.xpose.msra.mxu0 0.0
        %2436 = vmatprep.subr.mxu0 0.0
        %2437 = vmatpush1.xpose.msra.mxu0 0.0
        %2438 = vmatprep.subr.mxu0 0.0
        %2439 = vmatpush1.xpose.msra.mxu0 0.0
        %2440 = vmatprep.subr.mxu0 0.0
        %2441 = vmatpush1.xpose.msra.mxu0 0.0
        %2442 = vmatprep.subr.mxu0 0.0
        %2443 = vmatpush1.xpose.msra.mxu0 0.0
        %2444 = vmatprep.subr.mxu0 0.0
        %2445 = vmatpush1.xpose.msra.mxu0 0.0
        %2446 = vmatprep.subr.mxu0 0.0
        %2447 = vmatpush1.xpose.msra.mxu0 0.0
        %2448 = vmatprep.subr.mxu0 0.0
        %2449 = vmatpush1.xpose.msra.mxu0 0.0
        %2450 = vmatprep.subr.mxu0 0.0
        %2451 = vmatpush1.xpose.msra.mxu0 0.0
        %2452 = vmatprep.subr.mxu0 0.0
        %2453 = vmatpush1.xpose.msra.mxu0 0.0
        %2454 = vmatprep.subr.mxu0 0.0
        %2455 = vmatpush1.xpose.msra.mxu0 0.0
        %2456 = vmatprep.mubr.f32.mxu0 0.0
        %2457 = vmatmul.mubr.f32.gmra.mrb[0].mxu0 0.0
        %v2458 = vpop.f32.mrb[0].mxu0
        %v2459 = vadd.f32 0.0, %v2458
        %v2460 = vpop.f32.mrb[0].mxu0
        %2461 = vdwg.mxu0
        %2462 = vmatprep.subr.mxu0 0.0
        %v2463 = vand.u32 %v952, 4294901760
        %v2464 = vsub.f32 %v952, %v2463
        %v2465 = vand.u32 %v2464, 4294901760
        %v2466 = vsub.f32 %v2464, %v2465
        %v2467 = vand.u32 %v2466, 4294901760
        %2468 = vmatpush1.xpose.msra.mxu0 %v2467
        %2469 = vmatprep.subr.mxu0 0.0
        %v2470 = vand.u32 %v953, 4294901760
        %v2471 = vsub.f32 %v953, %v2470
        %v2472 = vand.u32 %v2471, 4294901760
        %v2473 = vsub.f32 %v2471, %v2472
        %v2474 = vand.u32 %v2473, 4294901760
        %2475 = vmatpush1.xpose.msra.mxu0 %v2474
        %2476 = vmatprep.subr.mxu0 0.0
        %v2477 = vand.u32 %v954, 4294901760
        %v2478 = vsub.f32 %v954, %v2477
        %v2479 = vand.u32 %v2478, 4294901760
        %v2480 = vsub.f32 %v2478, %v2479
        %v2481 = vand.u32 %v2480, 4294901760
        %2482 = vmatpush1.xpose.msra.mxu0 %v2481
        %2483 = vmatprep.subr.mxu0 0.0
        %v2484 = vand.u32 %v955, 4294901760
        %v2485 = vsub.f32 %v955, %v2484
        %v2486 = vand.u32 %v2485, 4294901760
        %v2487 = vsub.f32 %v2485, %v2486
        %v2488 = vand.u32 %v2487, 4294901760
        %2489 = vmatpush1.xpose.msra.mxu0 %v2488
        %2490 = vmatprep.subr.mxu0 0.0
        %2491 = vmatpush1.xpose.msra.mxu0 0.0
        %2492 = vmatprep.subr.mxu0 0.0
        %2493 = vmatpush1.xpose.msra.mxu0 0.0
        %2494 = vmatprep.subr.mxu0 0.0
        %2495 = vmatpush1.xpose.msra.mxu0 0.0
        %2496 = vmatprep.subr.mxu0 0.0
        %2497 = vmatpush1.xpose.msra.mxu0 0.0
        %2498 = vmatprep.subr.mxu0 0.0
        %2499 = vmatpush1.xpose.msra.mxu0 0.0
        %2500 = vmatprep.subr.mxu0 0.0
        %2501 = vmatpush1.xpose.msra.mxu0 0.0
        %2502 = vmatprep.subr.mxu0 0.0
        %2503 = vmatpush1.xpose.msra.mxu0 0.0
        %2504 = vmatprep.subr.mxu0 0.0
        %2505 = vmatpush1.xpose.msra.mxu0 0.0
        %2506 = vmatprep.subr.mxu0 0.0
        %2507 = vmatpush1.xpose.msra.mxu0 0.0
        %2508 = vmatprep.subr.mxu0 0.0
        %2509 = vmatpush1.xpose.msra.mxu0 0.0
        %2510 = vmatprep.subr.mxu0 0.0
        %2511 = vmatpush1.xpose.msra.mxu0 0.0
        %2512 = vmatprep.subr.mxu0 0.0
        %2513 = vmatpush1.xpose.msra.mxu0 0.0
        %2514 = vmatprep.subr.mxu0 0.0
        %2515 = vmatpush1.xpose.msra.mxu0 0.0
        %2516 = vmatprep.subr.mxu0 0.0
        %2517 = vmatpush1.xpose.msra.mxu0 0.0
        %2518 = vmatprep.subr.mxu0 0.0
        %2519 = vmatpush1.xpose.msra.mxu0 0.0
        %2520 = vmatprep.subr.mxu0 0.0
        %2521 = vmatpush1.xpose.msra.mxu0 0.0
        %2522 = vmatprep.subr.mxu0 0.0
        %2523 = vmatpush1.xpose.msra.mxu0 0.0
        %2524 = vmatprep.subr.mxu0 0.0
        %2525 = vmatpush1.xpose.msra.mxu0 0.0
        %2526 = vmatprep.subr.mxu0 0.0
        %2527 = vmatpush1.xpose.msra.mxu0 0.0
        %2528 = vmatprep.subr.mxu0 0.0
        %2529 = vmatpush1.xpose.msra.mxu0 0.0
        %2530 = vmatprep.subr.mxu0 0.0
        %2531 = vmatpush1.xpose.msra.mxu0 0.0
        %2532 = vmatprep.subr.mxu0 0.0
        %2533 = vmatpush1.xpose.msra.mxu0 0.0
        %2534 = vmatprep.subr.mxu0 0.0
        %2535 = vmatpush1.xpose.msra.mxu0 0.0
        %2536 = vmatprep.subr.mxu0 0.0
        %2537 = vmatpush1.xpose.msra.mxu0 0.0
        %2538 = vmatprep.subr.mxu0 0.0
        %2539 = vmatpush1.xpose.msra.mxu0 0.0
        %2540 = vmatprep.subr.mxu0 0.0
        %2541 = vmatpush1.xpose.msra.mxu0 0.0
        %2542 = vmatprep.subr.mxu0 0.0
        %2543 = vmatpush1.xpose.msra.mxu0 0.0
        %2544 = vmatprep.subr.mxu0 0.0
        %2545 = vmatpush1.xpose.msra.mxu0 0.0
        %2546 = vmatprep.mubr.f32.mxu0 0.0
        %2547 = vmatmul.mubr.f32.gmra.mrb[0].mxu0 1.0
        %v2548 = vpop.f32.mrb[0].mxu0
        %v2549 = vadd.f32 %v2459, %v2548
        %v2550 = vpop.f32.mrb[0].mxu0
        %2551 = vdwg.mxu0
        %2552 = vmatprep.subr.mxu0 0.0
        %v2553 = vand.u32 %v952, 4294901760
        %v2554 = vsub.f32 %v952, %v2553
        %2555 = vmatpush1.xpose.msra.mxu0 %v2554
        %2556 = vmatprep.subr.mxu0 0.0
        %v2557 = vand.u32 %v953, 4294901760
        %v2558 = vsub.f32 %v953, %v2557
        %2559 = vmatpush1.xpose.msra.mxu0 %v2558
        %2560 = vmatprep.subr.mxu0 0.0
        %v2561 = vand.u32 %v954, 4294901760
        %v2562 = vsub.f32 %v954, %v2561
        %2563 = vmatpush1.xpose.msra.mxu0 %v2562
        %2564 = vmatprep.subr.mxu0 0.0
        %v2565 = vand.u32 %v955, 4294901760
        %v2566 = vsub.f32 %v955, %v2565
        %2567 = vmatpush1.xpose.msra.mxu0 %v2566
        %2568 = vmatprep.subr.mxu0 0.0
        %2569 = vmatpush1.xpose.msra.mxu0 0.0
        %2570 = vmatprep.subr.mxu0 0.0
        %2571 = vmatpush1.xpose.msra.mxu0 0.0
        %2572 = vmatprep.subr.mxu0 0.0
        %2573 = vmatpush1.xpose.msra.mxu0 0.0
        %2574 = vmatprep.subr.mxu0 0.0
        %2575 = vmatpush1.xpose.msra.mxu0 0.0
        %2576 = vmatprep.subr.mxu0 0.0
        %2577 = vmatpush1.xpose.msra.mxu0 0.0
        %2578 = vmatprep.subr.mxu0 0.0
        %2579 = vmatpush1.xpose.msra.mxu0 0.0
        %2580 = vmatprep.subr.mxu0 0.0
        %2581 = vmatpush1.xpose.msra.mxu0 0.0
        %2582 = vmatprep.subr.mxu0 0.0
        %2583 = vmatpush1.xpose.msra.mxu0 0.0
        %2584 = vmatprep.subr.mxu0 0.0
        %2585 = vmatpush1.xpose.msra.mxu0 0.0
        %2586 = vmatprep.subr.mxu0 0.0
        %2587 = vmatpush1.xpose.msra.mxu0 0.0
        %2588 = vmatprep.subr.mxu0 0.0
        %2589 = vmatpush1.xpose.msra.mxu0 0.0
        %2590 = vmatprep.subr.mxu0 0.0
        %2591 = vmatpush1.xpose.msra.mxu0 0.0
        %2592 = vmatprep.subr.mxu0 0.0
        %2593 = vmatpush1.xpose.msra.mxu0 0.0
        %2594 = vmatprep.subr.mxu0 0.0
        %2595 = vmatpush1.xpose.msra.mxu0 0.0
        %2596 = vmatprep.subr.mxu0 0.0
        %2597 = vmatpush1.xpose.msra.mxu0 0.0
        %2598 = vmatprep.subr.mxu0 0.0
        %2599 = vmatpush1.xpose.msra.mxu0 0.0
        %2600 = vmatprep.subr.mxu0 0.0
        %2601 = vmatpush1.xpose.msra.mxu0 0.0
        %2602 = vmatprep.subr.mxu0 0.0
        %2603 = vmatpush1.xpose.msra.mxu0 0.0
        %2604 = vmatprep.subr.mxu0 0.0
        %2605 = vmatpush1.xpose.msra.mxu0 0.0
        %2606 = vmatprep.subr.mxu0 0.0
        %2607 = vmatpush1.xpose.msra.mxu0 0.0
        %2608 = vmatprep.subr.mxu0 0.0
        %2609 = vmatpush1.xpose.msra.mxu0 0.0
        %2610 = vmatprep.subr.mxu0 0.0
        %2611 = vmatpush1.xpose.msra.mxu0 0.0
        %2612 = vmatprep.subr.mxu0 0.0
        %2613 = vmatpush1.xpose.msra.mxu0 0.0
        %2614 = vmatprep.subr.mxu0 0.0
        %2615 = vmatpush1.xpose.msra.mxu0 0.0
        %2616 = vmatprep.subr.mxu0 0.0
        %2617 = vmatpush1.xpose.msra.mxu0 0.0
        %2618 = vmatprep.subr.mxu0 0.0
        %2619 = vmatpush1.xpose.msra.mxu0 0.0
        %2620 = vmatprep.subr.mxu0 0.0
        %2621 = vmatpush1.xpose.msra.mxu0 0.0
        %2622 = vmatprep.subr.mxu0 0.0
        %2623 = vmatpush1.xpose.msra.mxu0 0.0
        %2624 = vmatprep.mubr.f32.mxu0 0.0
        %2625 = vmatmul.mubr.f32.gmra.mrb[0].mxu0 0.0
        %v2626 = vpop.f32.mrb[0].mxu0
        %v2627 = vadd.f32 %v2549, %v2626
        %v2628 = vpop.f32.mrb[0].mxu0
        %2629 = vdwg.mxu0
        %2630 = vmatprep.subr.mxu0 0.0
        %v2631 = vand.u32 %v952, 4294901760
        %2632 = vmatpush1.xpose.msra.mxu0 %v2631
        %2633 = vmatprep.subr.mxu0 0.0
        %v2634 = vand.u32 %v953, 4294901760
        %2635 = vmatpush1.xpose.msra.mxu0 %v2634
        %2636 = vmatprep.subr.mxu0 0.0
        %v2637 = vand.u32 %v954, 4294901760
        %2638 = vmatpush1.xpose.msra.mxu0 %v2637
        %2639 = vmatprep.subr.mxu0 0.0
        %v2640 = vand.u32 %v955, 4294901760
        %2641 = vmatpush1.xpose.msra.mxu0 %v2640
        %2642 = vmatprep.subr.mxu0 0.0
        %2643 = vmatpush1.xpose.msra.mxu0 0.0
        %2644 = vmatprep.subr.mxu0 0.0
        %2645 = vmatpush1.xpose.msra.mxu0 0.0
        %2646 = vmatprep.subr.mxu0 0.0
        %2647 = vmatpush1.xpose.msra.mxu0 0.0
        %2648 = vmatprep.subr.mxu0 0.0
        %2649 = vmatpush1.xpose.msra.mxu0 0.0
        %2650 = vmatprep.subr.mxu0 0.0
        %2651 = vmatpush1.xpose.msra.mxu0 0.0
        %2652 = vmatprep.subr.mxu0 0.0
        %2653 = vmatpush1.xpose.msra.mxu0 0.0
        %2654 = vmatprep.subr.mxu0 0.0
        %2655 = vmatpush1.xpose.msra.mxu0 0.0
        %2656 = vmatprep.subr.mxu0 0.0
        %2657 = vmatpush1.xpose.msra.mxu0 0.0
        %2658 = vmatprep.subr.mxu0 0.0
        %2659 = vmatpush1.xpose.msra.mxu0 0.0
        %2660 = vmatprep.subr.mxu0 0.0
        %2661 = vmatpush1.xpose.msra.mxu0 0.0
        %2662 = vmatprep.subr.mxu0 0.0
        %2663 = vmatpush1.xpose.msra.mxu0 0.0
        %2664 = vmatprep.subr.mxu0 0.0
        %2665 = vmatpush1.xpose.msra.mxu0 0.0
        %2666 = vmatprep.subr.mxu0 0.0
        %2667 = vmatpush1.xpose.msra.mxu0 0.0
        %2668 = vmatprep.subr.mxu0 0.0
        %2669 = vmatpush1.xpose.msra.mxu0 0.0
        %2670 = vmatprep.subr.mxu0 0.0
        %2671 = vmatpush1.xpose.msra.mxu0 0.0
        %2672 = vmatprep.subr.mxu0 0.0
        %2673 = vmatpush1.xpose.msra.mxu0 0.0
        %2674 = vmatprep.subr.mxu0 0.0
        %2675 = vmatpush1.xpose.msra.mxu0 0.0
        %2676 = vmatprep.subr.mxu0 0.0
        %2677 = vmatpush1.xpose.msra.mxu0 0.0
        %2678 = vmatprep.subr.mxu0 0.0
        %2679 = vmatpush1.xpose.msra.mxu0 0.0
        %2680 = vmatprep.subr.mxu0 0.0
        %2681 = vmatpush1.xpose.msra.mxu0 0.0
        %2682 = vmatprep.subr.mxu0 0.0
        %2683 = vmatpush1.xpose.msra.mxu0 0.0
        %2684 = vmatprep.subr.mxu0 0.0
        %2685 = vmatpush1.xpose.msra.mxu0 0.0
        %2686 = vmatprep.subr.mxu0 0.0
        %2687 = vmatpush1.xpose.msra.mxu0 0.0
        %2688 = vmatprep.subr.mxu0 0.0
        %2689 = vmatpush1.xpose.msra.mxu0 0.0
        %2690 = vmatprep.subr.mxu0 0.0
        %2691 = vmatpush1.xpose.msra.mxu0 0.0
        %2692 = vmatprep.subr.mxu0 0.0
        %2693 = vmatpush1.xpose.msra.mxu0 0.0
        %2694 = vmatprep.subr.mxu0 0.0
        %2695 = vmatpush1.xpose.msra.mxu0 0.0
        %2696 = vmatprep.subr.mxu0 0.0
        %2697 = vmatpush1.xpose.msra.mxu0 0.0
        %2698 = vmatprep.mubr.f32.mxu0 0.0
        %2699 = vmatmul.mubr.f32.gmra.mrb[0].mxu0 0.0
        %v2700 = vpop.f32.mrb[0].mxu0
        %v2701 = vadd.f32 %v2627, %v2700
        %v2702 = vpop.f32.mrb[0].mxu0
        %2703 = vdwg.mxu0
        %2704 = vmatprep.subr.mxu0 0.0
        %v2705 = vand.u32 %v952, 4294901760
        %v2706 = vsub.f32 %v952, %v2705
        %v2707 = vand.u32 %v2706, 4294901760
        %2708 = vmatpush1.xpose.msra.mxu0 %v2707
        %2709 = vmatprep.subr.mxu0 0.0
        %v2710 = vand.u32 %v953, 4294901760
        %v2711 = vsub.f32 %v953, %v2710
        %v2712 = vand.u32 %v2711, 4294901760
        %2713 = vmatpush1.xpose.msra.mxu0 %v2712
        %2714 = vmatprep.subr.mxu0 0.0
        %v2715 = vand.u32 %v954, 4294901760
        %v2716 = vsub.f32 %v954, %v2715
        %v2717 = vand.u32 %v2716, 4294901760
        %2718 = vmatpush1.xpose.msra.mxu0 %v2717
        %2719 = vmatprep.subr.mxu0 0.0
        %v2720 = vand.u32 %v955, 4294901760
        %v2721 = vsub.f32 %v955, %v2720
        %v2722 = vand.u32 %v2721, 4294901760
        %2723 = vmatpush1.xpose.msra.mxu0 %v2722
        %2724 = vmatprep.subr.mxu0 0.0
        %2725 = vmatpush1.xpose.msra.mxu0 0.0
        %2726 = vmatprep.subr.mxu0 0.0
        %2727 = vmatpush1.xpose.msra.mxu0 0.0
        %2728 = vmatprep.subr.mxu0 0.0
        %2729 = vmatpush1.xpose.msra.mxu0 0.0
        %2730 = vmatprep.subr.mxu0 0.0
        %2731 = vmatpush1.xpose.msra.mxu0 0.0
        %2732 = vmatprep.subr.mxu0 0.0
        %2733 = vmatpush1.xpose.msra.mxu0 0.0
        %2734 = vmatprep.subr.mxu0 0.0
        %2735 = vmatpush1.xpose.msra.mxu0 0.0
        %2736 = vmatprep.subr.mxu0 0.0
        %2737 = vmatpush1.xpose.msra.mxu0 0.0
        %2738 = vmatprep.subr.mxu0 0.0
        %2739 = vmatpush1.xpose.msra.mxu0 0.0
        %2740 = vmatprep.subr.mxu0 0.0
        %2741 = vmatpush1.xpose.msra.mxu0 0.0
        %2742 = vmatprep.subr.mxu0 0.0
        %2743 = vmatpush1.xpose.msra.mxu0 0.0
        %2744 = vmatprep.subr.mxu0 0.0
        %2745 = vmatpush1.xpose.msra.mxu0 0.0
        %2746 = vmatprep.subr.mxu0 0.0
        %2747 = vmatpush1.xpose.msra.mxu0 0.0
        %2748 = vmatprep.subr.mxu0 0.0
        %2749 = vmatpush1.xpose.msra.mxu0 0.0
        %2750 = vmatprep.subr.mxu0 0.0
        %2751 = vmatpush1.xpose.msra.mxu0 0.0
        %2752 = vmatprep.subr.mxu0 0.0
        %2753 = vmatpush1.xpose.msra.mxu0 0.0
        %2754 = vmatprep.subr.mxu0 0.0
        %2755 = vmatpush1.xpose.msra.mxu0 0.0
        %2756 = vmatprep.subr.mxu0 0.0
        %2757 = vmatpush1.xpose.msra.mxu0 0.0
        %2758 = vmatprep.subr.mxu0 0.0
        %2759 = vmatpush1.xpose.msra.mxu0 0.0
        %2760 = vmatprep.subr.mxu0 0.0
        %2761 = vmatpush1.xpose.msra.mxu0 0.0
        %2762 = vmatprep.subr.mxu0 0.0
        %2763 = vmatpush1.xpose.msra.mxu0 0.0
        %2764 = vmatprep.subr.mxu0 0.0
        %2765 = vmatpush1.xpose.msra.mxu0 0.0
        %2766 = vmatprep.subr.mxu0 0.0
        %2767 = vmatpush1.xpose.msra.mxu0 0.0
        %2768 = vmatprep.subr.mxu0 0.0
        %2769 = vmatpush1.xpose.msra.mxu0 0.0
        %2770 = vmatprep.subr.mxu0 0.0
        %2771 = vmatpush1.xpose.msra.mxu0 0.0
        %2772 = vmatprep.subr.mxu0 0.0
        %2773 = vmatpush1.xpose.msra.mxu0 0.0
        %2774 = vmatprep.subr.mxu0 0.0
        %2775 = vmatpush1.xpose.msra.mxu0 0.0
        %2776 = vmatprep.subr.mxu0 0.0
        %2777 = vmatpush1.xpose.msra.mxu0 0.0
        %2778 = vmatprep.subr.mxu0 0.0
        %2779 = vmatpush1.xpose.msra.mxu0 0.0
        %2780 = vmatprep.mubr.f32.mxu0 0.0
        %2781 = vmatmul.mubr.f32.gmra.mrb[0].mxu0 1.0
        %v2782 = vpop.f32.mrb[0].mxu0
        %v2783 = vadd.f32 %v2701, %v2782
        %v2784 = vpop.f32.mrb[0].mxu0
        %2785 = vdwg.mxu0
        %2786 = vmatprep.subr.mxu0 0.0
        %v2787 = vand.u32 %v952, 4294901760
        %2788 = vmatpush1.xpose.msra.mxu0 %v2787
        %2789 = vmatprep.subr.mxu0 0.0
        %v2790 = vand.u32 %v953, 4294901760
        %2791 = vmatpush1.xpose.msra.mxu0 %v2790
        %2792 = vmatprep.subr.mxu0 0.0
        %v2793 = vand.u32 %v954, 4294901760
        %2794 = vmatpush1.xpose.msra.mxu0 %v2793
        %2795 = vmatprep.subr.mxu0 0.0
        %v2796 = vand.u32 %v955, 4294901760
        %2797 = vmatpush1.xpose.msra.mxu0 %v2796
        %2798 = vmatprep.subr.mxu0 0.0
        %2799 = vmatpush1.xpose.msra.mxu0 0.0
        %2800 = vmatprep.subr.mxu0 0.0
        %2801 = vmatpush1.xpose.msra.mxu0 0.0
        %2802 = vmatprep.subr.mxu0 0.0
        %2803 = vmatpush1.xpose.msra.mxu0 0.0
        %2804 = vmatprep.subr.mxu0 0.0
        %2805 = vmatpush1.xpose.msra.mxu0 0.0
        %2806 = vmatprep.subr.mxu0 0.0
        %2807 = vmatpush1.xpose.msra.mxu0 0.0
        %2808 = vmatprep.subr.mxu0 0.0
        %2809 = vmatpush1.xpose.msra.mxu0 0.0
        %2810 = vmatprep.subr.mxu0 0.0
        %2811 = vmatpush1.xpose.msra.mxu0 0.0
        %2812 = vmatprep.subr.mxu0 0.0
        %2813 = vmatpush1.xpose.msra.mxu0 0.0
        %2814 = vmatprep.subr.mxu0 0.0
        %2815 = vmatpush1.xpose.msra.mxu0 0.0
        %2816 = vmatprep.subr.mxu0 0.0
        %2817 = vmatpush1.xpose.msra.mxu0 0.0
        %2818 = vmatprep.subr.mxu0 0.0
        %2819 = vmatpush1.xpose.msra.mxu0 0.0
        %2820 = vmatprep.subr.mxu0 0.0
        %2821 = vmatpush1.xpose.msra.mxu0 0.0
        %2822 = vmatprep.subr.mxu0 0.0
        %2823 = vmatpush1.xpose.msra.mxu0 0.0
        %2824 = vmatprep.subr.mxu0 0.0
        %2825 = vmatpush1.xpose.msra.mxu0 0.0
        %2826 = vmatprep.subr.mxu0 0.0
        %2827 = vmatpush1.xpose.msra.mxu0 0.0
        %2828 = vmatprep.subr.mxu0 0.0
        %2829 = vmatpush1.xpose.msra.mxu0 0.0
        %2830 = vmatprep.subr.mxu0 0.0
        %2831 = vmatpush1.xpose.msra.mxu0 0.0
        %2832 = vmatprep.subr.mxu0 0.0
        %2833 = vmatpush1.xpose.msra.mxu0 0.0
        %2834 = vmatprep.subr.mxu0 0.0
        %2835 = vmatpush1.xpose.msra.mxu0 0.0
        %2836 = vmatprep.subr.mxu0 0.0
        %2837 = vmatpush1.xpose.msra.mxu0 0.0
        %2838 = vmatprep.subr.mxu0 0.0
        %2839 = vmatpush1.xpose.msra.mxu0 0.0
        %2840 = vmatprep.subr.mxu0 0.0
        %2841 = vmatpush1.xpose.msra.mxu0 0.0
        %2842 = vmatprep.subr.mxu0 0.0
        %2843 = vmatpush1.xpose.msra.mxu0 0.0
        %2844 = vmatprep.subr.mxu0 0.0
        %2845 = vmatpush1.xpose.msra.mxu0 0.0
        %2846 = vmatprep.subr.mxu0 0.0
        %2847 = vmatpush1.xpose.msra.mxu0 0.0
        %2848 = vmatprep.subr.mxu0 0.0
        %2849 = vmatpush1.xpose.msra.mxu0 0.0
        %2850 = vmatprep.subr.mxu0 0.0
        %2851 = vmatpush1.xpose.msra.mxu0 0.0
        %2852 = vmatprep.subr.mxu0 0.0
        %2853 = vmatpush1.xpose.msra.mxu0 0.0
        %2854 = vmatprep.mubr.f32.mxu0 0.0
        %2855 = vmatmul.mubr.f32.gmra.mrb[0].mxu0 1.0
        %v2856 = vpop.f32.mrb[0].mxu0
        %v2857 = vadd.f32 %v2783, %v2856
        %v2858 = vpop.f32.mrb[0].mxu0
        %2859 = vdwg.mxu0
        %2860 = vmatprep.subr.mxu0 0.0
        %v2861 = vand.u32 %v956, 4294901760
        %2862 = vmatpush1.xpose.msra.mxu0 %v2861
        %2863 = vmatprep.subr.mxu0 0.0
        %v2864 = vand.u32 %v957, 4294901760
        %2865 = vmatpush1.xpose.msra.mxu0 %v2864
        %2866 = vmatprep.subr.mxu0 0.0
        %v2867 = vand.u32 %v958, 4294901760
        %2868 = vmatpush1.xpose.msra.mxu0 %v2867
        %2869 = vmatprep.subr.mxu0 0.0
        %v2870 = vand.u32 %v959, 4294901760
        %2871 = vmatpush1.xpose.msra.mxu0 %v2870
        %2872 = vmatprep.subr.mxu0 0.0
        %2873 = vmatpush1.xpose.msra.mxu0 0.0
        %2874 = vmatprep.subr.mxu0 0.0
        %2875 = vmatpush1.xpose.msra.mxu0 0.0
        %2876 = vmatprep.subr.mxu0 0.0
        %2877 = vmatpush1.xpose.msra.mxu0 0.0
        %2878 = vmatprep.subr.mxu0 0.0
        %2879 = vmatpush1.xpose.msra.mxu0 0.0
        %2880 = vmatprep.subr.mxu0 0.0
        %2881 = vmatpush1.xpose.msra.mxu0 0.0
        %2882 = vmatprep.subr.mxu0 0.0
        %2883 = vmatpush1.xpose.msra.mxu0 0.0
        %2884 = vmatprep.subr.mxu0 0.0
        %2885 = vmatpush1.xpose.msra.mxu0 0.0
        %2886 = vmatprep.subr.mxu0 0.0
        %2887 = vmatpush1.xpose.msra.mxu0 0.0
        %2888 = vmatprep.subr.mxu0 0.0
        %2889 = vmatpush1.xpose.msra.mxu0 0.0
        %2890 = vmatprep.subr.mxu0 0.0
        %2891 = vmatpush1.xpose.msra.mxu0 0.0
        %2892 = vmatprep.subr.mxu0 0.0
        %2893 = vmatpush1.xpose.msra.mxu0 0.0
        %2894 = vmatprep.subr.mxu0 0.0
        %2895 = vmatpush1.xpose.msra.mxu0 0.0
        %2896 = vmatprep.subr.mxu0 0.0
        %2897 = vmatpush1.xpose.msra.mxu0 0.0
        %2898 = vmatprep.subr.mxu0 0.0
        %2899 = vmatpush1.xpose.msra.mxu0 0.0
        %2900 = vmatprep.subr.mxu0 0.0
        %2901 = vmatpush1.xpose.msra.mxu0 0.0
        %2902 = vmatprep.subr.mxu0 0.0
        %2903 = vmatpush1.xpose.msra.mxu0 0.0
        %2904 = vmatprep.subr.mxu0 0.0
        %2905 = vmatpush1.xpose.msra.mxu0 0.0
        %2906 = vmatprep.subr.mxu0 0.0
        %2907 = vmatpush1.xpose.msra.mxu0 0.0
        %2908 = vmatprep.subr.mxu0 0.0
        %2909 = vmatpush1.xpose.msra.mxu0 0.0
        %2910 = vmatprep.subr.mxu0 0.0
        %2911 = vmatpush1.xpose.msra.mxu0 0.0
        %2912 = vmatprep.subr.mxu0 0.0
        %2913 = vmatpush1.xpose.msra.mxu0 0.0
        %2914 = vmatprep.subr.mxu0 0.0
        %2915 = vmatpush1.xpose.msra.mxu0 0.0
        %2916 = vmatprep.subr.mxu0 0.0
        %2917 = vmatpush1.xpose.msra.mxu0 0.0
        %2918 = vmatprep.subr.mxu0 0.0
        %2919 = vmatpush1.xpose.msra.mxu0 0.0
        %2920 = vmatprep.subr.mxu0 0.0
        %2921 = vmatpush1.xpose.msra.mxu0 0.0
        %2922 = vmatprep.subr.mxu0 0.0
        %2923 = vmatpush1.xpose.msra.mxu0 0.0
        %2924 = vmatprep.subr.mxu0 0.0
        %2925 = vmatpush1.xpose.msra.mxu0 0.0
        %2926 = vmatprep.subr.mxu0 0.0
        %2927 = vmatpush1.xpose.msra.mxu0 0.0
        %2928 = vmatprep.mubr.f32.mxu0 0.0
        %2929 = vmatmul.mubr.f32.gmra.mrb[0].mxu0 0.0
        %v2930 = vpop.f32.mrb[0].mxu0
        %v2931 = vadd.f32 0.0, %v2930
        %v2932 = vpop.f32.mrb[0].mxu0
        %2933 = vdwg.mxu0
        %2934 = vmatprep.subr.mxu0 0.0
        %v2935 = vand.u32 %v956, 4294901760
        %v2936 = vsub.f32 %v956, %v2935
        %v2937 = vand.u32 %v2936, 4294901760
        %v2938 = vsub.f32 %v2936, %v2937
        %v2939 = vand.u32 %v2938, 4294901760
        %2940 = vmatpush1.xpose.msra.mxu0 %v2939
        %2941 = vmatprep.subr.mxu0 0.0
        %v2942 = vand.u32 %v957, 4294901760
        %v2943 = vsub.f32 %v957, %v2942
        %v2944 = vand.u32 %v2943, 4294901760
        %v2945 = vsub.f32 %v2943, %v2944
        %v2946 = vand.u32 %v2945, 4294901760
        %2947 = vmatpush1.xpose.msra.mxu0 %v2946
        %2948 = vmatprep.subr.mxu0 0.0
        %v2949 = vand.u32 %v958, 4294901760
        %v2950 = vsub.f32 %v958, %v2949
        %v2951 = vand.u32 %v2950, 4294901760
        %v2952 = vsub.f32 %v2950, %v2951
        %v2953 = vand.u32 %v2952, 4294901760
        %2954 = vmatpush1.xpose.msra.mxu0 %v2953
        %2955 = vmatprep.subr.mxu0 0.0
        %v2956 = vand.u32 %v959, 4294901760
        %v2957 = vsub.f32 %v959, %v2956
        %v2958 = vand.u32 %v2957, 4294901760
        %v2959 = vsub.f32 %v2957, %v2958
        %v2960 = vand.u32 %v2959, 4294901760
        %2961 = vmatpush1.xpose.msra.mxu0 %v2960
        %2962 = vmatprep.subr.mxu0 0.0
        %2963 = vmatpush1.xpose.msra.mxu0 0.0
        %2964 = vmatprep.subr.mxu0 0.0
        %2965 = vmatpush1.xpose.msra.mxu0 0.0
        %2966 = vmatprep.subr.mxu0 0.0
        %2967 = vmatpush1.xpose.msra.mxu0 0.0
        %2968 = vmatprep.subr.mxu0 0.0
        %2969 = vmatpush1.xpose.msra.mxu0 0.0
        %2970 = vmatprep.subr.mxu0 0.0
        %2971 = vmatpush1.xpose.msra.mxu0 0.0
        %2972 = vmatprep.subr.mxu0 0.0
        %2973 = vmatpush1.xpose.msra.mxu0 0.0
        %2974 = vmatprep.subr.mxu0 0.0
        %2975 = vmatpush1.xpose.msra.mxu0 0.0
        %2976 = vmatprep.subr.mxu0 0.0
        %2977 = vmatpush1.xpose.msra.mxu0 0.0
        %2978 = vmatprep.subr.mxu0 0.0
        %2979 = vmatpush1.xpose.msra.mxu0 0.0
        %2980 = vmatprep.subr.mxu0 0.0
        %2981 = vmatpush1.xpose.msra.mxu0 0.0
        %2982 = vmatprep.subr.mxu0 0.0
        %2983 = vmatpush1.xpose.msra.mxu0 0.0
        %2984 = vmatprep.subr.mxu0 0.0
        %2985 = vmatpush1.xpose.msra.mxu0 0.0
        %2986 = vmatprep.subr.mxu0 0.0
        %2987 = vmatpush1.xpose.msra.mxu0 0.0
        %2988 = vmatprep.subr.mxu0 0.0
        %2989 = vmatpush1.xpose.msra.mxu0 0.0
        %2990 = vmatprep.subr.mxu0 0.0
        %2991 = vmatpush1.xpose.msra.mxu0 0.0
        %2992 = vmatprep.subr.mxu0 0.0
        %2993 = vmatpush1.xpose.msra.mxu0 0.0
        %2994 = vmatprep.subr.mxu0 0.0
        %2995 = vmatpush1.xpose.msra.mxu0 0.0
        %2996 = vmatprep.subr.mxu0 0.0
        %2997 = vmatpush1.xpose.msra.mxu0 0.0
        %2998 = vmatprep.subr.mxu0 0.0
        %2999 = vmatpush1.xpose.msra.mxu0 0.0
        %3000 = vmatprep.subr.mxu0 0.0
        %3001 = vmatpush1.xpose.msra.mxu0 0.0
        %3002 = vmatprep.subr.mxu0 0.0
        %3003 = vmatpush1.xpose.msra.mxu0 0.0
        %3004 = vmatprep.subr.mxu0 0.0
        %3005 = vmatpush1.xpose.msra.mxu0 0.0
        %3006 = vmatprep.subr.mxu0 0.0
        %3007 = vmatpush1.xpose.msra.mxu0 0.0
        %3008 = vmatprep.subr.mxu0 0.0
        %3009 = vmatpush1.xpose.msra.mxu0 0.0
        %3010 = vmatprep.subr.mxu0 0.0
        %3011 = vmatpush1.xpose.msra.mxu0 0.0
        %3012 = vmatprep.subr.mxu0 0.0
        %3013 = vmatpush1.xpose.msra.mxu0 0.0
        %3014 = vmatprep.subr.mxu0 0.0
        %3015 = vmatpush1.xpose.msra.mxu0 0.0
        %3016 = vmatprep.subr.mxu0 0.0
        %3017 = vmatpush1.xpose.msra.mxu0 0.0
        %3018 = vmatprep.mubr.f32.mxu0 0.0
        %3019 = vmatmul.mubr.f32.gmra.mrb[0].mxu0 1.0
        %v3020 = vpop.f32.mrb[0].mxu0
        %v3021 = vadd.f32 %v2931, %v3020
        %v3022 = vpop.f32.mrb[0].mxu0
        %3023 = vdwg.mxu0
        %3024 = vmatprep.subr.mxu0 0.0
        %v3025 = vand.u32 %v956, 4294901760
        %v3026 = vsub.f32 %v956, %v3025
        %3027 = vmatpush1.xpose.msra.mxu0 %v3026
        %3028 = vmatprep.subr.mxu0 0.0
        %v3029 = vand.u32 %v957, 4294901760
        %v3030 = vsub.f32 %v957, %v3029
        %3031 = vmatpush1.xpose.msra.mxu0 %v3030
        %3032 = vmatprep.subr.mxu0 0.0
        %v3033 = vand.u32 %v958, 4294901760
        %v3034 = vsub.f32 %v958, %v3033
        %3035 = vmatpush1.xpose.msra.mxu0 %v3034
        %3036 = vmatprep.subr.mxu0 0.0
        %v3037 = vand.u32 %v959, 4294901760
        %v3038 = vsub.f32 %v959, %v3037
        %3039 = vmatpush1.xpose.msra.mxu0 %v3038
        %3040 = vmatprep.subr.mxu0 0.0
        %3041 = vmatpush1.xpose.msra.mxu0 0.0
        %3042 = vmatprep.subr.mxu0 0.0
        %3043 = vmatpush1.xpose.msra.mxu0 0.0
        %3044 = vmatprep.subr.mxu0 0.0
        %3045 = vmatpush1.xpose.msra.mxu0 0.0
        %3046 = vmatprep.subr.mxu0 0.0
        %3047 = vmatpush1.xpose.msra.mxu0 0.0
        %3048 = vmatprep.subr.mxu0 0.0
        %3049 = vmatpush1.xpose.msra.mxu0 0.0
        %3050 = vmatprep.subr.mxu0 0.0
        %3051 = vmatpush1.xpose.msra.mxu0 0.0
        %3052 = vmatprep.subr.mxu0 0.0
        %3053 = vmatpush1.xpose.msra.mxu0 0.0
        %3054 = vmatprep.subr.mxu0 0.0
        %3055 = vmatpush1.xpose.msra.mxu0 0.0
        %3056 = vmatprep.subr.mxu0 0.0
        %3057 = vmatpush1.xpose.msra.mxu0 0.0
        %3058 = vmatprep.subr.mxu0 0.0
        %3059 = vmatpush1.xpose.msra.mxu0 0.0
        %3060 = vmatprep.subr.mxu0 0.0
        %3061 = vmatpush1.xpose.msra.mxu0 0.0
        %3062 = vmatprep.subr.mxu0 0.0
        %3063 = vmatpush1.xpose.msra.mxu0 0.0
        %3064 = vmatprep.subr.mxu0 0.0
        %3065 = vmatpush1.xpose.msra.mxu0 0.0
        %3066 = vmatprep.subr.mxu0 0.0
        %3067 = vmatpush1.xpose.msra.mxu0 0.0
        %3068 = vmatprep.subr.mxu0 0.0
        %3069 = vmatpush1.xpose.msra.mxu0 0.0
        %3070 = vmatprep.subr.mxu0 0.0
        %3071 = vmatpush1.xpose.msra.mxu0 0.0
        %3072 = vmatprep.subr.mxu0 0.0
        %3073 = vmatpush1.xpose.msra.mxu0 0.0
        %3074 = vmatprep.subr.mxu0 0.0
        %3075 = vmatpush1.xpose.msra.mxu0 0.0
        %3076 = vmatprep.subr.mxu0 0.0
        %3077 = vmatpush1.xpose.msra.mxu0 0.0
        %3078 = vmatprep.subr.mxu0 0.0
        %3079 = vmatpush1.xpose.msra.mxu0 0.0
        %3080 = vmatprep.subr.mxu0 0.0
        %3081 = vmatpush1.xpose.msra.mxu0 0.0
        %3082 = vmatprep.subr.mxu0 0.0
        %3083 = vmatpush1.xpose.msra.mxu0 0.0
        %3084 = vmatprep.subr.mxu0 0.0
        %3085 = vmatpush1.xpose.msra.mxu0 0.0
        %3086 = vmatprep.subr.mxu0 0.0
        %3087 = vmatpush1.xpose.msra.mxu0 0.0
        %3088 = vmatprep.subr.mxu0 0.0
        %3089 = vmatpush1.xpose.msra.mxu0 0.0
        %3090 = vmatprep.subr.mxu0 0.0
        %3091 = vmatpush1.xpose.msra.mxu0 0.0
        %3092 = vmatprep.subr.mxu0 0.0
        %3093 = vmatpush1.xpose.msra.mxu0 0.0
        %3094 = vmatprep.subr.mxu0 0.0
        %3095 = vmatpush1.xpose.msra.mxu0 0.0
        %3096 = vmatprep.mubr.f32.mxu0 0.0
        %3097 = vmatmul.mubr.f32.gmra.mrb[0].mxu0 0.0
        %v3098 = vpop.f32.mrb[0].mxu0
        %v3099 = vadd.f32 %v3021, %v3098
        %v3100 = vpop.f32.mrb[0].mxu0
        %3101 = vdwg.mxu0
        %3102 = vmatprep.subr.mxu0 0.0
        %v3103 = vand.u32 %v956, 4294901760
        %3104 = vmatpush1.xpose.msra.mxu0 %v3103
        %3105 = vmatprep.subr.mxu0 0.0
        %v3106 = vand.u32 %v957, 4294901760
        %3107 = vmatpush1.xpose.msra.mxu0 %v3106
        %3108 = vmatprep.subr.mxu0 0.0
        %v3109 = vand.u32 %v958, 4294901760
        %3110 = vmatpush1.xpose.msra.mxu0 %v3109
        %3111 = vmatprep.subr.mxu0 0.0
        %v3112 = vand.u32 %v959, 4294901760
        %3113 = vmatpush1.xpose.msra.mxu0 %v3112
        %3114 = vmatprep.subr.mxu0 0.0
        %3115 = vmatpush1.xpose.msra.mxu0 0.0
        %3116 = vmatprep.subr.mxu0 0.0
        %3117 = vmatpush1.xpose.msra.mxu0 0.0
        %3118 = vmatprep.subr.mxu0 0.0
        %3119 = vmatpush1.xpose.msra.mxu0 0.0
        %3120 = vmatprep.subr.mxu0 0.0
        %3121 = vmatpush1.xpose.msra.mxu0 0.0
        %3122 = vmatprep.subr.mxu0 0.0
        %3123 = vmatpush1.xpose.msra.mxu0 0.0
        %3124 = vmatprep.subr.mxu0 0.0
        %3125 = vmatpush1.xpose.msra.mxu0 0.0
        %3126 = vmatprep.subr.mxu0 0.0
        %3127 = vmatpush1.xpose.msra.mxu0 0.0
        %3128 = vmatprep.subr.mxu0 0.0
        %3129 = vmatpush1.xpose.msra.mxu0 0.0
        %3130 = vmatprep.subr.mxu0 0.0
        %3131 = vmatpush1.xpose.msra.mxu0 0.0
        %3132 = vmatprep.subr.mxu0 0.0
        %3133 = vmatpush1.xpose.msra.mxu0 0.0
        %3134 = vmatprep.subr.mxu0 0.0
        %3135 = vmatpush1.xpose.msra.mxu0 0.0
        %3136 = vmatprep.subr.mxu0 0.0
        %3137 = vmatpush1.xpose.msra.mxu0 0.0
        %3138 = vmatprep.subr.mxu0 0.0
        %3139 = vmatpush1.xpose.msra.mxu0 0.0
        %3140 = vmatprep.subr.mxu0 0.0
        %3141 = vmatpush1.xpose.msra.mxu0 0.0
        %3142 = vmatprep.subr.mxu0 0.0
        %3143 = vmatpush1.xpose.msra.mxu0 0.0
        %3144 = vmatprep.subr.mxu0 0.0
        %3145 = vmatpush1.xpose.msra.mxu0 0.0
        %3146 = vmatprep.subr.mxu0 0.0
        %3147 = vmatpush1.xpose.msra.mxu0 0.0
        %3148 = vmatprep.subr.mxu0 0.0
        %3149 = vmatpush1.xpose.msra.mxu0 0.0
        %3150 = vmatprep.subr.mxu0 0.0
        %3151 = vmatpush1.xpose.msra.mxu0 0.0
        %3152 = vmatprep.subr.mxu0 0.0
        %3153 = vmatpush1.xpose.msra.mxu0 0.0
        %3154 = vmatprep.subr.mxu0 0.0
        %3155 = vmatpush1.xpose.msra.mxu0 0.0
        %3156 = vmatprep.subr.mxu0 0.0
        %3157 = vmatpush1.xpose.msra.mxu0 0.0
        %3158 = vmatprep.subr.mxu0 0.0
        %3159 = vmatpush1.xpose.msra.mxu0 0.0
        %3160 = vmatprep.subr.mxu0 0.0
        %3161 = vmatpush1.xpose.msra.mxu0 0.0
        %3162 = vmatprep.subr.mxu0 0.0
        %3163 = vmatpush1.xpose.msra.mxu0 0.0
        %3164 = vmatprep.subr.mxu0 0.0
        %3165 = vmatpush1.xpose.msra.mxu0 0.0
        %3166 = vmatprep.subr.mxu0 0.0
        %3167 = vmatpush1.xpose.msra.mxu0 0.0
        %3168 = vmatprep.subr.mxu0 0.0
        %3169 = vmatpush1.xpose.msra.mxu0 0.0
        %3170 = vmatprep.mubr.f32.mxu0 0.0
        %3171 = vmatmul.mubr.f32.gmra.mrb[0].mxu0 0.0
        %v3172 = vpop.f32.mrb[0].mxu0
        %v3173 = vadd.f32 %v3099, %v3172
        %v3174 = vpop.f32.mrb[0].mxu0
        %3175 = vdwg.mxu0
        %3176 = vmatprep.subr.mxu0 0.0
        %v3177 = vand.u32 %v956, 4294901760
        %v3178 = vsub.f32 %v956, %v3177
        %v3179 = vand.u32 %v3178, 4294901760
        %3180 = vmatpush1.xpose.msra.mxu0 %v3179
        %3181 = vmatprep.subr.mxu0 0.0
        %v3182 = vand.u32 %v957, 4294901760
        %v3183 = vsub.f32 %v957, %v3182
        %v3184 = vand.u32 %v3183, 4294901760
        %3185 = vmatpush1.xpose.msra.mxu0 %v3184
        %3186 = vmatprep.subr.mxu0 0.0
        %v3187 = vand.u32 %v958, 4294901760
        %v3188 = vsub.f32 %v958, %v3187
        %v3189 = vand.u32 %v3188, 4294901760
        %3190 = vmatpush1.xpose.msra.mxu0 %v3189
        %3191 = vmatprep.subr.mxu0 0.0
        %v3192 = vand.u32 %v959, 4294901760
        %v3193 = vsub.f32 %v959, %v3192
        %v3194 = vand.u32 %v3193, 4294901760
        %3195 = vmatpush1.xpose.msra.mxu0 %v3194
        %3196 = vmatprep.subr.mxu0 0.0
        %3197 = vmatpush1.xpose.msra.mxu0 0.0
        %3198 = vmatprep.subr.mxu0 0.0
        %3199 = vmatpush1.xpose.msra.mxu0 0.0
        %3200 = vmatprep.subr.mxu0 0.0
        %3201 = vmatpush1.xpose.msra.mxu0 0.0
        %3202 = vmatprep.subr.mxu0 0.0
        %3203 = vmatpush1.xpose.msra.mxu0 0.0
        %3204 = vmatprep.subr.mxu0 0.0
        %3205 = vmatpush1.xpose.msra.mxu0 0.0
        %3206 = vmatprep.subr.mxu0 0.0
        %3207 = vmatpush1.xpose.msra.mxu0 0.0
        %3208 = vmatprep.subr.mxu0 0.0
        %3209 = vmatpush1.xpose.msra.mxu0 0.0
        %3210 = vmatprep.subr.mxu0 0.0
        %3211 = vmatpush1.xpose.msra.mxu0 0.0
        %3212 = vmatprep.subr.mxu0 0.0
        %3213 = vmatpush1.xpose.msra.mxu0 0.0
        %3214 = vmatprep.subr.mxu0 0.0
        %3215 = vmatpush1.xpose.msra.mxu0 0.0
        %3216 = vmatprep.subr.mxu0 0.0
        %3217 = vmatpush1.xpose.msra.mxu0 0.0
        %3218 = vmatprep.subr.mxu0 0.0
        %3219 = vmatpush1.xpose.msra.mxu0 0.0
        %3220 = vmatprep.subr.mxu0 0.0
        %3221 = vmatpush1.xpose.msra.mxu0 0.0
        %3222 = vmatprep.subr.mxu0 0.0
        %3223 = vmatpush1.xpose.msra.mxu0 0.0
        %3224 = vmatprep.subr.mxu0 0.0
        %3225 = vmatpush1.xpose.msra.mxu0 0.0
        %3226 = vmatprep.subr.mxu0 0.0
        %3227 = vmatpush1.xpose.msra.mxu0 0.0
        %3228 = vmatprep.subr.mxu0 0.0
        %3229 = vmatpush1.xpose.msra.mxu0 0.0
        %3230 = vmatprep.subr.mxu0 0.0
        %3231 = vmatpush1.xpose.msra.mxu0 0.0
        %3232 = vmatprep.subr.mxu0 0.0
        %3233 = vmatpush1.xpose.msra.mxu0 0.0
        %3234 = vmatprep.subr.mxu0 0.0
        %3235 = vmatpush1.xpose.msra.mxu0 0.0
        %3236 = vmatprep.subr.mxu0 0.0
        %3237 = vmatpush1.xpose.msra.mxu0 0.0
        %3238 = vmatprep.subr.mxu0 0.0
        %3239 = vmatpush1.xpose.msra.mxu0 0.0
        %3240 = vmatprep.subr.mxu0 0.0
        %3241 = vmatpush1.xpose.msra.mxu0 0.0
        %3242 = vmatprep.subr.mxu0 0.0
        %3243 = vmatpush1.xpose.msra.mxu0 0.0
        %3244 = vmatprep.subr.mxu0 0.0
        %3245 = vmatpush1.xpose.msra.mxu0 0.0
        %3246 = vmatprep.subr.mxu0 0.0
        %3247 = vmatpush1.xpose.msra.mxu0 0.0
        %3248 = vmatprep.subr.mxu0 0.0
        %3249 = vmatpush1.xpose.msra.mxu0 0.0
        %3250 = vmatprep.subr.mxu0 0.0
        %3251 = vmatpush1.xpose.msra.mxu0 0.0
        %3252 = vmatprep.mubr.f32.mxu0 0.0
        %3253 = vmatmul.mubr.f32.gmra.mrb[0].mxu0 1.0
        %v3254 = vpop.f32.mrb[0].mxu0
        %v3255 = vadd.f32 %v3173, %v3254
        %v3256 = vpop.f32.mrb[0].mxu0
        %3257 = vdwg.mxu0
        %3258 = vmatprep.subr.mxu0 0.0
        %v3259 = vand.u32 %v956, 4294901760
        %3260 = vmatpush1.xpose.msra.mxu0 %v3259
        %3261 = vmatprep.subr.mxu0 0.0
        %v3262 = vand.u32 %v957, 4294901760
        %3263 = vmatpush1.xpose.msra.mxu0 %v3262
        %3264 = vmatprep.subr.mxu0 0.0
        %v3265 = vand.u32 %v958, 4294901760
        %3266 = vmatpush1.xpose.msra.mxu0 %v3265
        %3267 = vmatprep.subr.mxu0 0.0
        %v3268 = vand.u32 %v959, 4294901760
        %3269 = vmatpush1.xpose.msra.mxu0 %v3268
        %3270 = vmatprep.subr.mxu0 0.0
        %3271 = vmatpush1.xpose.msra.mxu0 0.0
        %3272 = vmatprep.subr.mxu0 0.0
        %3273 = vmatpush1.xpose.msra.mxu0 0.0
        %3274 = vmatprep.subr.mxu0 0.0
        %3275 = vmatpush1.xpose.msra.mxu0 0.0
        %3276 = vmatprep.subr.mxu0 0.0
        %3277 = vmatpush1.xpose.msra.mxu0 0.0
        %3278 = vmatprep.subr.mxu0 0.0
        %3279 = vmatpush1.xpose.msra.mxu0 0.0
        %3280 = vmatprep.subr.mxu0 0.0
        %3281 = vmatpush1.xpose.msra.mxu0 0.0
        %3282 = vmatprep.subr.mxu0 0.0
        %3283 = vmatpush1.xpose.msra.mxu0 0.0
        %3284 = vmatprep.subr.mxu0 0.0
        %3285 = vmatpush1.xpose.msra.mxu0 0.0
        %3286 = vmatprep.subr.mxu0 0.0
        %3287 = vmatpush1.xpose.msra.mxu0 0.0
        %3288 = vmatprep.subr.mxu0 0.0
        %3289 = vmatpush1.xpose.msra.mxu0 0.0
        %3290 = vmatprep.subr.mxu0 0.0
        %3291 = vmatpush1.xpose.msra.mxu0 0.0
        %3292 = vmatprep.subr.mxu0 0.0
        %3293 = vmatpush1.xpose.msra.mxu0 0.0
        %3294 = vmatprep.subr.mxu0 0.0
        %3295 = vmatpush1.xpose.msra.mxu0 0.0
        %3296 = vmatprep.subr.mxu0 0.0
        %3297 = vmatpush1.xpose.msra.mxu0 0.0
        %3298 = vmatprep.subr.mxu0 0.0
        %3299 = vmatpush1.xpose.msra.mxu0 0.0
        %3300 = vmatprep.subr.mxu0 0.0
        %3301 = vmatpush1.xpose.msra.mxu0 0.0
        %3302 = vmatprep.subr.mxu0 0.0
        %3303 = vmatpush1.xpose.msra.mxu0 0.0
        %3304 = vmatprep.subr.mxu0 0.0
        %3305 = vmatpush1.xpose.msra.mxu0 0.0
        %3306 = vmatprep.subr.mxu0 0.0
        %3307 = vmatpush1.xpose.msra.mxu0 0.0
        %3308 = vmatprep.subr.mxu0 0.0
        %3309 = vmatpush1.xpose.msra.mxu0 0.0
        %3310 = vmatprep.subr.mxu0 0.0
        %3311 = vmatpush1.xpose.msra.mxu0 0.0
        %3312 = vmatprep.subr.mxu0 0.0
        %3313 = vmatpush1.xpose.msra.mxu0 0.0
        %3314 = vmatprep.subr.mxu0 0.0
        %3315 = vmatpush1.xpose.msra.mxu0 0.0
        %3316 = vmatprep.subr.mxu0 0.0
        %3317 = vmatpush1.xpose.msra.mxu0 0.0
        %3318 = vmatprep.subr.mxu0 0.0
        %3319 = vmatpush1.xpose.msra.mxu0 0.0
        %3320 = vmatprep.subr.mxu0 0.0
        %3321 = vmatpush1.xpose.msra.mxu0 0.0
        %3322 = vmatprep.subr.mxu0 0.0
        %3323 = vmatpush1.xpose.msra.mxu0 0.0
        %3324 = vmatprep.subr.mxu0 0.0
        %3325 = vmatpush1.xpose.msra.mxu0 0.0
        %3326 = vmatprep.mubr.f32.mxu0 0.0
        %3327 = vmatmul.mubr.f32.gmra.mrb[0].mxu0 1.0
        %v3328 = vpop.f32.mrb[0].mxu0
        %v3329 = vadd.f32 %v3255, %v3328
        %v3330 = vpop.f32.mrb[0].mxu0
        %3331 = vdwg.mxu0
        %3332 = vmatprep.subr.mxu0 0.0
        %v3333 = vand.u32 %v960, 4294901760
        %3334 = vmatpush1.xpose.msra.mxu0 %v3333
        %3335 = vmatprep.subr.mxu0 0.0
        %v3336 = vand.u32 %v961, 4294901760
        %3337 = vmatpush1.xpose.msra.mxu0 %v3336
        %3338 = vmatprep.subr.mxu0 0.0
        %v3339 = vand.u32 %v962, 4294901760
        %3340 = vmatpush1.xpose.msra.mxu0 %v3339
        %3341 = vmatprep.subr.mxu0 0.0
        %v3342 = vand.u32 %v963, 4294901760
        %3343 = vmatpush1.xpose.msra.mxu0 %v3342
        %3344 = vmatprep.subr.mxu0 0.0
        %3345 = vmatpush1.xpose.msra.mxu0 0.0
        %3346 = vmatprep.subr.mxu0 0.0
        %3347 = vmatpush1.xpose.msra.mxu0 0.0
        %3348 = vmatprep.subr.mxu0 0.0
        %3349 = vmatpush1.xpose.msra.mxu0 0.0
        %3350 = vmatprep.subr.mxu0 0.0
        %3351 = vmatpush1.xpose.msra.mxu0 0.0
        %3352 = vmatprep.subr.mxu0 0.0
        %3353 = vmatpush1.xpose.msra.mxu0 0.0
        %3354 = vmatprep.subr.mxu0 0.0
        %3355 = vmatpush1.xpose.msra.mxu0 0.0
        %3356 = vmatprep.subr.mxu0 0.0
        %3357 = vmatpush1.xpose.msra.mxu0 0.0
        %3358 = vmatprep.subr.mxu0 0.0
        %3359 = vmatpush1.xpose.msra.mxu0 0.0
        %3360 = vmatprep.subr.mxu0 0.0
        %3361 = vmatpush1.xpose.msra.mxu0 0.0
        %3362 = vmatprep.subr.mxu0 0.0
        %3363 = vmatpush1.xpose.msra.mxu0 0.0
        %3364 = vmatprep.subr.mxu0 0.0
        %3365 = vmatpush1.xpose.msra.mxu0 0.0
        %3366 = vmatprep.subr.mxu0 0.0
        %3367 = vmatpush1.xpose.msra.mxu0 0.0
        %3368 = vmatprep.subr.mxu0 0.0
        %3369 = vmatpush1.xpose.msra.mxu0 0.0
        %3370 = vmatprep.subr.mxu0 0.0
        %3371 = vmatpush1.xpose.msra.mxu0 0.0
        %3372 = vmatprep.subr.mxu0 0.0
        %3373 = vmatpush1.xpose.msra.mxu0 0.0
        %3374 = vmatprep.subr.mxu0 0.0
        %3375 = vmatpush1.xpose.msra.mxu0 0.0
        %3376 = vmatprep.subr.mxu0 0.0
        %3377 = vmatpush1.xpose.msra.mxu0 0.0
        %3378 = vmatprep.subr.mxu0 0.0
        %3379 = vmatpush1.xpose.msra.mxu0 0.0
        %3380 = vmatprep.subr.mxu0 0.0
        %3381 = vmatpush1.xpose.msra.mxu0 0.0
        %3382 = vmatprep.subr.mxu0 0.0
        %3383 = vmatpush1.xpose.msra.mxu0 0.0
        %3384 = vmatprep.subr.mxu0 0.0
        %3385 = vmatpush1.xpose.msra.mxu0 0.0
        %3386 = vmatprep.subr.mxu0 0.0
        %3387 = vmatpush1.xpose.msra.mxu0 0.0
        %3388 = vmatprep.subr.mxu0 0.0
        %3389 = vmatpush1.xpose.msra.mxu0 0.0
        %3390 = vmatprep.subr.mxu0 0.0
        %3391 = vmatpush1.xpose.msra.mxu0 0.0
        %3392 = vmatprep.subr.mxu0 0.0
        %3393 = vmatpush1.xpose.msra.mxu0 0.0
        %3394 = vmatprep.subr.mxu0 0.0
        %3395 = vmatpush1.xpose.msra.mxu0 0.0
        %3396 = vmatprep.subr.mxu0 0.0
        %3397 = vmatpush1.xpose.msra.mxu0 0.0
        %3398 = vmatprep.subr.mxu0 0.0
        %3399 = vmatpush1.xpose.msra.mxu0 0.0
        %3400 = vmatprep.mubr.f32.mxu0 0.0
        %3401 = vmatmul.mubr.f32.gmra.mrb[0].mxu0 0.0
        %v3402 = vpop.f32.mrb[0].mxu0
        %v3403 = vadd.f32 0.0, %v3402
        %v3404 = vpop.f32.mrb[0].mxu0
        %3405 = vdwg.mxu0
        %3406 = vmatprep.subr.mxu0 0.0
        %v3407 = vand.u32 %v960, 4294901760
        %v3408 = vsub.f32 %v960, %v3407
        %v3409 = vand.u32 %v3408, 4294901760
        %v3410 = vsub.f32 %v3408, %v3409
        %v3411 = vand.u32 %v3410, 4294901760
        %3412 = vmatpush1.xpose.msra.mxu0 %v3411
        %3413 = vmatprep.subr.mxu0 0.0
        %v3414 = vand.u32 %v961, 4294901760
        %v3415 = vsub.f32 %v961, %v3414
        %v3416 = vand.u32 %v3415, 4294901760
        %v3417 = vsub.f32 %v3415, %v3416
        %v3418 = vand.u32 %v3417, 4294901760
        %3419 = vmatpush1.xpose.msra.mxu0 %v3418
        %3420 = vmatprep.subr.mxu0 0.0
        %v3421 = vand.u32 %v962, 4294901760
        %v3422 = vsub.f32 %v962, %v3421
        %v3423 = vand.u32 %v3422, 4294901760
        %v3424 = vsub.f32 %v3422, %v3423
        %v3425 = vand.u32 %v3424, 4294901760
        %3426 = vmatpush1.xpose.msra.mxu0 %v3425
        %3427 = vmatprep.subr.mxu0 0.0
        %v3428 = vand.u32 %v963, 4294901760
        %v3429 = vsub.f32 %v963, %v3428
        %v3430 = vand.u32 %v3429, 4294901760
        %v3431 = vsub.f32 %v3429, %v3430
        %v3432 = vand.u32 %v3431, 4294901760
        %3433 = vmatpush1.xpose.msra.mxu0 %v3432
        %3434 = vmatprep.subr.mxu0 0.0
        %3435 = vmatpush1.xpose.msra.mxu0 0.0
        %3436 = vmatprep.subr.mxu0 0.0
        %3437 = vmatpush1.xpose.msra.mxu0 0.0
        %3438 = vmatprep.subr.mxu0 0.0
        %3439 = vmatpush1.xpose.msra.mxu0 0.0
        %3440 = vmatprep.subr.mxu0 0.0
        %3441 = vmatpush1.xpose.msra.mxu0 0.0
        %3442 = vmatprep.subr.mxu0 0.0
        %3443 = vmatpush1.xpose.msra.mxu0 0.0
        %3444 = vmatprep.subr.mxu0 0.0
        %3445 = vmatpush1.xpose.msra.mxu0 0.0
        %3446 = vmatprep.subr.mxu0 0.0
        %3447 = vmatpush1.xpose.msra.mxu0 0.0
        %3448 = vmatprep.subr.mxu0 0.0
        %3449 = vmatpush1.xpose.msra.mxu0 0.0
        %3450 = vmatprep.subr.mxu0 0.0
        %3451 = vmatpush1.xpose.msra.mxu0 0.0
        %3452 = vmatprep.subr.mxu0 0.0
        %3453 = vmatpush1.xpose.msra.mxu0 0.0
        %3454 = vmatprep.subr.mxu0 0.0
        %3455 = vmatpush1.xpose.msra.mxu0 0.0
        %3456 = vmatprep.subr.mxu0 0.0
        %3457 = vmatpush1.xpose.msra.mxu0 0.0
        %3458 = vmatprep.subr.mxu0 0.0
        %3459 = vmatpush1.xpose.msra.mxu0 0.0
        %3460 = vmatprep.subr.mxu0 0.0
        %3461 = vmatpush1.xpose.msra.mxu0 0.0
        %3462 = vmatprep.subr.mxu0 0.0
        %3463 = vmatpush1.xpose.msra.mxu0 0.0
        %3464 = vmatprep.subr.mxu0 0.0
        %3465 = vmatpush1.xpose.msra.mxu0 0.0
        %3466 = vmatprep.subr.mxu0 0.0
        %3467 = vmatpush1.xpose.msra.mxu0 0.0
        %3468 = vmatprep.subr.mxu0 0.0
        %3469 = vmatpush1.xpose.msra.mxu0 0.0
        %3470 = vmatprep.subr.mxu0 0.0
        %3471 = vmatpush1.xpose.msra.mxu0 0.0
        %3472 = vmatprep.subr.mxu0 0.0
        %3473 = vmatpush1.xpose.msra.mxu0 0.0
        %3474 = vmatprep.subr.mxu0 0.0
        %3475 = vmatpush1.xpose.msra.mxu0 0.0
        %3476 = vmatprep.subr.mxu0 0.0
        %3477 = vmatpush1.xpose.msra.mxu0 0.0
        %3478 = vmatprep.subr.mxu0 0.0
        %3479 = vmatpush1.xpose.msra.mxu0 0.0
        %3480 = vmatprep.subr.mxu0 0.0
        %3481 = vmatpush1.xpose.msra.mxu0 0.0
        %3482 = vmatprep.subr.mxu0 0.0
        %3483 = vmatpush1.xpose.msra.mxu0 0.0
        %3484 = vmatprep.subr.mxu0 0.0
        %3485 = vmatpush1.xpose.msra.mxu0 0.0
        %3486 = vmatprep.subr.mxu0 0.0
        %3487 = vmatpush1.xpose.msra.mxu0 0.0
        %3488 = vmatprep.subr.mxu0 0.0
        %3489 = vmatpush1.xpose.msra.mxu0 0.0
        %3490 = vmatprep.mubr.f32.mxu0 0.0
        %3491 = vmatmul.mubr.f32.gmra.mrb[0].mxu0 1.0
        %v3492 = vpop.f32.mrb[0].mxu0
        %v3493 = vadd.f32 %v3403, %v3492
        %v3494 = vpop.f32.mrb[0].mxu0
        %3495 = vdwg.mxu0
        %3496 = vmatprep.subr.mxu0 0.0
        %v3497 = vand.u32 %v960, 4294901760
        %v3498 = vsub.f32 %v960, %v3497
        %3499 = vmatpush1.xpose.msra.mxu0 %v3498
        %3500 = vmatprep.subr.mxu0 0.0
        %v3501 = vand.u32 %v961, 4294901760
        %v3502 = vsub.f32 %v961, %v3501
        %3503 = vmatpush1.xpose.msra.mxu0 %v3502
        %3504 = vmatprep.subr.mxu0 0.0
        %v3505 = vand.u32 %v962, 4294901760
        %v3506 = vsub.f32 %v962, %v3505
        %3507 = vmatpush1.xpose.msra.mxu0 %v3506
        %3508 = vmatprep.subr.mxu0 0.0
        %v3509 = vand.u32 %v963, 4294901760
        %v3510 = vsub.f32 %v963, %v3509
        %3511 = vmatpush1.xpose.msra.mxu0 %v3510
        %3512 = vmatprep.subr.mxu0 0.0
        %3513 = vmatpush1.xpose.msra.mxu0 0.0
        %3514 = vmatprep.subr.mxu0 0.0
        %3515 = vmatpush1.xpose.msra.mxu0 0.0
        %3516 = vmatprep.subr.mxu0 0.0
        %3517 = vmatpush1.xpose.msra.mxu0 0.0
        %3518 = vmatprep.subr.mxu0 0.0
        %3519 = vmatpush1.xpose.msra.mxu0 0.0
        %3520 = vmatprep.subr.mxu0 0.0
        %3521 = vmatpush1.xpose.msra.mxu0 0.0
        %3522 = vmatprep.subr.mxu0 0.0
        %3523 = vmatpush1.xpose.msra.mxu0 0.0
        %3524 = vmatprep.subr.mxu0 0.0
        %3525 = vmatpush1.xpose.msra.mxu0 0.0
        %3526 = vmatprep.subr.mxu0 0.0
        %3527 = vmatpush1.xpose.msra.mxu0 0.0
        %3528 = vmatprep.subr.mxu0 0.0
        %3529 = vmatpush1.xpose.msra.mxu0 0.0
        %3530 = vmatprep.subr.mxu0 0.0
        %3531 = vmatpush1.xpose.msra.mxu0 0.0
        %3532 = vmatprep.subr.mxu0 0.0
        %3533 = vmatpush1.xpose.msra.mxu0 0.0
        %3534 = vmatprep.subr.mxu0 0.0
        %3535 = vmatpush1.xpose.msra.mxu0 0.0
        %3536 = vmatprep.subr.mxu0 0.0
        %3537 = vmatpush1.xpose.msra.mxu0 0.0
        %3538 = vmatprep.subr.mxu0 0.0
        %3539 = vmatpush1.xpose.msra.mxu0 0.0
        %3540 = vmatprep.subr.mxu0 0.0
        %3541 = vmatpush1.xpose.msra.mxu0 0.0
        %3542 = vmatprep.subr.mxu0 0.0
        %3543 = vmatpush1.xpose.msra.mxu0 0.0
        %3544 = vmatprep.subr.mxu0 0.0
        %3545 = vmatpush1.xpose.msra.mxu0 0.0
        %3546 = vmatprep.subr.mxu0 0.0
        %3547 = vmatpush1.xpose.msra.mxu0 0.0
        %3548 = vmatprep.subr.mxu0 0.0
        %3549 = vmatpush1.xpose.msra.mxu0 0.0
        %3550 = vmatprep.subr.mxu0 0.0
        %3551 = vmatpush1.xpose.msra.mxu0 0.0
        %3552 = vmatprep.subr.mxu0 0.0
        %3553 = vmatpush1.xpose.msra.mxu0 0.0
        %3554 = vmatprep.subr.mxu0 0.0
        %3555 = vmatpush1.xpose.msra.mxu0 0.0
        %3556 = vmatprep.subr.mxu0 0.0
        %3557 = vmatpush1.xpose.msra.mxu0 0.0
        %3558 = vmatprep.subr.mxu0 0.0
        %3559 = vmatpush1.xpose.msra.mxu0 0.0
        %3560 = vmatprep.subr.mxu0 0.0
        %3561 = vmatpush1.xpose.msra.mxu0 0.0
        %3562 = vmatprep.subr.mxu0 0.0
        %3563 = vmatpush1.xpose.msra.mxu0 0.0
        %3564 = vmatprep.subr.mxu0 0.0
        %3565 = vmatpush1.xpose.msra.mxu0 0.0
        %3566 = vmatprep.subr.mxu0 0.0
        %3567 = vmatpush1.xpose.msra.mxu0 0.0
        %3568 = vmatprep.mubr.f32.mxu0 0.0
        %3569 = vmatmul.mubr.f32.gmra.mrb[0].mxu0 0.0
        %v3570 = vpop.f32.mrb[0].mxu0
        %v3571 = vadd.f32 %v3493, %v3570
        %v3572 = vpop.f32.mrb[0].mxu0
        %3573 = vdwg.mxu0
        %3574 = vmatprep.subr.mxu0 0.0
        %v3575 = vand.u32 %v960, 4294901760
        %3576 = vmatpush1.xpose.msra.mxu0 %v3575
        %3577 = vmatprep.subr.mxu0 0.0
        %v3578 = vand.u32 %v961, 4294901760
        %3579 = vmatpush1.xpose.msra.mxu0 %v3578
        %3580 = vmatprep.subr.mxu0 0.0
        %v3581 = vand.u32 %v962, 4294901760
        %3582 = vmatpush1.xpose.msra.mxu0 %v3581
        %3583 = vmatprep.subr.mxu0 0.0
        %v3584 = vand.u32 %v963, 4294901760
        %3585 = vmatpush1.xpose.msra.mxu0 %v3584
        %3586 = vmatprep.subr.mxu0 0.0
        %3587 = vmatpush1.xpose.msra.mxu0 0.0
        %3588 = vmatprep.subr.mxu0 0.0
        %3589 = vmatpush1.xpose.msra.mxu0 0.0
        %3590 = vmatprep.subr.mxu0 0.0
        %3591 = vmatpush1.xpose.msra.mxu0 0.0
        %3592 = vmatprep.subr.mxu0 0.0
        %3593 = vmatpush1.xpose.msra.mxu0 0.0
        %3594 = vmatprep.subr.mxu0 0.0
        %3595 = vmatpush1.xpose.msra.mxu0 0.0
        %3596 = vmatprep.subr.mxu0 0.0
        %3597 = vmatpush1.xpose.msra.mxu0 0.0
        %3598 = vmatprep.subr.mxu0 0.0
        %3599 = vmatpush1.xpose.msra.mxu0 0.0
        %3600 = vmatprep.subr.mxu0 0.0
        %3601 = vmatpush1.xpose.msra.mxu0 0.0
        %3602 = vmatprep.subr.mxu0 0.0
        %3603 = vmatpush1.xpose.msra.mxu0 0.0
        %3604 = vmatprep.subr.mxu0 0.0
        %3605 = vmatpush1.xpose.msra.mxu0 0.0
        %3606 = vmatprep.subr.mxu0 0.0
        %3607 = vmatpush1.xpose.msra.mxu0 0.0
        %3608 = vmatprep.subr.mxu0 0.0
        %3609 = vmatpush1.xpose.msra.mxu0 0.0
        %3610 = vmatprep.subr.mxu0 0.0
        %3611 = vmatpush1.xpose.msra.mxu0 0.0
        %3612 = vmatprep.subr.mxu0 0.0
        %3613 = vmatpush1.xpose.msra.mxu0 0.0
        %3614 = vmatprep.subr.mxu0 0.0
        %3615 = vmatpush1.xpose.msra.mxu0 0.0
        %3616 = vmatprep.subr.mxu0 0.0
        %3617 = vmatpush1.xpose.msra.mxu0 0.0
        %3618 = vmatprep.subr.mxu0 0.0
        %3619 = vmatpush1.xpose.msra.mxu0 0.0
        %3620 = vmatprep.subr.mxu0 0.0
        %3621 = vmatpush1.xpose.msra.mxu0 0.0
        %3622 = vmatprep.subr.mxu0 0.0
        %3623 = vmatpush1.xpose.msra.mxu0 0.0
        %3624 = vmatprep.subr.mxu0 0.0
        %3625 = vmatpush1.xpose.msra.mxu0 0.0
        %3626 = vmatprep.subr.mxu0 0.0
        %3627 = vmatpush1.xpose.msra.mxu0 0.0
        %3628 = vmatprep.subr.mxu0 0.0
        %3629 = vmatpush1.xpose.msra.mxu0 0.0
        %3630 = vmatprep.subr.mxu0 0.0
        %3631 = vmatpush1.xpose.msra.mxu0 0.0
        %3632 = vmatprep.subr.mxu0 0.0
        %3633 = vmatpush1.xpose.msra.mxu0 0.0
        %3634 = vmatprep.subr.mxu0 0.0
        %3635 = vmatpush1.xpose.msra.mxu0 0.0
        %3636 = vmatprep.subr.mxu0 0.0
        %3637 = vmatpush1.xpose.msra.mxu0 0.0
        %3638 = vmatprep.subr.mxu0 0.0
        %3639 = vmatpush1.xpose.msra.mxu0 0.0
        %3640 = vmatprep.subr.mxu0 0.0
        %3641 = vmatpush1.xpose.msra.mxu0 0.0
        %3642 = vmatprep.mubr.f32.mxu0 0.0
        %3643 = vmatmul.mubr.f32.gmra.mrb[0].mxu0 0.0
        %v3644 = vpop.f32.mrb[0].mxu0
        %v3645 = vadd.f32 %v3571, %v3644
        %v3646 = vpop.f32.mrb[0].mxu0
        %3647 = vdwg.mxu0
        %3648 = vmatprep.subr.mxu0 0.0
        %v3649 = vand.u32 %v960, 4294901760
        %v3650 = vsub.f32 %v960, %v3649
        %v3651 = vand.u32 %v3650, 4294901760
        %3652 = vmatpush1.xpose.msra.mxu0 %v3651
        %3653 = vmatprep.subr.mxu0 0.0
        %v3654 = vand.u32 %v961, 4294901760
        %v3655 = vsub.f32 %v961, %v3654
        %v3656 = vand.u32 %v3655, 4294901760
        %3657 = vmatpush1.xpose.msra.mxu0 %v3656
        %3658 = vmatprep.subr.mxu0 0.0
        %v3659 = vand.u32 %v962, 4294901760
        %v3660 = vsub.f32 %v962, %v3659
        %v3661 = vand.u32 %v3660, 4294901760
        %3662 = vmatpush1.xpose.msra.mxu0 %v3661
        %3663 = vmatprep.subr.mxu0 0.0
        %v3664 = vand.u32 %v963, 4294901760
        %v3665 = vsub.f32 %v963, %v3664
        %v3666 = vand.u32 %v3665, 4294901760
        %3667 = vmatpush1.xpose.msra.mxu0 %v3666
        %3668 = vmatprep.subr.mxu0 0.0
        %3669 = vmatpush1.xpose.msra.mxu0 0.0
        %3670 = vmatprep.subr.mxu0 0.0
        %3671 = vmatpush1.xpose.msra.mxu0 0.0
        %3672 = vmatprep.subr.mxu0 0.0
        %3673 = vmatpush1.xpose.msra.mxu0 0.0
        %3674 = vmatprep.subr.mxu0 0.0
        %3675 = vmatpush1.xpose.msra.mxu0 0.0
        %3676 = vmatprep.subr.mxu0 0.0
        %3677 = vmatpush1.xpose.msra.mxu0 0.0
        %3678 = vmatprep.subr.mxu0 0.0
        %3679 = vmatpush1.xpose.msra.mxu0 0.0
        %3680 = vmatprep.subr.mxu0 0.0
        %3681 = vmatpush1.xpose.msra.mxu0 0.0
        %3682 = vmatprep.subr.mxu0 0.0
        %3683 = vmatpush1.xpose.msra.mxu0 0.0
        %3684 = vmatprep.subr.mxu0 0.0
        %3685 = vmatpush1.xpose.msra.mxu0 0.0
        %3686 = vmatprep.subr.mxu0 0.0
        %3687 = vmatpush1.xpose.msra.mxu0 0.0
        %3688 = vmatprep.subr.mxu0 0.0
        %3689 = vmatpush1.xpose.msra.mxu0 0.0
        %3690 = vmatprep.subr.mxu0 0.0
        %3691 = vmatpush1.xpose.msra.mxu0 0.0
        %3692 = vmatprep.subr.mxu0 0.0
        %3693 = vmatpush1.xpose.msra.mxu0 0.0
        %3694 = vmatprep.subr.mxu0 0.0
        %3695 = vmatpush1.xpose.msra.mxu0 0.0
        %3696 = vmatprep.subr.mxu0 0.0
        %3697 = vmatpush1.xpose.msra.mxu0 0.0
        %3698 = vmatprep.subr.mxu0 0.0
        %3699 = vmatpush1.xpose.msra.mxu0 0.0
        %3700 = vmatprep.subr.mxu0 0.0
        %3701 = vmatpush1.xpose.msra.mxu0 0.0
        %3702 = vmatprep.subr.mxu0 0.0
        %3703 = vmatpush1.xpose.msra.mxu0 0.0
        %3704 = vmatprep.subr.mxu0 0.0
        %3705 = vmatpush1.xpose.msra.mxu0 0.0
        %3706 = vmatprep.subr.mxu0 0.0
        %3707 = vmatpush1.xpose.msra.mxu0 0.0
        %3708 = vmatprep.subr.mxu0 0.0
        %3709 = vmatpush1.xpose.msra.mxu0 0.0
        %3710 = vmatprep.subr.mxu0 0.0
        %3711 = vmatpush1.xpose.msra.mxu0 0.0
        %3712 = vmatprep.subr.mxu0 0.0
        %3713 = vmatpush1.xpose.msra.mxu0 0.0
        %3714 = vmatprep.subr.mxu0 0.0
        %3715 = vmatpush1.xpose.msra.mxu0 0.0
        %3716 = vmatprep.subr.mxu0 0.0
        %3717 = vmatpush1.xpose.msra.mxu0 0.0
        %3718 = vmatprep.subr.mxu0 0.0
        %3719 = vmatpush1.xpose.msra.mxu0 0.0
        %3720 = vmatprep.subr.mxu0 0.0
        %3721 = vmatpush1.xpose.msra.mxu0 0.0
        %3722 = vmatprep.subr.mxu0 0.0
        %3723 = vmatpush1.xpose.msra.mxu0 0.0
        %3724 = vmatprep.mubr.f32.mxu0 0.0
        %3725 = vmatmul.mubr.f32.gmra.mrb[0].mxu0 1.0
        %v3726 = vpop.f32.mrb[0].mxu0
        %v3727 = vadd.f32 %v3645, %v3726
        %v3728 = vpop.f32.mrb[0].mxu0
        %3729 = vdwg.mxu0
        %3730 = vmatprep.subr.mxu0 0.0
        %v3731 = vand.u32 %v960, 4294901760
        %3732 = vmatpush1.xpose.msra.mxu0 %v3731
        %3733 = vmatprep.subr.mxu0 0.0
        %v3734 = vand.u32 %v961, 4294901760
        %3735 = vmatpush1.xpose.msra.mxu0 %v3734
        %3736 = vmatprep.subr.mxu0 0.0
        %v3737 = vand.u32 %v962, 4294901760
        %3738 = vmatpush1.xpose.msra.mxu0 %v3737
        %3739 = vmatprep.subr.mxu0 0.0
        %v3740 = vand.u32 %v963, 4294901760
        %3741 = vmatpush1.xpose.msra.mxu0 %v3740
        %3742 = vmatprep.subr.mxu0 0.0
        %3743 = vmatpush1.xpose.msra.mxu0 0.0
        %3744 = vmatprep.subr.mxu0 0.0
        %3745 = vmatpush1.xpose.msra.mxu0 0.0
        %3746 = vmatprep.subr.mxu0 0.0
        %3747 = vmatpush1.xpose.msra.mxu0 0.0
        %3748 = vmatprep.subr.mxu0 0.0
        %3749 = vmatpush1.xpose.msra.mxu0 0.0
        %3750 = vmatprep.subr.mxu0 0.0
        %3751 = vmatpush1.xpose.msra.mxu0 0.0
        %3752 = vmatprep.subr.mxu0 0.0
        %3753 = vmatpush1.xpose.msra.mxu0 0.0
        %3754 = vmatprep.subr.mxu0 0.0
        %3755 = vmatpush1.xpose.msra.mxu0 0.0
        %3756 = vmatprep.subr.mxu0 0.0
        %3757 = vmatpush1.xpose.msra.mxu0 0.0
        %3758 = vmatprep.subr.mxu0 0.0
        %3759 = vmatpush1.xpose.msra.mxu0 0.0
        %3760 = vmatprep.subr.mxu0 0.0
        %3761 = vmatpush1.xpose.msra.mxu0 0.0
        %3762 = vmatprep.subr.mxu0 0.0
        %3763 = vmatpush1.xpose.msra.mxu0 0.0
        %3764 = vmatprep.subr.mxu0 0.0
        %3765 = vmatpush1.xpose.msra.mxu0 0.0
        %3766 = vmatprep.subr.mxu0 0.0
        %3767 = vmatpush1.xpose.msra.mxu0 0.0
        %3768 = vmatprep.subr.mxu0 0.0
        %3769 = vmatpush1.xpose.msra.mxu0 0.0
        %3770 = vmatprep.subr.mxu0 0.0
        %3771 = vmatpush1.xpose.msra.mxu0 0.0
        %3772 = vmatprep.subr.mxu0 0.0
        %3773 = vmatpush1.xpose.msra.mxu0 0.0
        %3774 = vmatprep.subr.mxu0 0.0
        %3775 = vmatpush1.xpose.msra.mxu0 0.0
        %3776 = vmatprep.subr.mxu0 0.0
        %3777 = vmatpush1.xpose.msra.mxu0 0.0
        %3778 = vmatprep.subr.mxu0 0.0
        %3779 = vmatpush1.xpose.msra.mxu0 0.0
        %3780 = vmatprep.subr.mxu0 0.0
        %3781 = vmatpush1.xpose.msra.mxu0 0.0
        %3782 = vmatprep.subr.mxu0 0.0
        %3783 = vmatpush1.xpose.msra.mxu0 0.0
        %3784 = vmatprep.subr.mxu0 0.0
        %3785 = vmatpush1.xpose.msra.mxu0 0.0
        %3786 = vmatprep.subr.mxu0 0.0
        %3787 = vmatpush1.xpose.msra.mxu0 0.0
        %3788 = vmatprep.subr.mxu0 0.0
        %3789 = vmatpush1.xpose.msra.mxu0 0.0
        %3790 = vmatprep.subr.mxu0 0.0
        %3791 = vmatpush1.xpose.msra.mxu0 0.0
        %3792 = vmatprep.subr.mxu0 0.0
        %3793 = vmatpush1.xpose.msra.mxu0 0.0
        %3794 = vmatprep.subr.mxu0 0.0
        %3795 = vmatpush1.xpose.msra.mxu0 0.0
        %3796 = vmatprep.subr.mxu0 0.0
        %3797 = vmatpush1.xpose.msra.mxu0 0.0
        %3798 = vmatprep.mubr.f32.mxu0 0.0
        %3799 = vmatmul.mubr.f32.gmra.mrb[0].mxu0 1.0
        %v3800 = vpop.f32.mrb[0].mxu0
        %v3801 = vadd.f32 %v3727, %v3800
        %v3802 = vpop.f32.mrb[0].mxu0
        %3803 = vdwg.mxu0
        %3804 = vmatprep.subr.mxu0 0.0
        %v3805 = vand.u32 %v964, 4294901760
        %3806 = vmatpush1.xpose.msra.mxu0 %v3805
        %3807 = vmatprep.subr.mxu0 0.0
        %v3808 = vand.u32 %v965, 4294901760
        %3809 = vmatpush1.xpose.msra.mxu0 %v3808
        %3810 = vmatprep.subr.mxu0 0.0
        %v3811 = vand.u32 %v966, 4294901760
        %3812 = vmatpush1.xpose.msra.mxu0 %v3811
        %3813 = vmatprep.subr.mxu0 0.0
        %v3814 = vand.u32 %v967, 4294901760
        %3815 = vmatpush1.xpose.msra.mxu0 %v3814
        %3816 = vmatprep.subr.mxu0 0.0
        %3817 = vmatpush1.xpose.msra.mxu0 0.0
        %3818 = vmatprep.subr.mxu0 0.0
        %3819 = vmatpush1.xpose.msra.mxu0 0.0
        %3820 = vmatprep.subr.mxu0 0.0
        %3821 = vmatpush1.xpose.msra.mxu0 0.0
        %3822 = vmatprep.subr.mxu0 0.0
        %3823 = vmatpush1.xpose.msra.mxu0 0.0
        %3824 = vmatprep.subr.mxu0 0.0
        %3825 = vmatpush1.xpose.msra.mxu0 0.0
        %3826 = vmatprep.subr.mxu0 0.0
        %3827 = vmatpush1.xpose.msra.mxu0 0.0
        %3828 = vmatprep.subr.mxu0 0.0
        %3829 = vmatpush1.xpose.msra.mxu0 0.0
        %3830 = vmatprep.subr.mxu0 0.0
        %3831 = vmatpush1.xpose.msra.mxu0 0.0
        %3832 = vmatprep.subr.mxu0 0.0
        %3833 = vmatpush1.xpose.msra.mxu0 0.0
        %3834 = vmatprep.subr.mxu0 0.0
        %3835 = vmatpush1.xpose.msra.mxu0 0.0
        %3836 = vmatprep.subr.mxu0 0.0
        %3837 = vmatpush1.xpose.msra.mxu0 0.0
        %3838 = vmatprep.subr.mxu0 0.0
        %3839 = vmatpush1.xpose.msra.mxu0 0.0
        %3840 = vmatprep.subr.mxu0 0.0
        %3841 = vmatpush1.xpose.msra.mxu0 0.0
        %3842 = vmatprep.subr.mxu0 0.0
        %3843 = vmatpush1.xpose.msra.mxu0 0.0
        %3844 = vmatprep.subr.mxu0 0.0
        %3845 = vmatpush1.xpose.msra.mxu0 0.0
        %3846 = vmatprep.subr.mxu0 0.0
        %3847 = vmatpush1.xpose.msra.mxu0 0.0
        %3848 = vmatprep.subr.mxu0 0.0
        %3849 = vmatpush1.xpose.msra.mxu0 0.0
        %3850 = vmatprep.subr.mxu0 0.0
        %3851 = vmatpush1.xpose.msra.mxu0 0.0
        %3852 = vmatprep.subr.mxu0 0.0
        %3853 = vmatpush1.xpose.msra.mxu0 0.0
        %3854 = vmatprep.subr.mxu0 0.0
        %3855 = vmatpush1.xpose.msra.mxu0 0.0
        %3856 = vmatprep.subr.mxu0 0.0
        %3857 = vmatpush1.xpose.msra.mxu0 0.0
        %3858 = vmatprep.subr.mxu0 0.0
        %3859 = vmatpush1.xpose.msra.mxu0 0.0
        %3860 = vmatprep.subr.mxu0 0.0
        %3861 = vmatpush1.xpose.msra.mxu0 0.0
        %3862 = vmatprep.subr.mxu0 0.0
        %3863 = vmatpush1.xpose.msra.mxu0 0.0
        %3864 = vmatprep.subr.mxu0 0.0
        %3865 = vmatpush1.xpose.msra.mxu0 0.0
        %3866 = vmatprep.subr.mxu0 0.0
        %3867 = vmatpush1.xpose.msra.mxu0 0.0
        %3868 = vmatprep.subr.mxu0 0.0
        %3869 = vmatpush1.xpose.msra.mxu0 0.0
        %3870 = vmatprep.subr.mxu0 0.0
        %3871 = vmatpush1.xpose.msra.mxu0 0.0
        %3872 = vmatprep.mubr.f32.mxu0 0.0
        %3873 = vmatmul.mubr.f32.gmra.mrb[0].mxu0 0.0
        %v3874 = vpop.f32.mrb[0].mxu0
        %v3875 = vadd.f32 0.0, %v3874
        %v3876 = vpop.f32.mrb[0].mxu0
        %3877 = vdwg.mxu0
        %3878 = vmatprep.subr.mxu0 0.0
        %v3879 = vand.u32 %v964, 4294901760
        %v3880 = vsub.f32 %v964, %v3879
        %v3881 = vand.u32 %v3880, 4294901760
        %v3882 = vsub.f32 %v3880, %v3881
        %v3883 = vand.u32 %v3882, 4294901760
        %3884 = vmatpush1.xpose.msra.mxu0 %v3883
        %3885 = vmatprep.subr.mxu0 0.0
        %v3886 = vand.u32 %v965, 4294901760
        %v3887 = vsub.f32 %v965, %v3886
        %v3888 = vand.u32 %v3887, 4294901760
        %v3889 = vsub.f32 %v3887, %v3888
        %v3890 = vand.u32 %v3889, 4294901760
        %3891 = vmatpush1.xpose.msra.mxu0 %v3890
        %3892 = vmatprep.subr.mxu0 0.0
        %v3893 = vand.u32 %v966, 4294901760
        %v3894 = vsub.f32 %v966, %v3893
        %v3895 = vand.u32 %v3894, 4294901760
        %v3896 = vsub.f32 %v3894, %v3895
        %v3897 = vand.u32 %v3896, 4294901760
        %3898 = vmatpush1.xpose.msra.mxu0 %v3897
        %3899 = vmatprep.subr.mxu0 0.0
        %v3900 = vand.u32 %v967, 4294901760
        %v3901 = vsub.f32 %v967, %v3900
        %v3902 = vand.u32 %v3901, 4294901760
        %v3903 = vsub.f32 %v3901, %v3902
        %v3904 = vand.u32 %v3903, 4294901760
        %3905 = vmatpush1.xpose.msra.mxu0 %v3904
        %3906 = vmatprep.subr.mxu0 0.0
        %3907 = vmatpush1.xpose.msra.mxu0 0.0
        %3908 = vmatprep.subr.mxu0 0.0
        %3909 = vmatpush1.xpose.msra.mxu0 0.0
        %3910 = vmatprep.subr.mxu0 0.0
        %3911 = vmatpush1.xpose.msra.mxu0 0.0
        %3912 = vmatprep.subr.mxu0 0.0
        %3913 = vmatpush1.xpose.msra.mxu0 0.0
        %3914 = vmatprep.subr.mxu0 0.0
        %3915 = vmatpush1.xpose.msra.mxu0 0.0
        %3916 = vmatprep.subr.mxu0 0.0
        %3917 = vmatpush1.xpose.msra.mxu0 0.0
        %3918 = vmatprep.subr.mxu0 0.0
        %3919 = vmatpush1.xpose.msra.mxu0 0.0
        %3920 = vmatprep.subr.mxu0 0.0
        %3921 = vmatpush1.xpose.msra.mxu0 0.0
        %3922 = vmatprep.subr.mxu0 0.0
        %3923 = vmatpush1.xpose.msra.mxu0 0.0
        %3924 = vmatprep.subr.mxu0 0.0
        %3925 = vmatpush1.xpose.msra.mxu0 0.0
        %3926 = vmatprep.subr.mxu0 0.0
        %3927 = vmatpush1.xpose.msra.mxu0 0.0
        %3928 = vmatprep.subr.mxu0 0.0
        %3929 = vmatpush1.xpose.msra.mxu0 0.0
        %3930 = vmatprep.subr.mxu0 0.0
        %3931 = vmatpush1.xpose.msra.mxu0 0.0
        %3932 = vmatprep.subr.mxu0 0.0
        %3933 = vmatpush1.xpose.msra.mxu0 0.0
        %3934 = vmatprep.subr.mxu0 0.0
        %3935 = vmatpush1.xpose.msra.mxu0 0.0
        %3936 = vmatprep.subr.mxu0 0.0
        %3937 = vmatpush1.xpose.msra.mxu0 0.0
        %3938 = vmatprep.subr.mxu0 0.0
        %3939 = vmatpush1.xpose.msra.mxu0 0.0
        %3940 = vmatprep.subr.mxu0 0.0
        %3941 = vmatpush1.xpose.msra.mxu0 0.0
        %3942 = vmatprep.subr.mxu0 0.0
        %3943 = vmatpush1.xpose.msra.mxu0 0.0
        %3944 = vmatprep.subr.mxu0 0.0
        %3945 = vmatpush1.xpose.msra.mxu0 0.0
        %3946 = vmatprep.subr.mxu0 0.0
        %3947 = vmatpush1.xpose.msra.mxu0 0.0
        %3948 = vmatprep.subr.mxu0 0.0
        %3949 = vmatpush1.xpose.msra.mxu0 0.0
        %3950 = vmatprep.subr.mxu0 0.0
        %3951 = vmatpush1.xpose.msra.mxu0 0.0
        %3952 = vmatprep.subr.mxu0 0.0
        %3953 = vmatpush1.xpose.msra.mxu0 0.0
        %3954 = vmatprep.subr.mxu0 0.0
        %3955 = vmatpush1.xpose.msra.mxu0 0.0
        %3956 = vmatprep.subr.mxu0 0.0
        %3957 = vmatpush1.xpose.msra.mxu0 0.0
        %3958 = vmatprep.subr.mxu0 0.0
        %3959 = vmatpush1.xpose.msra.mxu0 0.0
        %3960 = vmatprep.subr.mxu0 0.0
        %3961 = vmatpush1.xpose.msra.mxu0 0.0
        %3962 = vmatprep.mubr.f32.mxu0 0.0
        %3963 = vmatmul.mubr.f32.gmra.mrb[0].mxu0 1.0
        %v3964 = vpop.f32.mrb[0].mxu0
        %v3965 = vadd.f32 %v3875, %v3964
        %v3966 = vpop.f32.mrb[0].mxu0
        %3967 = vdwg.mxu0
        %3968 = vmatprep.subr.mxu0 0.0
        %v3969 = vand.u32 %v964, 4294901760
        %v3970 = vsub.f32 %v964, %v3969
        %3971 = vmatpush1.xpose.msra.mxu0 %v3970
        %3972 = vmatprep.subr.mxu0 0.0
        %v3973 = vand.u32 %v965, 4294901760
        %v3974 = vsub.f32 %v965, %v3973
        %3975 = vmatpush1.xpose.msra.mxu0 %v3974
        %3976 = vmatprep.subr.mxu0 0.0
        %v3977 = vand.u32 %v966, 4294901760
        %v3978 = vsub.f32 %v966, %v3977
        %3979 = vmatpush1.xpose.msra.mxu0 %v3978
        %3980 = vmatprep.subr.mxu0 0.0
        %v3981 = vand.u32 %v967, 4294901760
        %v3982 = vsub.f32 %v967, %v3981
        %3983 = vmatpush1.xpose.msra.mxu0 %v3982
        %3984 = vmatprep.subr.mxu0 0.0
        %3985 = vmatpush1.xpose.msra.mxu0 0.0
        %3986 = vmatprep.subr.mxu0 0.0
        %3987 = vmatpush1.xpose.msra.mxu0 0.0
        %3988 = vmatprep.subr.mxu0 0.0
        %3989 = vmatpush1.xpose.msra.mxu0 0.0
        %3990 = vmatprep.subr.mxu0 0.0
        %3991 = vmatpush1.xpose.msra.mxu0 0.0
        %3992 = vmatprep.subr.mxu0 0.0
        %3993 = vmatpush1.xpose.msra.mxu0 0.0
        %3994 = vmatprep.subr.mxu0 0.0
        %3995 = vmatpush1.xpose.msra.mxu0 0.0
        %3996 = vmatprep.subr.mxu0 0.0
        %3997 = vmatpush1.xpose.msra.mxu0 0.0
        %3998 = vmatprep.subr.mxu0 0.0
        %3999 = vmatpush1.xpose.msra.mxu0 0.0
        %4000 = vmatprep.subr.mxu0 0.0
        %4001 = vmatpush1.xpose.msra.mxu0 0.0
        %4002 = vmatprep.subr.mxu0 0.0
        %4003 = vmatpush1.xpose.msra.mxu0 0.0
        %4004 = vmatprep.subr.mxu0 0.0
        %4005 = vmatpush1.xpose.msra.mxu0 0.0
        %4006 = vmatprep.subr.mxu0 0.0
        %4007 = vmatpush1.xpose.msra.mxu0 0.0
        %4008 = vmatprep.subr.mxu0 0.0
        %4009 = vmatpush1.xpose.msra.mxu0 0.0
        %4010 = vmatprep.subr.mxu0 0.0
        %4011 = vmatpush1.xpose.msra.mxu0 0.0
        %4012 = vmatprep.subr.mxu0 0.0
        %4013 = vmatpush1.xpose.msra.mxu0 0.0
        %4014 = vmatprep.subr.mxu0 0.0
        %4015 = vmatpush1.xpose.msra.mxu0 0.0
        %4016 = vmatprep.subr.mxu0 0.0
        %4017 = vmatpush1.xpose.msra.mxu0 0.0
        %4018 = vmatprep.subr.mxu0 0.0
        %4019 = vmatpush1.xpose.msra.mxu0 0.0
        %4020 = vmatprep.subr.mxu0 0.0
        %4021 = vmatpush1.xpose.msra.mxu0 0.0
        %4022 = vmatprep.subr.mxu0 0.0
        %4023 = vmatpush1.xpose.msra.mxu0 0.0
        %4024 = vmatprep.subr.mxu0 0.0
        %4025 = vmatpush1.xpose.msra.mxu0 0.0
        %4026 = vmatprep.subr.mxu0 0.0
        %4027 = vmatpush1.xpose.msra.mxu0 0.0
        %4028 = vmatprep.subr.mxu0 0.0
        %4029 = vmatpush1.xpose.msra.mxu0 0.0
        %4030 = vmatprep.subr.mxu0 0.0
        %4031 = vmatpush1.xpose.msra.mxu0 0.0
        %4032 = vmatprep.subr.mxu0 0.0
        %4033 = vmatpush1.xpose.msra.mxu0 0.0
        %4034 = vmatprep.subr.mxu0 0.0
        %4035 = vmatpush1.xpose.msra.mxu0 0.0
        %4036 = vmatprep.subr.mxu0 0.0
        %4037 = vmatpush1.xpose.msra.mxu0 0.0
        %4038 = vmatprep.subr.mxu0 0.0
        %4039 = vmatpush1.xpose.msra.mxu0 0.0
        %4040 = vmatprep.mubr.f32.mxu0 0.0
        %4041 = vmatmul.mubr.f32.gmra.mrb[0].mxu0 0.0
        %v4042 = vpop.f32.mrb[0].mxu0
        %v4043 = vadd.f32 %v3965, %v4042
        %v4044 = vpop.f32.mrb[0].mxu0
        %4045 = vdwg.mxu0
        %4046 = vmatprep.subr.mxu0 0.0
        %v4047 = vand.u32 %v964, 4294901760
        %4048 = vmatpush1.xpose.msra.mxu0 %v4047
        %4049 = vmatprep.subr.mxu0 0.0
        %v4050 = vand.u32 %v965, 4294901760
        %4051 = vmatpush1.xpose.msra.mxu0 %v4050
        %4052 = vmatprep.subr.mxu0 0.0
        %v4053 = vand.u32 %v966, 4294901760
        %4054 = vmatpush1.xpose.msra.mxu0 %v4053
        %4055 = vmatprep.subr.mxu0 0.0
        %v4056 = vand.u32 %v967, 4294901760
        %4057 = vmatpush1.xpose.msra.mxu0 %v4056
        %4058 = vmatprep.subr.mxu0 0.0
        %4059 = vmatpush1.xpose.msra.mxu0 0.0
        %4060 = vmatprep.subr.mxu0 0.0
        %4061 = vmatpush1.xpose.msra.mxu0 0.0
        %4062 = vmatprep.subr.mxu0 0.0
        %4063 = vmatpush1.xpose.msra.mxu0 0.0
        %4064 = vmatprep.subr.mxu0 0.0
        %4065 = vmatpush1.xpose.msra.mxu0 0.0
        %4066 = vmatprep.subr.mxu0 0.0
        %4067 = vmatpush1.xpose.msra.mxu0 0.0
        %4068 = vmatprep.subr.mxu0 0.0
        %4069 = vmatpush1.xpose.msra.mxu0 0.0
        %4070 = vmatprep.subr.mxu0 0.0
        %4071 = vmatpush1.xpose.msra.mxu0 0.0
        %4072 = vmatprep.subr.mxu0 0.0
        %4073 = vmatpush1.xpose.msra.mxu0 0.0
        %4074 = vmatprep.subr.mxu0 0.0
        %4075 = vmatpush1.xpose.msra.mxu0 0.0
        %4076 = vmatprep.subr.mxu0 0.0
        %4077 = vmatpush1.xpose.msra.mxu0 0.0
        %4078 = vmatprep.subr.mxu0 0.0
        %4079 = vmatpush1.xpose.msra.mxu0 0.0
        %4080 = vmatprep.subr.mxu0 0.0
        %4081 = vmatpush1.xpose.msra.mxu0 0.0
        %4082 = vmatprep.subr.mxu0 0.0
        %4083 = vmatpush1.xpose.msra.mxu0 0.0
        %4084 = vmatprep.subr.mxu0 0.0
        %4085 = vmatpush1.xpose.msra.mxu0 0.0
        %4086 = vmatprep.subr.mxu0 0.0
        %4087 = vmatpush1.xpose.msra.mxu0 0.0
        %4088 = vmatprep.subr.mxu0 0.0
        %4089 = vmatpush1.xpose.msra.mxu0 0.0
        %4090 = vmatprep.subr.mxu0 0.0
        %4091 = vmatpush1.xpose.msra.mxu0 0.0
        %4092 = vmatprep.subr.mxu0 0.0
        %4093 = vmatpush1.xpose.msra.mxu0 0.0
        %4094 = vmatprep.subr.mxu0 0.0
        %4095 = vmatpush1.xpose.msra.mxu0 0.0
        %4096 = vmatprep.subr.mxu0 0.0
        %4097 = vmatpush1.xpose.msra.mxu0 0.0
        %4098 = vmatprep.subr.mxu0 0.0
        %4099 = vmatpush1.xpose.msra.mxu0 0.0
        %4100 = vmatprep.subr.mxu0 0.0
        %4101 = vmatpush1.xpose.msra.mxu0 0.0
        %4102 = vmatprep.subr.mxu0 0.0
        %4103 = vmatpush1.xpose.msra.mxu0 0.0
        %4104 = vmatprep.subr.mxu0 0.0
        %4105 = vmatpush1.xpose.msra.mxu0 0.0
        %4106 = vmatprep.subr.mxu0 0.0
        %4107 = vmatpush1.xpose.msra.mxu0 0.0
        %4108 = vmatprep.subr.mxu0 0.0
        %4109 = vmatpush1.xpose.msra.mxu0 0.0
        %4110 = vmatprep.subr.mxu0 0.0
        %4111 = vmatpush1.xpose.msra.mxu0 0.0
        %4112 = vmatprep.subr.mxu0 0.0
        %4113 = vmatpush1.xpose.msra.mxu0 0.0
        %4114 = vmatprep.mubr.f32.mxu0 0.0
        %4115 = vmatmul.mubr.f32.gmra.mrb[0].mxu0 0.0
        %v4116 = vpop.f32.mrb[0].mxu0
        %v4117 = vadd.f32 %v4043, %v4116
        %v4118 = vpop.f32.mrb[0].mxu0
        %4119 = vdwg.mxu0
        %4120 = vmatprep.subr.mxu0 0.0
        %v4121 = vand.u32 %v964, 4294901760
        %v4122 = vsub.f32 %v964, %v4121
        %v4123 = vand.u32 %v4122, 4294901760
        %4124 = vmatpush1.xpose.msra.mxu0 %v4123
        %4125 = vmatprep.subr.mxu0 0.0
        %v4126 = vand.u32 %v965, 4294901760
        %v4127 = vsub.f32 %v965, %v4126
        %v4128 = vand.u32 %v4127, 4294901760
        %4129 = vmatpush1.xpose.msra.mxu0 %v4128
        %4130 = vmatprep.subr.mxu0 0.0
        %v4131 = vand.u32 %v966, 4294901760
        %v4132 = vsub.f32 %v966, %v4131
        %v4133 = vand.u32 %v4132, 4294901760
        %4134 = vmatpush1.xpose.msra.mxu0 %v4133
        %4135 = vmatprep.subr.mxu0 0.0
        %v4136 = vand.u32 %v967, 4294901760
        %v4137 = vsub.f32 %v967, %v4136
        %v4138 = vand.u32 %v4137, 4294901760
        %4139 = vmatpush1.xpose.msra.mxu0 %v4138
        %4140 = vmatprep.subr.mxu0 0.0
        %4141 = vmatpush1.xpose.msra.mxu0 0.0
        %4142 = vmatprep.subr.mxu0 0.0
        %4143 = vmatpush1.xpose.msra.mxu0 0.0
        %4144 = vmatprep.subr.mxu0 0.0
        %4145 = vmatpush1.xpose.msra.mxu0 0.0
        %4146 = vmatprep.subr.mxu0 0.0
        %4147 = vmatpush1.xpose.msra.mxu0 0.0
        %4148 = vmatprep.subr.mxu0 0.0
        %4149 = vmatpush1.xpose.msra.mxu0 0.0
        %4150 = vmatprep.subr.mxu0 0.0
        %4151 = vmatpush1.xpose.msra.mxu0 0.0
        %4152 = vmatprep.subr.mxu0 0.0
        %4153 = vmatpush1.xpose.msra.mxu0 0.0
        %4154 = vmatprep.subr.mxu0 0.0
        %4155 = vmatpush1.xpose.msra.mxu0 0.0
        %4156 = vmatprep.subr.mxu0 0.0
        %4157 = vmatpush1.xpose.msra.mxu0 0.0
        %4158 = vmatprep.subr.mxu0 0.0
        %4159 = vmatpush1.xpose.msra.mxu0 0.0
        %4160 = vmatprep.subr.mxu0 0.0
        %4161 = vmatpush1.xpose.msra.mxu0 0.0
        %4162 = vmatprep.subr.mxu0 0.0
        %4163 = vmatpush1.xpose.msra.mxu0 0.0
        %4164 = vmatprep.subr.mxu0 0.0
        %4165 = vmatpush1.xpose.msra.mxu0 0.0
        %4166 = vmatprep.subr.mxu0 0.0
        %4167 = vmatpush1.xpose.msra.mxu0 0.0
        %4168 = vmatprep.subr.mxu0 0.0
        %4169 = vmatpush1.xpose.msra.mxu0 0.0
        %4170 = vmatprep.subr.mxu0 0.0
        %4171 = vmatpush1.xpose.msra.mxu0 0.0
        %4172 = vmatprep.subr.mxu0 0.0
        %4173 = vmatpush1.xpose.msra.mxu0 0.0
        %4174 = vmatprep.subr.mxu0 0.0
        %4175 = vmatpush1.xpose.msra.mxu0 0.0
        %4176 = vmatprep.subr.mxu0 0.0
        %4177 = vmatpush1.xpose.msra.mxu0 0.0
        %4178 = vmatprep.subr.mxu0 0.0
        %4179 = vmatpush1.xpose.msra.mxu0 0.0
        %4180 = vmatprep.subr.mxu0 0.0
        %4181 = vmatpush1.xpose.msra.mxu0 0.0
        %4182 = vmatprep.subr.mxu0 0.0
        %4183 = vmatpush1.xpose.msra.mxu0 0.0
        %4184 = vmatprep.subr.mxu0 0.0
        %4185 = vmatpush1.xpose.msra.mxu0 0.0
        %4186 = vmatprep.subr.mxu0 0.0
        %4187 = vmatpush1.xpose.msra.mxu0 0.0
        %4188 = vmatprep.subr.mxu0 0.0
        %4189 = vmatpush1.xpose.msra.mxu0 0.0
        %4190 = vmatprep.subr.mxu0 0.0
        %4191 = vmatpush1.xpose.msra.mxu0 0.0
        %4192 = vmatprep.subr.mxu0 0.0
        %4193 = vmatpush1.xpose.msra.mxu0 0.0
        %4194 = vmatprep.subr.mxu0 0.0
        %4195 = vmatpush1.xpose.msra.mxu0 0.0
        %4196 = vmatprep.mubr.f32.mxu0 0.0
        %4197 = vmatmul.mubr.f32.gmra.mrb[0].mxu0 1.0
        %v4198 = vpop.f32.mrb[0].mxu0
        %v4199 = vadd.f32 %v4117, %v4198
        %v4200 = vpop.f32.mrb[0].mxu0
        %4201 = vdwg.mxu0
        %4202 = vmatprep.subr.mxu0 0.0
        %v4203 = vand.u32 %v964, 4294901760
        %4204 = vmatpush1.xpose.msra.mxu0 %v4203
        %4205 = vmatprep.subr.mxu0 0.0
        %v4206 = vand.u32 %v965, 4294901760
        %4207 = vmatpush1.xpose.msra.mxu0 %v4206
        %4208 = vmatprep.subr.mxu0 0.0
        %v4209 = vand.u32 %v966, 4294901760
        %4210 = vmatpush1.xpose.msra.mxu0 %v4209
        %4211 = vmatprep.subr.mxu0 0.0
        %v4212 = vand.u32 %v967, 4294901760
        %4213 = vmatpush1.xpose.msra.mxu0 %v4212
        %4214 = vmatprep.subr.mxu0 0.0
        %4215 = vmatpush1.xpose.msra.mxu0 0.0
        %4216 = vmatprep.subr.mxu0 0.0
        %4217 = vmatpush1.xpose.msra.mxu0 0.0
        %4218 = vmatprep.subr.mxu0 0.0
        %4219 = vmatpush1.xpose.msra.mxu0 0.0
        %4220 = vmatprep.subr.mxu0 0.0
        %4221 = vmatpush1.xpose.msra.mxu0 0.0
        %4222 = vmatprep.subr.mxu0 0.0
        %4223 = vmatpush1.xpose.msra.mxu0 0.0
        %4224 = vmatprep.subr.mxu0 0.0
        %4225 = vmatpush1.xpose.msra.mxu0 0.0
        %4226 = vmatprep.subr.mxu0 0.0
        %4227 = vmatpush1.xpose.msra.mxu0 0.0
        %4228 = vmatprep.subr.mxu0 0.0
        %4229 = vmatpush1.xpose.msra.mxu0 0.0
        %4230 = vmatprep.subr.mxu0 0.0
        %4231 = vmatpush1.xpose.msra.mxu0 0.0
        %4232 = vmatprep.subr.mxu0 0.0
        %4233 = vmatpush1.xpose.msra.mxu0 0.0
        %4234 = vmatprep.subr.mxu0 0.0
        %4235 = vmatpush1.xpose.msra.mxu0 0.0
        %4236 = vmatprep.subr.mxu0 0.0
        %4237 = vmatpush1.xpose.msra.mxu0 0.0
        %4238 = vmatprep.subr.mxu0 0.0
        %4239 = vmatpush1.xpose.msra.mxu0 0.0
        %4240 = vmatprep.subr.mxu0 0.0
        %4241 = vmatpush1.xpose.msra.mxu0 0.0
        %4242 = vmatprep.subr.mxu0 0.0
        %4243 = vmatpush1.xpose.msra.mxu0 0.0
        %4244 = vmatprep.subr.mxu0 0.0
        %4245 = vmatpush1.xpose.msra.mxu0 0.0
        %4246 = vmatprep.subr.mxu0 0.0
        %4247 = vmatpush1.xpose.msra.mxu0 0.0
        %4248 = vmatprep.subr.mxu0 0.0
        %4249 = vmatpush1.xpose.msra.mxu0 0.0
        %4250 = vmatprep.subr.mxu0 0.0
        %4251 = vmatpush1.xpose.msra.mxu0 0.0
        %4252 = vmatprep.subr.mxu0 0.0
        %4253 = vmatpush1.xpose.msra.mxu0 0.0
        %4254 = vmatprep.subr.mxu0 0.0
        %4255 = vmatpush1.xpose.msra.mxu0 0.0
        %4256 = vmatprep.subr.mxu0 0.0
        %4257 = vmatpush1.xpose.msra.mxu0 0.0
        %4258 = vmatprep.subr.mxu0 0.0
        %4259 = vmatpush1.xpose.msra.mxu0 0.0
        %4260 = vmatprep.subr.mxu0 0.0
        %4261 = vmatpush1.xpose.msra.mxu0 0.0
        %4262 = vmatprep.subr.mxu0 0.0
        %4263 = vmatpush1.xpose.msra.mxu0 0.0
        %4264 = vmatprep.subr.mxu0 0.0
        %4265 = vmatpush1.xpose.msra.mxu0 0.0
        %4266 = vmatprep.subr.mxu0 0.0
        %4267 = vmatpush1.xpose.msra.mxu0 0.0
        %4268 = vmatprep.subr.mxu0 0.0
        %4269 = vmatpush1.xpose.msra.mxu0 0.0
        %4270 = vmatprep.mubr.f32.mxu0 0.0
        %4271 = vmatmul.mubr.f32.gmra.mrb[0].mxu0 1.0
        %v4272 = vpop.f32.mrb[0].mxu0
        %v4273 = vadd.f32 %v4199, %v4272
        %v4274 = vpop.f32.mrb[0].mxu0
        %4275 = vdwg.mxu0
        %4276 = vmatprep.subr.mxu0 0.0
        %v4277 = vand.u32 %v968, 4294901760
        %4278 = vmatpush1.xpose.msra.mxu0 %v4277
        %4279 = vmatprep.subr.mxu0 0.0
        %v4280 = vand.u32 %v969, 4294901760
        %4281 = vmatpush1.xpose.msra.mxu0 %v4280
        %4282 = vmatprep.subr.mxu0 0.0
        %v4283 = vand.u32 %v970, 4294901760
        %4284 = vmatpush1.xpose.msra.mxu0 %v4283
        %4285 = vmatprep.subr.mxu0 0.0
        %v4286 = vand.u32 %v971, 4294901760
        %4287 = vmatpush1.xpose.msra.mxu0 %v4286
        %4288 = vmatprep.subr.mxu0 0.0
        %4289 = vmatpush1.xpose.msra.mxu0 0.0
        %4290 = vmatprep.subr.mxu0 0.0
        %4291 = vmatpush1.xpose.msra.mxu0 0.0
        %4292 = vmatprep.subr.mxu0 0.0
        %4293 = vmatpush1.xpose.msra.mxu0 0.0
        %4294 = vmatprep.subr.mxu0 0.0
        %4295 = vmatpush1.xpose.msra.mxu0 0.0
        %4296 = vmatprep.subr.mxu0 0.0
        %4297 = vmatpush1.xpose.msra.mxu0 0.0
        %4298 = vmatprep.subr.mxu0 0.0
        %4299 = vmatpush1.xpose.msra.mxu0 0.0
        %4300 = vmatprep.subr.mxu0 0.0
        %4301 = vmatpush1.xpose.msra.mxu0 0.0
        %4302 = vmatprep.subr.mxu0 0.0
        %4303 = vmatpush1.xpose.msra.mxu0 0.0
        %4304 = vmatprep.subr.mxu0 0.0
        %4305 = vmatpush1.xpose.msra.mxu0 0.0
        %4306 = vmatprep.subr.mxu0 0.0
        %4307 = vmatpush1.xpose.msra.mxu0 0.0
        %4308 = vmatprep.subr.mxu0 0.0
        %4309 = vmatpush1.xpose.msra.mxu0 0.0
        %4310 = vmatprep.subr.mxu0 0.0
        %4311 = vmatpush1.xpose.msra.mxu0 0.0
        %4312 = vmatprep.subr.mxu0 0.0
        %4313 = vmatpush1.xpose.msra.mxu0 0.0
        %4314 = vmatprep.subr.mxu0 0.0
        %4315 = vmatpush1.xpose.msra.mxu0 0.0
        %4316 = vmatprep.subr.mxu0 0.0
        %4317 = vmatpush1.xpose.msra.mxu0 0.0
        %4318 = vmatprep.subr.mxu0 0.0
        %4319 = vmatpush1.xpose.msra.mxu0 0.0
        %4320 = vmatprep.subr.mxu0 0.0
        %4321 = vmatpush1.xpose.msra.mxu0 0.0
        %4322 = vmatprep.subr.mxu0 0.0
        %4323 = vmatpush1.xpose.msra.mxu0 0.0
        %4324 = vmatprep.subr.mxu0 0.0
        %4325 = vmatpush1.xpose.msra.mxu0 0.0
        %4326 = vmatprep.subr.mxu0 0.0
        %4327 = vmatpush1.xpose.msra.mxu0 0.0
        %4328 = vmatprep.subr.mxu0 0.0
        %4329 = vmatpush1.xpose.msra.mxu0 0.0
        %4330 = vmatprep.subr.mxu0 0.0
        %4331 = vmatpush1.xpose.msra.mxu0 0.0
        %4332 = vmatprep.subr.mxu0 0.0
        %4333 = vmatpush1.xpose.msra.mxu0 0.0
        %4334 = vmatprep.subr.mxu0 0.0
        %4335 = vmatpush1.xpose.msra.mxu0 0.0
        %4336 = vmatprep.subr.mxu0 0.0
        %4337 = vmatpush1.xpose.msra.mxu0 0.0
        %4338 = vmatprep.subr.mxu0 0.0
        %4339 = vmatpush1.xpose.msra.mxu0 0.0
        %4340 = vmatprep.subr.mxu0 0.0
        %4341 = vmatpush1.xpose.msra.mxu0 0.0
        %4342 = vmatprep.subr.mxu0 0.0
        %4343 = vmatpush1.xpose.msra.mxu0 0.0
        %4344 = vmatprep.mubr.f32.mxu0 0.0
        %4345 = vmatmul.mubr.f32.gmra.mrb[0].mxu0 0.0
        %v4346 = vpop.f32.mrb[0].mxu0
        %v4347 = vadd.f32 0.0, %v4346
        %v4348 = vpop.f32.mrb[0].mxu0
        %4349 = vdwg.mxu0
        %4350 = vmatprep.subr.mxu0 0.0
        %v4351 = vand.u32 %v968, 4294901760
        %v4352 = vsub.f32 %v968, %v4351
        %v4353 = vand.u32 %v4352, 4294901760
        %v4354 = vsub.f32 %v4352, %v4353
        %v4355 = vand.u32 %v4354, 4294901760
        %4356 = vmatpush1.xpose.msra.mxu0 %v4355
        %4357 = vmatprep.subr.mxu0 0.0
        %v4358 = vand.u32 %v969, 4294901760
        %v4359 = vsub.f32 %v969, %v4358
        %v4360 = vand.u32 %v4359, 4294901760
        %v4361 = vsub.f32 %v4359, %v4360
        %v4362 = vand.u32 %v4361, 4294901760
        %4363 = vmatpush1.xpose.msra.mxu0 %v4362
        %4364 = vmatprep.subr.mxu0 0.0
        %v4365 = vand.u32 %v970, 4294901760
        %v4366 = vsub.f32 %v970, %v4365
        %v4367 = vand.u32 %v4366, 4294901760
        %v4368 = vsub.f32 %v4366, %v4367
        %v4369 = vand.u32 %v4368, 4294901760
        %4370 = vmatpush1.xpose.msra.mxu0 %v4369
        %4371 = vmatprep.subr.mxu0 0.0
        %v4372 = vand.u32 %v971, 4294901760
        %v4373 = vsub.f32 %v971, %v4372
        %v4374 = vand.u32 %v4373, 4294901760
        %v4375 = vsub.f32 %v4373, %v4374
        %v4376 = vand.u32 %v4375, 4294901760
        %4377 = vmatpush1.xpose.msra.mxu0 %v4376
        %4378 = vmatprep.subr.mxu0 0.0
        %4379 = vmatpush1.xpose.msra.mxu0 0.0
        %4380 = vmatprep.subr.mxu0 0.0
        %4381 = vmatpush1.xpose.msra.mxu0 0.0
        %4382 = vmatprep.subr.mxu0 0.0
        %4383 = vmatpush1.xpose.msra.mxu0 0.0
        %4384 = vmatprep.subr.mxu0 0.0
        %4385 = vmatpush1.xpose.msra.mxu0 0.0
        %4386 = vmatprep.subr.mxu0 0.0
        %4387 = vmatpush1.xpose.msra.mxu0 0.0
        %4388 = vmatprep.subr.mxu0 0.0
        %4389 = vmatpush1.xpose.msra.mxu0 0.0
        %4390 = vmatprep.subr.mxu0 0.0
        %4391 = vmatpush1.xpose.msra.mxu0 0.0
        %4392 = vmatprep.subr.mxu0 0.0
        %4393 = vmatpush1.xpose.msra.mxu0 0.0
        %4394 = vmatprep.subr.mxu0 0.0
        %4395 = vmatpush1.xpose.msra.mxu0 0.0
        %4396 = vmatprep.subr.mxu0 0.0
        %4397 = vmatpush1.xpose.msra.mxu0 0.0
        %4398 = vmatprep.subr.mxu0 0.0
        %4399 = vmatpush1.xpose.msra.mxu0 0.0
        %4400 = vmatprep.subr.mxu0 0.0
        %4401 = vmatpush1.xpose.msra.mxu0 0.0
        %4402 = vmatprep.subr.mxu0 0.0
        %4403 = vmatpush1.xpose.msra.mxu0 0.0
        %4404 = vmatprep.subr.mxu0 0.0
        %4405 = vmatpush1.xpose.msra.mxu0 0.0
        %4406 = vmatprep.subr.mxu0 0.0
        %4407 = vmatpush1.xpose.msra.mxu0 0.0
        %4408 = vmatprep.subr.mxu0 0.0
        %4409 = vmatpush1.xpose.msra.mxu0 0.0
        %4410 = vmatprep.subr.mxu0 0.0
        %4411 = vmatpush1.xpose.msra.mxu0 0.0
        %4412 = vmatprep.subr.mxu0 0.0
        %4413 = vmatpush1.xpose.msra.mxu0 0.0
        %4414 = vmatprep.subr.mxu0 0.0
        %4415 = vmatpush1.xpose.msra.mxu0 0.0
        %4416 = vmatprep.subr.mxu0 0.0
        %4417 = vmatpush1.xpose.msra.mxu0 0.0
        %4418 = vmatprep.subr.mxu0 0.0
        %4419 = vmatpush1.xpose.msra.mxu0 0.0
        %4420 = vmatprep.subr.mxu0 0.0
        %4421 = vmatpush1.xpose.msra.mxu0 0.0
        %4422 = vmatprep.subr.mxu0 0.0
        %4423 = vmatpush1.xpose.msra.mxu0 0.0
        %4424 = vmatprep.subr.mxu0 0.0
        %4425 = vmatpush1.xpose.msra.mxu0 0.0
        %4426 = vmatprep.subr.mxu0 0.0
        %4427 = vmatpush1.xpose.msra.mxu0 0.0
        %4428 = vmatprep.subr.mxu0 0.0
        %4429 = vmatpush1.xpose.msra.mxu0 0.0
        %4430 = vmatprep.subr.mxu0 0.0
        %4431 = vmatpush1.xpose.msra.mxu0 0.0
        %4432 = vmatprep.subr.mxu0 0.0
        %4433 = vmatpush1.xpose.msra.mxu0 0.0
        %4434 = vmatprep.mubr.f32.mxu0 0.0
        %4435 = vmatmul.mubr.f32.gmra.mrb[0].mxu0 1.0
        %v4436 = vpop.f32.mrb[0].mxu0
        %v4437 = vadd.f32 %v4347, %v4436
        %v4438 = vpop.f32.mrb[0].mxu0
        %4439 = vdwg.mxu0
        %4440 = vmatprep.subr.mxu0 0.0
        %v4441 = vand.u32 %v968, 4294901760
        %v4442 = vsub.f32 %v968, %v4441
        %4443 = vmatpush1.xpose.msra.mxu0 %v4442
        %4444 = vmatprep.subr.mxu0 0.0
        %v4445 = vand.u32 %v969, 4294901760
        %v4446 = vsub.f32 %v969, %v4445
        %4447 = vmatpush1.xpose.msra.mxu0 %v4446
        %4448 = vmatprep.subr.mxu0 0.0
        %v4449 = vand.u32 %v970, 4294901760
        %v4450 = vsub.f32 %v970, %v4449
        %4451 = vmatpush1.xpose.msra.mxu0 %v4450
        %4452 = vmatprep.subr.mxu0 0.0
        %v4453 = vand.u32 %v971, 4294901760
        %v4454 = vsub.f32 %v971, %v4453
        %4455 = vmatpush1.xpose.msra.mxu0 %v4454
        %4456 = vmatprep.subr.mxu0 0.0
        %4457 = vmatpush1.xpose.msra.mxu0 0.0
        %4458 = vmatprep.subr.mxu0 0.0
        %4459 = vmatpush1.xpose.msra.mxu0 0.0
        %4460 = vmatprep.subr.mxu0 0.0
        %4461 = vmatpush1.xpose.msra.mxu0 0.0
        %4462 = vmatprep.subr.mxu0 0.0
        %4463 = vmatpush1.xpose.msra.mxu0 0.0
        %4464 = vmatprep.subr.mxu0 0.0
        %4465 = vmatpush1.xpose.msra.mxu0 0.0
        %4466 = vmatprep.subr.mxu0 0.0
        %4467 = vmatpush1.xpose.msra.mxu0 0.0
        %4468 = vmatprep.subr.mxu0 0.0
        %4469 = vmatpush1.xpose.msra.mxu0 0.0
        %4470 = vmatprep.subr.mxu0 0.0
        %4471 = vmatpush1.xpose.msra.mxu0 0.0
        %4472 = vmatprep.subr.mxu0 0.0
        %4473 = vmatpush1.xpose.msra.mxu0 0.0
        %4474 = vmatprep.subr.mxu0 0.0
        %4475 = vmatpush1.xpose.msra.mxu0 0.0
        %4476 = vmatprep.subr.mxu0 0.0
        %4477 = vmatpush1.xpose.msra.mxu0 0.0
        %4478 = vmatprep.subr.mxu0 0.0
        %4479 = vmatpush1.xpose.msra.mxu0 0.0
        %4480 = vmatprep.subr.mxu0 0.0
        %4481 = vmatpush1.xpose.msra.mxu0 0.0
        %4482 = vmatprep.subr.mxu0 0.0
        %4483 = vmatpush1.xpose.msra.mxu0 0.0
        %4484 = vmatprep.subr.mxu0 0.0
        %4485 = vmatpush1.xpose.msra.mxu0 0.0
        %4486 = vmatprep.subr.mxu0 0.0
        %4487 = vmatpush1.xpose.msra.mxu0 0.0
        %4488 = vmatprep.subr.mxu0 0.0
        %4489 = vmatpush1.xpose.msra.mxu0 0.0
        %4490 = vmatprep.subr.mxu0 0.0
        %4491 = vmatpush1.xpose.msra.mxu0 0.0
        %4492 = vmatprep.subr.mxu0 0.0
        %4493 = vmatpush1.xpose.msra.mxu0 0.0
        %4494 = vmatprep.subr.mxu0 0.0
        %4495 = vmatpush1.xpose.msra.mxu0 0.0
        %4496 = vmatprep.subr.mxu0 0.0
        %4497 = vmatpush1.xpose.msra.mxu0 0.0
        %4498 = vmatprep.subr.mxu0 0.0
        %4499 = vmatpush1.xpose.msra.mxu0 0.0
        %4500 = vmatprep.subr.mxu0 0.0
        %4501 = vmatpush1.xpose.msra.mxu0 0.0
        %4502 = vmatprep.subr.mxu0 0.0
        %4503 = vmatpush1.xpose.msra.mxu0 0.0
        %4504 = vmatprep.subr.mxu0 0.0
        %4505 = vmatpush1.xpose.msra.mxu0 0.0
        %4506 = vmatprep.subr.mxu0 0.0
        %4507 = vmatpush1.xpose.msra.mxu0 0.0
        %4508 = vmatprep.subr.mxu0 0.0
        %4509 = vmatpush1.xpose.msra.mxu0 0.0
        %4510 = vmatprep.subr.mxu0 0.0
        %4511 = vmatpush1.xpose.msra.mxu0 0.0
        %4512 = vmatprep.mubr.f32.mxu0 0.0
        %4513 = vmatmul.mubr.f32.gmra.mrb[0].mxu0 0.0
        %v4514 = vpop.f32.mrb[0].mxu0
        %v4515 = vadd.f32 %v4437, %v4514
        %v4516 = vpop.f32.mrb[0].mxu0
        %4517 = vdwg.mxu0
        %4518 = vmatprep.subr.mxu0 0.0
        %v4519 = vand.u32 %v968, 4294901760
        %4520 = vmatpush1.xpose.msra.mxu0 %v4519
        %4521 = vmatprep.subr.mxu0 0.0
        %v4522 = vand.u32 %v969, 4294901760
        %4523 = vmatpush1.xpose.msra.mxu0 %v4522
        %4524 = vmatprep.subr.mxu0 0.0
        %v4525 = vand.u32 %v970, 4294901760
        %4526 = vmatpush1.xpose.msra.mxu0 %v4525
        %4527 = vmatprep.subr.mxu0 0.0
        %v4528 = vand.u32 %v971, 4294901760
        %4529 = vmatpush1.xpose.msra.mxu0 %v4528
        %4530 = vmatprep.subr.mxu0 0.0
        %4531 = vmatpush1.xpose.msra.mxu0 0.0
        %4532 = vmatprep.subr.mxu0 0.0
        %4533 = vmatpush1.xpose.msra.mxu0 0.0
        %4534 = vmatprep.subr.mxu0 0.0
        %4535 = vmatpush1.xpose.msra.mxu0 0.0
        %4536 = vmatprep.subr.mxu0 0.0
        %4537 = vmatpush1.xpose.msra.mxu0 0.0
        %4538 = vmatprep.subr.mxu0 0.0
        %4539 = vmatpush1.xpose.msra.mxu0 0.0
        %4540 = vmatprep.subr.mxu0 0.0
        %4541 = vmatpush1.xpose.msra.mxu0 0.0
        %4542 = vmatprep.subr.mxu0 0.0
        %4543 = vmatpush1.xpose.msra.mxu0 0.0
        %4544 = vmatprep.subr.mxu0 0.0
        %4545 = vmatpush1.xpose.msra.mxu0 0.0
        %4546 = vmatprep.subr.mxu0 0.0
        %4547 = vmatpush1.xpose.msra.mxu0 0.0
        %4548 = vmatprep.subr.mxu0 0.0
        %4549 = vmatpush1.xpose.msra.mxu0 0.0
        %4550 = vmatprep.subr.mxu0 0.0
        %4551 = vmatpush1.xpose.msra.mxu0 0.0
        %4552 = vmatprep.subr.mxu0 0.0
        %4553 = vmatpush1.xpose.msra.mxu0 0.0
        %4554 = vmatprep.subr.mxu0 0.0
        %4555 = vmatpush1.xpose.msra.mxu0 0.0
        %4556 = vmatprep.subr.mxu0 0.0
        %4557 = vmatpush1.xpose.msra.mxu0 0.0
        %4558 = vmatprep.subr.mxu0 0.0
        %4559 = vmatpush1.xpose.msra.mxu0 0.0
        %4560 = vmatprep.subr.mxu0 0.0
        %4561 = vmatpush1.xpose.msra.mxu0 0.0
        %4562 = vmatprep.subr.mxu0 0.0
        %4563 = vmatpush1.xpose.msra.mxu0 0.0
        %4564 = vmatprep.subr.mxu0 0.0
        %4565 = vmatpush1.xpose.msra.mxu0 0.0
        %4566 = vmatprep.subr.mxu0 0.0
        %4567 = vmatpush1.xpose.msra.mxu0 0.0
        %4568 = vmatprep.subr.mxu0 0.0
        %4569 = vmatpush1.xpose.msra.mxu0 0.0
        %4570 = vmatprep.subr.mxu0 0.0
        %4571 = vmatpush1.xpose.msra.mxu0 0.0
        %4572 = vmatprep.subr.mxu0 0.0
        %4573 = vmatpush1.xpose.msra.mxu0 0.0
        %4574 = vmatprep.subr.mxu0 0.0
        %4575 = vmatpush1.xpose.msra.mxu0 0.0
        %4576 = vmatprep.subr.mxu0 0.0
        %4577 = vmatpush1.xpose.msra.mxu0 0.0
        %4578 = vmatprep.subr.mxu0 0.0
        %4579 = vmatpush1.xpose.msra.mxu0 0.0
        %4580 = vmatprep.subr.mxu0 0.0
        %4581 = vmatpush1.xpose.msra.mxu0 0.0
        %4582 = vmatprep.subr.mxu0 0.0
        %4583 = vmatpush1.xpose.msra.mxu0 0.0
        %4584 = vmatprep.subr.mxu0 0.0
        %4585 = vmatpush1.xpose.msra.mxu0 0.0
        %4586 = vmatprep.mubr.f32.mxu0 0.0
        %4587 = vmatmul.mubr.f32.gmra.mrb[0].mxu0 0.0
        %v4588 = vpop.f32.mrb[0].mxu0
        %v4589 = vadd.f32 %v4515, %v4588
        %v4590 = vpop.f32.mrb[0].mxu0
        %4591 = vdwg.mxu0
        %4592 = vmatprep.subr.mxu0 0.0
        %v4593 = vand.u32 %v968, 4294901760
        %v4594 = vsub.f32 %v968, %v4593
        %v4595 = vand.u32 %v4594, 4294901760
        %4596 = vmatpush1.xpose.msra.mxu0 %v4595
        %4597 = vmatprep.subr.mxu0 0.0
        %v4598 = vand.u32 %v969, 4294901760
        %v4599 = vsub.f32 %v969, %v4598
        %v4600 = vand.u32 %v4599, 4294901760
        %4601 = vmatpush1.xpose.msra.mxu0 %v4600
        %4602 = vmatprep.subr.mxu0 0.0
        %v4603 = vand.u32 %v970, 4294901760
        %v4604 = vsub.f32 %v970, %v4603
        %v4605 = vand.u32 %v4604, 4294901760
        %4606 = vmatpush1.xpose.msra.mxu0 %v4605
        %4607 = vmatprep.subr.mxu0 0.0
        %v4608 = vand.u32 %v971, 4294901760
        %v4609 = vsub.f32 %v971, %v4608
        %v4610 = vand.u32 %v4609, 4294901760
        %4611 = vmatpush1.xpose.msra.mxu0 %v4610
        %4612 = vmatprep.subr.mxu0 0.0
        %4613 = vmatpush1.xpose.msra.mxu0 0.0
        %4614 = vmatprep.subr.mxu0 0.0
        %4615 = vmatpush1.xpose.msra.mxu0 0.0
        %4616 = vmatprep.subr.mxu0 0.0
        %4617 = vmatpush1.xpose.msra.mxu0 0.0
        %4618 = vmatprep.subr.mxu0 0.0
        %4619 = vmatpush1.xpose.msra.mxu0 0.0
        %4620 = vmatprep.subr.mxu0 0.0
        %4621 = vmatpush1.xpose.msra.mxu0 0.0
        %4622 = vmatprep.subr.mxu0 0.0
        %4623 = vmatpush1.xpose.msra.mxu0 0.0
        %4624 = vmatprep.subr.mxu0 0.0
        %4625 = vmatpush1.xpose.msra.mxu0 0.0
        %4626 = vmatprep.subr.mxu0 0.0
        %4627 = vmatpush1.xpose.msra.mxu0 0.0
        %4628 = vmatprep.subr.mxu0 0.0
        %4629 = vmatpush1.xpose.msra.mxu0 0.0
        %4630 = vmatprep.subr.mxu0 0.0
        %4631 = vmatpush1.xpose.msra.mxu0 0.0
        %4632 = vmatprep.subr.mxu0 0.0
        %4633 = vmatpush1.xpose.msra.mxu0 0.0
        %4634 = vmatprep.subr.mxu0 0.0
        %4635 = vmatpush1.xpose.msra.mxu0 0.0
        %4636 = vmatprep.subr.mxu0 0.0
        %4637 = vmatpush1.xpose.msra.mxu0 0.0
        %4638 = vmatprep.subr.mxu0 0.0
        %4639 = vmatpush1.xpose.msra.mxu0 0.0
        %4640 = vmatprep.subr.mxu0 0.0
        %4641 = vmatpush1.xpose.msra.mxu0 0.0
        %4642 = vmatprep.subr.mxu0 0.0
        %4643 = vmatpush1.xpose.msra.mxu0 0.0
        %4644 = vmatprep.subr.mxu0 0.0
        %4645 = vmatpush1.xpose.msra.mxu0 0.0
        %4646 = vmatprep.subr.mxu0 0.0
        %4647 = vmatpush1.xpose.msra.mxu0 0.0
        %4648 = vmatprep.subr.mxu0 0.0
        %4649 = vmatpush1.xpose.msra.mxu0 0.0
        %4650 = vmatprep.subr.mxu0 0.0
        %4651 = vmatpush1.xpose.msra.mxu0 0.0
        %4652 = vmatprep.subr.mxu0 0.0
        %4653 = vmatpush1.xpose.msra.mxu0 0.0
        %4654 = vmatprep.subr.mxu0 0.0
        %4655 = vmatpush1.xpose.msra.mxu0 0.0
        %4656 = vmatprep.subr.mxu0 0.0
        %4657 = vmatpush1.xpose.msra.mxu0 0.0
        %4658 = vmatprep.subr.mxu0 0.0
        %4659 = vmatpush1.xpose.msra.mxu0 0.0
        %4660 = vmatprep.subr.mxu0 0.0
        %4661 = vmatpush1.xpose.msra.mxu0 0.0
        %4662 = vmatprep.subr.mxu0 0.0
        %4663 = vmatpush1.xpose.msra.mxu0 0.0
        %4664 = vmatprep.subr.mxu0 0.0
        %4665 = vmatpush1.xpose.msra.mxu0 0.0
        %4666 = vmatprep.subr.mxu0 0.0
        %4667 = vmatpush1.xpose.msra.mxu0 0.0
        %4668 = vmatprep.mubr.f32.mxu0 0.0
        %4669 = vmatmul.mubr.f32.gmra.mrb[0].mxu0 1.0
        %v4670 = vpop.f32.mrb[0].mxu0
        %v4671 = vadd.f32 %v4589, %v4670
        %v4672 = vpop.f32.mrb[0].mxu0
        %4673 = vdwg.mxu0
        %4674 = vmatprep.subr.mxu0 0.0
        %v4675 = vand.u32 %v968, 4294901760
        %4676 = vmatpush1.xpose.msra.mxu0 %v4675
        %4677 = vmatprep.subr.mxu0 0.0
        %v4678 = vand.u32 %v969, 4294901760
        %4679 = vmatpush1.xpose.msra.mxu0 %v4678
        %4680 = vmatprep.subr.mxu0 0.0
        %v4681 = vand.u32 %v970, 4294901760
        %4682 = vmatpush1.xpose.msra.mxu0 %v4681
        %4683 = vmatprep.subr.mxu0 0.0
        %v4684 = vand.u32 %v971, 4294901760
        %4685 = vmatpush1.xpose.msra.mxu0 %v4684
        %4686 = vmatprep.subr.mxu0 0.0
        %4687 = vmatpush1.xpose.msra.mxu0 0.0
        %4688 = vmatprep.subr.mxu0 0.0
        %4689 = vmatpush1.xpose.msra.mxu0 0.0
        %4690 = vmatprep.subr.mxu0 0.0
        %4691 = vmatpush1.xpose.msra.mxu0 0.0
        %4692 = vmatprep.subr.mxu0 0.0
        %4693 = vmatpush1.xpose.msra.mxu0 0.0
        %4694 = vmatprep.subr.mxu0 0.0
        %4695 = vmatpush1.xpose.msra.mxu0 0.0
        %4696 = vmatprep.subr.mxu0 0.0
        %4697 = vmatpush1.xpose.msra.mxu0 0.0
        %4698 = vmatprep.subr.mxu0 0.0
        %4699 = vmatpush1.xpose.msra.mxu0 0.0
        %4700 = vmatprep.subr.mxu0 0.0
        %4701 = vmatpush1.xpose.msra.mxu0 0.0
        %4702 = vmatprep.subr.mxu0 0.0
        %4703 = vmatpush1.xpose.msra.mxu0 0.0
        %4704 = vmatprep.subr.mxu0 0.0
        %4705 = vmatpush1.xpose.msra.mxu0 0.0
        %4706 = vmatprep.subr.mxu0 0.0
        %4707 = vmatpush1.xpose.msra.mxu0 0.0
        %4708 = vmatprep.subr.mxu0 0.0
        %4709 = vmatpush1.xpose.msra.mxu0 0.0
        %4710 = vmatprep.subr.mxu0 0.0
        %4711 = vmatpush1.xpose.msra.mxu0 0.0
        %4712 = vmatprep.subr.mxu0 0.0
        %4713 = vmatpush1.xpose.msra.mxu0 0.0
        %4714 = vmatprep.subr.mxu0 0.0
        %4715 = vmatpush1.xpose.msra.mxu0 0.0
        %4716 = vmatprep.subr.mxu0 0.0
        %4717 = vmatpush1.xpose.msra.mxu0 0.0
        %4718 = vmatprep.subr.mxu0 0.0
        %4719 = vmatpush1.xpose.msra.mxu0 0.0
        %4720 = vmatprep.subr.mxu0 0.0
        %4721 = vmatpush1.xpose.msra.mxu0 0.0
        %4722 = vmatprep.subr.mxu0 0.0
        %4723 = vmatpush1.xpose.msra.mxu0 0.0
        %4724 = vmatprep.subr.mxu0 0.0
        %4725 = vmatpush1.xpose.msra.mxu0 0.0
        %4726 = vmatprep.subr.mxu0 0.0
        %4727 = vmatpush1.xpose.msra.mxu0 0.0
        %4728 = vmatprep.subr.mxu0 0.0
        %4729 = vmatpush1.xpose.msra.mxu0 0.0
        %4730 = vmatprep.subr.mxu0 0.0
        %4731 = vmatpush1.xpose.msra.mxu0 0.0
        %4732 = vmatprep.subr.mxu0 0.0
        %4733 = vmatpush1.xpose.msra.mxu0 0.0
        %4734 = vmatprep.subr.mxu0 0.0
        %4735 = vmatpush1.xpose.msra.mxu0 0.0
        %4736 = vmatprep.subr.mxu0 0.0
        %4737 = vmatpush1.xpose.msra.mxu0 0.0
        %4738 = vmatprep.subr.mxu0 0.0
        %4739 = vmatpush1.xpose.msra.mxu0 0.0
        %4740 = vmatprep.subr.mxu0 0.0
        %4741 = vmatpush1.xpose.msra.mxu0 0.0
        %4742 = vmatprep.mubr.f32.mxu0 0.0
        %4743 = vmatmul.mubr.f32.gmra.mrb[0].mxu0 1.0
        %v4744 = vpop.f32.mrb[0].mxu0
        %v4745 = vadd.f32 %v4671, %v4744
        %v4746 = vpop.f32.mrb[0].mxu0
        %4747 = vdwg.mxu0
        %v4748 = vrsqrt.pop %v1441
        %v4749 = vmul.f32 %v1441, %v4748
        %vm4750 = vcmp.eq.f32.partialorder %v1441, inf
        %v4751 = vsel %vm4750, %v1441, %v4749
        %vm4752 = vcmp.eq.f32.partialorder %v1441, 0.0
        %v4753 = vand.u32 %v1441, 2147483648
        %v4754 = vsel %vm4752, %v4753, %v4751
        %v4755 = vrsqrt.pop %v1913
        %v4756 = vmul.f32 %v1913, %v4755
        %vm4757 = vcmp.eq.f32.partialorder %v1913, inf
        %v4758 = vsel %vm4757, %v1913, %v4756
        %vm4759 = vcmp.eq.f32.partialorder %v1913, 0.0
        %v4760 = vand.u32 %v1913, 2147483648
        %v4761 = vsel %vm4759, %v4760, %v4758
        %v4762 = vrsqrt.pop %v2385
        %v4763 = vmul.f32 %v2385, %v4762
        %vm4764 = vcmp.eq.f32.partialorder %v2385, inf
        %v4765 = vsel %vm4764, %v2385, %v4763
        %vm4766 = vcmp.eq.f32.partialorder %v2385, 0.0
        %v4767 = vand.u32 %v2385, 2147483648
        %v4768 = vsel %vm4766, %v4767, %v4765
        %v4769 = vrsqrt.pop %v2857
        %v4770 = vmul.f32 %v2857, %v4769
        %vm4771 = vcmp.eq.f32.partialorder %v2857, inf
        %v4772 = vsel %vm4771, %v2857, %v4770
        %vm4773 = vcmp.eq.f32.partialorder %v2857, 0.0
        %v4774 = vand.u32 %v2857, 2147483648
        %v4775 = vsel %vm4773, %v4774, %v4772
        %v4776 = vrsqrt.pop %v3329
        %v4777 = vmul.f32 %v3329, %v4776
        %vm4778 = vcmp.eq.f32.partialorder %v3329, inf
        %v4779 = vsel %vm4778, %v3329, %v4777
        %vm4780 = vcmp.eq.f32.partialorder %v3329, 0.0
        %v4781 = vand.u32 %v3329, 2147483648
        %v4782 = vsel %vm4780, %v4781, %v4779
        %v4783 = vrsqrt.pop %v3801
        %v4784 = vmul.f32 %v3801, %v4783
        %vm4785 = vcmp.eq.f32.partialorder %v3801, inf
        %v4786 = vsel %vm4785, %v3801, %v4784
        %vm4787 = vcmp.eq.f32.partialorder %v3801, 0.0
        %v4788 = vand.u32 %v3801, 2147483648
        %v4789 = vsel %vm4787, %v4788, %v4786
        %v4790 = vrsqrt.pop %v4273
        %v4791 = vmul.f32 %v4273, %v4790
        %vm4792 = vcmp.eq.f32.partialorder %v4273, inf
        %v4793 = vsel %vm4792, %v4273, %v4791
        %vm4794 = vcmp.eq.f32.partialorder %v4273, 0.0
        %v4795 = vand.u32 %v4273, 2147483648
        %v4796 = vsel %vm4794, %v4795, %v4793
        %v4797 = vrsqrt.pop %v4745
        %v4798 = vmul.f32 %v4745, %v4797
        %vm4799 = vcmp.eq.f32.partialorder %v4745, inf
        %v4800 = vsel %vm4799, %v4745, %v4798
        %vm4801 = vcmp.eq.f32.partialorder %v4745, 0.0
        %v4802 = vand.u32 %v4745, 2147483648
        %v4803 = vsel %vm4801, %v4802, %v4800
        %v4804 = vmul.f32 %v4754, -0.5
        %v4805 = vmul.f32 %v4761, -0.5
        %v4806 = vmul.f32 %v4768, -0.5
        %v4807 = vmul.f32 %v4775, -0.5
        %v4808 = vmul.f32 %v4782, -0.5
        %v4809 = vmul.f32 %v4789, -0.5
        %v4810 = vmul.f32 %v4796, -0.5
        %v4811 = vmul.f32 %v4803, -0.5
        %v4812 = vmul.f32 %v4804, 1.442695
        %v4813 = vpow.pop %v4812
        %v4814 = vmul.f32 %v4805, 1.442695
        %v4815 = vpow.pop %v4814
        %v4816 = vmul.f32 %v4806, 1.442695
        %v4817 = vpow.pop %v4816
        %v4818 = vmul.f32 %v4807, 1.442695
        %v4819 = vpow.pop %v4818
        %v4820 = vmul.f32 %v4808, 1.442695
        %v4821 = vpow.pop %v4820
        %v4822 = vmul.f32 %v4809, 1.442695
        %v4823 = vpow.pop %v4822
        %v4824 = vmul.f32 %v4810, 1.442695
        %v4825 = vpow.pop %v4824
        %v4826 = vmul.f32 %v4811, 1.442695
        %v4827 = vpow.pop %v4826
        %v4828 = vadd.f32 %v4813, 0.25
        %v4829 = vadd.f32 %v4815, 0.25
        %v4830 = vadd.f32 %v4817, 0.25
        %v4831 = vadd.f32 %v4819, 0.25
        %v4832 = vadd.f32 %v4821, 0.25
        %v4833 = vadd.f32 %v4823, 0.25
        %v4834 = vadd.f32 %v4825, 0.25
        %v4835 = vadd.f32 %v4827, 0.25
        %v4836 = vmax.f32 %v4828, 0.0
        %v4837 = vmax.f32 %v4829, 0.0
        %v4838 = vmax.f32 %v4830, 0.0
        %v4839 = vmax.f32 %v4831, 0.0
        %v4840 = vmax.f32 %v4832, 0.0
        %v4841 = vmax.f32 %v4833, 0.0
        %v4842 = vmax.f32 %v4834, 0.0
        %v4843 = vmax.f32 %v4835, 0.0
        %v4844 = vsub.f32 %v4813, 0.25
        %v4845 = vsub.f32 %v4815, 0.25
        %v4846 = vsub.f32 %v4817, 0.25
        %v4847 = vsub.f32 %v4819, 0.25
        %v4848 = vsub.f32 %v4821, 0.25
        %v4849 = vsub.f32 %v4823, 0.25
        %v4850 = vsub.f32 %v4825, 0.25
        %v4851 = vsub.f32 %v4827, 0.25
        %v4852 = vmul.f32 %v4836, %v4844
        %v4853 = vmul.f32 %v4837, %v4845
        %v4854 = vmul.f32 %v4838, %v4846
        %v4855 = vmul.f32 %v4839, %v4847
        %v4856 = vmul.f32 %v4840, %v4848
        %v4857 = vmul.f32 %v4841, %v4849
        %v4858 = vmul.f32 %v4842, %v4850
        %v4859 = vmul.f32 %v4843, %v4851
        %v4860 = vmul.f32 %v4852, 64.0
        %v4861 = vmul.f32 %v4853, 64.0
        %v4862 = vmul.f32 %v4854, 64.0
        %v4863 = vmul.f32 %v4855, 64.0
        %v4864 = vmul.f32 %v4856, 64.0
        %v4865 = vmul.f32 %v4857, 64.0
        %v4866 = vmul.f32 %v4858, 64.0
        %v4867 = vmul.f32 %v4859, 64.0
        %vm4868 = vcmask 253952
        %v4869 = vsel %vm4868, %v4860, -inf
        %v4870 = vsel %vm4868, %v4861, -inf
        %v4871 = vsel %vm4868, %v4862, -inf
        %v4872 = vsel %vm4868, %v4863, -inf
        %v4873 = vsel %vm4868, %v4864, -inf
        %v4874 = vmax.f32 %v4869, %v4873
        %v4875 = vsel %vm4868, %v4865, -inf
        %v4876 = vmax.f32 %v4870, %v4875
        %v4877 = vsel %vm4868, %v4866, -inf
        %v4878 = vmax.f32 %v4871, %v4877
        %v4879 = vsel %vm4868, %v4867, -inf
        %v4880 = vmax.f32 %v4872, %v4879
        %v4881 = vmax.f32 %v4874, %v4876
        %v4882 = vmax.f32 %v4878, %v4880
        %v4883 = vmax.f32 %v4881, %v4882
        %4884 = vmax.xlane.f32.xlu0 %v4883
        %v4885 = vpop.xlane.xlu0 %4884
        %v4886 = vrot.slane %v4885, 4
        %v4887 = vmax.f32 %v4885, %v4886
        %v4888 = vrot.slane %v4887, 2
        %v4889 = vmax.f32 %v4887, %v4888
        %v4890 = vrot.slane %v4889, 1
        %v4891 = vmax.f32 %v4889, %v4890
        %s4892 = vtos %v4891
        %v4893 = vstv %s4892
        %v4894 = vsub.f32 %v4860, %v4893
        %v4895 = vsub.f32 %v4861, %v4893
        %v4896 = vsub.f32 %v4862, %v4893
        %v4897 = vsub.f32 %v4863, %v4893
        %v4898 = vsub.f32 %v4864, %v4893
        %v4899 = vsub.f32 %v4865, %v4893
        %v4900 = vsub.f32 %v4866, %v4893
        %v4901 = vsub.f32 %v4867, %v4893
        %v4902 = vmul.f32 %v4894, 1.442695
        %v4903 = vpow.pop %v4902
        %v4904 = vmul.f32 %v4895, 1.442695
        %v4905 = vpow.pop %v4904
        %v4906 = vmul.f32 %v4896, 1.442695
        %v4907 = vpow.pop %v4906
        %v4908 = vmul.f32 %v4897, 1.442695
        %v4909 = vpow.pop %v4908
        %v4910 = vmul.f32 %v4898, 1.442695
        %v4911 = vpow.pop %v4910
        %v4912 = vmul.f32 %v4899, 1.442695
        %v4913 = vpow.pop %v4912
        %v4914 = vmul.f32 %v4900, 1.442695
        %v4915 = vpow.pop %v4914
        %v4916 = vmul.f32 %v4901, 1.442695
        %v4917 = vpow.pop %v4916
        %v4918 = vsel %vm4868, %v4903, 0.0
        %v4919 = vsel %vm4868, %v4905, 0.0
        %v4920 = vadd.f32 %v4918, %v4919
        %v4921 = vsel %vm4868, %v4907, 0.0
        %v4922 = vadd.f32 %v4920, %v4921
        %v4923 = vsel %vm4868, %v4909, 0.0
        %v4924 = vadd.f32 %v4922, %v4923
        %v4925 = vsel %vm4868, %v4911, 0.0
        %v4926 = vadd.f32 %v4924, %v4925
        %v4927 = vsel %vm4868, %v4913, 0.0
        %v4928 = vadd.f32 %v4926, %v4927
        %v4929 = vsel %vm4868, %v4915, 0.0
        %v4930 = vadd.f32 %v4928, %v4929
        %v4931 = vsel %vm4868, %v4917, 0.0
        %v4932 = vadd.f32 %v4930, %v4931
        %4933 = vadd.xlane.f32.xlu0 %v4932
        %v4934 = vpop.xlane.xlu0 %4933
        %v4935 = vrot.slane %v4934, 4
        %v4936 = vadd.f32 %v4934, %v4935
        %v4937 = vrot.slane %v4936, 2
        %v4938 = vadd.f32 %v4936, %v4937
        %v4939 = vrot.slane %v4938, 1
        %v4940 = vadd.f32 %v4938, %v4939
        %s4941 = vtos %v4940
        %v4942 = vstv %s4941
        %v4943 = vld [vmem:[#allocation2] sm:$0x1]
        %v4944 = vmax.f32 %v4943, %v4893
        %v4945 = vld [vmem:[#allocation3] sm:$0x1]
        %v4946 = vsub.f32 %v4943, %v4944
        %v4947 = vmul.f32 %v4946, 1.442695
        %v4948 = vpow.pop %v4947
        %v4949 = vmul.f32 %v4945, %v4948
        %v4950 = vsub.f32 %v4893, %v4944
        %v4951 = vmul.f32 %v4950, 1.442695
        %v4952 = vpow.pop %v4951
        %v4953 = vmul.f32 %v4942, %v4952
        %v4954 = vadd.f32 %v4949, %v4953
        %vm4955 = vcmask 0
        %4956 = vst.msk [vmem:[#allocation3] sm:$0x1] %vm4955, %v4954
        %4957 = vst.msk [vmem:[#allocation2] sm:$0x1] %vm4955, %v4944
        %vm4958 = vcmask 57344
        %v4959 = vsel %vm4958, %v817, -inf
        %4960 = vmax.xlane.f32.xlu0 %v4959
        %v4961 = vpop.xlane.xlu0 %4960
        %v4962 = vrot.slane %v4961, 4
        %v4963 = vmax.f32 %v4961, %v4962
        %v4964 = vrot.slane %v4963, 2
        %v4965 = vmax.f32 %v4963, %v4964
        %v4966 = vrot.slane %v4965, 1
        %v4967 = vmax.f32 %v4965, %v4966
        %s4968 = vtos %v4967
        %v4969 = vstv %s4968
        %v4970 = vsub.f32 %v817, %v4969
        %v4971 = vmul.f32 %v4970, 1.442695
        %v4972 = vpow.pop %v4971
        %v4973 = vsel %vm4958, %v4972, 0.0
        %4974 = vadd.xlane.f32.xlu0 %v4973
        %v4975 = vpop.xlane.xlu0 %4974
        %v4976 = vrot.slane %v4975, 4
        %v4977 = vadd.f32 %v4975, %v4976
        %v4978 = vrot.slane %v4977, 2
        %v4979 = vadd.f32 %v4977, %v4978
        %v4980 = vrot.slane %v4979, 1
        %v4981 = vadd.f32 %v4979, %v4980
        %s4982 = vtos %v4981
        %v4983 = vstv %s4982
        %v4984 = vld [vmem:[#allocation4] sm:$0x1]
        %v4985 = vmax.f32 %v4984, %v4969
        %v4986 = vld [vmem:[#allocation5] sm:$0x1]
        %v4987 = vsub.f32 %v4984, %v4985
        %v4988 = vmul.f32 %v4987, 1.442695
        %v4989 = vpow.pop %v4988
        %v4990 = vmul.f32 %v4986, %v4989
        %v4991 = vsub.f32 %v4969, %v4985
        %v4992 = vmul.f32 %v4991, 1.442695
        %v4993 = vpow.pop %v4992
        %v4994 = vmul.f32 %v4983, %v4993
        %v4995 = vadd.f32 %v4990, %v4994
        %4996 = vst.msk [vmem:[#allocation5] sm:$0x1] %vm4955, %v4995
        %4997 = vst.msk [vmem:[#allocation4] sm:$0x1] %vm4955, %v4985
        // Predicated region
        $region49: #{tpu_custom_call.1} parent=31 // pred_check
          %p4998 = pneg %p324
        $region50: #{tpu_custom_call.1} parent=31 // pred_check_branch
          %5000 = sbr.rel (%p4998) target = $region52
        $region51: #{tpu_custom_call.1} parent=31 // pred_region
          %v5001 = vld [vmem:[#allocation2] sm:$0x1]
          %v5002 = vld [vmem:[#allocation3] sm:$0x1]
          %v5003 = vlog2.pop %v5002
          %v5004 = vmul.f32 %v5003, 0.6931472
          %v5005 = vadd.f32 %v5001, %v5004
          %v5006 = vld [vmem:[#allocation4] sm:$0x1]
          %v5007 = vld [vmem:[#allocation5] sm:$0x1]
          %v5008 = vlog2.pop %v5007
          %v5009 = vmul.f32 %v5008, 0.6931472
          %v5010 = vadd.f32 %v5006, %v5009
          %v5012 = vlaneseq
          %v5013 = vshrl.u32 %v5012, 7
          %v5014 = vsub.s32 0, %v5013
          %v5015 = vrot.slane %v5005, %v5014
          %5016 = vset.pattern.permute.xlu0 0
          %5017 = vperm.xlu0 %5016, %v5015
          %v5018 = vpop.permute.xlu0 %5017
          %5020 = vst [vmem:[%s312] sm:$0xff] %v5018
          %v5022 = vlaneseq
          %v5023 = vshrl.u32 %v5022, 7
          %v5024 = vsub.s32 0, %v5023
          %v5025 = vrot.slane %v5010, %v5024
          %5026 = vset.pattern.permute.xlu0 0
          %5027 = vperm.xlu0 %5026, %v5025
          %v5028 = vpop.permute.xlu0 %5027
          %5030 = vst [vmem:[%s319] sm:$0xff] %v5028
        $region52: #{tpu_custom_call.1} parent=31 // pred_fallthru
          _
        %s5031 = sand.u32 %s132, 1
        %s5032 = scalar_lea.sflag [#allocation8], %s5031
        %s5033 = sand.u32 %s132, 1
        %s5034 = smul.addr %s5033, 8
        %s5035 = scalar_lea.vmem [#allocation12], %s5034
        %s5036 = sand.u32 %s158, 1
        %s5037 = scalar_lea.sflag [#allocation14], %s5036
        %s5038 = sand.u32 %s158, 1
        %s5039 = smul.addr %s5038, 8
        %s5040 = scalar_lea.vmem [#allocation13], %s5039
        // Predicated region
        $region53: #{tpu_custom_call.1} parent=31 // pred_check
          %p5041 = pneg %p142
        $region54: #{tpu_custom_call.1} parent=31 // pred_check_branch
          %5043 = sbr.rel (%p5041) target = $region56
        $region55: #{tpu_custom_call.1} parent=31 // pred_region
          %s5045 = ssub.s32 128, 128
          %5046 = vsyncadd %s5032, %s5045
          %s5047 = smul.addr %s32, 128
          %s5048 = scalar_lea.hbm %s3, %s5047
          %s5050 = sshll.u32 %s5035, 4
          %s5051 = int_to_ptr.vmem [resolvable:$true] %s5050
          %5053 = dma.vmem_to_hbm [thread:$0]  %s5051, 128, %s5048, %s5032
        $region56: #{tpu_custom_call.1} parent=31 // pred_fallthru
          _
        // Predicated region
        $region57: #{tpu_custom_call.1} parent=31 // pred_check
          %p5054 = pneg %p168
        $region58: #{tpu_custom_call.1} parent=31 // pred_check_branch
          %5056 = sbr.rel (%p5054) target = $region60
        $region59: #{tpu_custom_call.1} parent=31 // pred_region
          %s5058 = ssub.s32 128, 128
          %5059 = vsyncadd %s5037, %s5058
          %s5060 = smul.addr %s32, 128
          %s5061 = scalar_lea.hbm %s4, %s5060
          %s5063 = sshll.u32 %s5040, 4
          %s5064 = int_to_ptr.vmem [resolvable:$true] %s5063
          %5066 = dma.vmem_to_hbm [thread:$0]  %s5064, 128, %s5061, %s5037
        $region60: #{tpu_custom_call.1} parent=31 // pred_fallthru
          _
      $region32: #{tpu_custom_call.1} parent=5 // pred_fallthru
        _
      %p5067 = scmp.le.s32.totalorder 2, %s23
      // Predicated region
      $region61: #{tpu_custom_call.1} parent=5 // pred_check
        %p5068 = pneg %p5067
      $region62: #{tpu_custom_call.1} parent=5 // pred_check_branch
        %5070 = sbr.rel (%p5068) target = $region64
      $region63: #{tpu_custom_call.1} parent=5 // pred_region
        %s5071 = ssub.s32 %s23, 2
        // Predicated region
        $region65: #{tpu_custom_call.1} parent=63 // pred_check
          %p5072 = pneg %p148
        $region66: #{tpu_custom_call.1} parent=63 // pred_check_branch
          %5074 = sbr.rel (%p5072) target = $region68
        $region67: #{tpu_custom_call.1} parent=63 // pred_region
          %s5075 = sand.u32 %s133, 1
          %s5076 = scalar_lea.sflag [#allocation8], %s5075
          %s5077 = sand.u32 %s133, 1
          %s5078 = smul.addr %s5077, 8
          %s5079 = scalar_lea.vmem [#allocation12], %s5078
          %5080 = dma.done %s5076, 128
        $region68: #{tpu_custom_call.1} parent=63 // pred_fallthru
          _
        // Predicated region
        $region69: #{tpu_custom_call.1} parent=63 // pred_check
          %p5081 = pneg %p174
        $region70: #{tpu_custom_call.1} parent=63 // pred_check_branch
          %5083 = sbr.rel (%p5081) target = $region72
        $region71: #{tpu_custom_call.1} parent=63 // pred_region
          %s5084 = sand.u32 %s159, 1
          %s5085 = scalar_lea.sflag [#allocation14], %s5084
          %s5086 = sand.u32 %s159, 1
          %s5087 = smul.addr %s5086, 8
          %s5088 = scalar_lea.vmem [#allocation13], %s5087
          %5089 = dma.done %s5085, 128
        $region72: #{tpu_custom_call.1} parent=63 // pred_fallthru
          _
      $region64: #{tpu_custom_call.1} parent=5 // pred_fallthru
        _
    $region6: #{tpu_custom_call.1} parent=1 // loop_footer
      %s27 = sadd.s32 1, %s23
    $region7: #{tpu_custom_call.1} parent=1 // loop_footer_branch
      %22 = sbr.rel target = $region3
    $region8: #{tpu_custom_call.1} parent=1 // loop_exit
      _
    %5090 = vsyncpa [#allocation7], 1
    %s5091 = scalar_lea.sflag [#allocation7], 1
    %5092 = vsyncpa %s5091, 1
    %5093 = vsyncpa [#allocation10], 1
    %s5094 = scalar_lea.sflag [#allocation10], 1
    %5095 = vsyncpa %s5094, 1
    %5096 = vsyncpa [#allocation8], 1
    %s5097 = scalar_lea.sflag [#allocation8], 1
    %5098 = vsyncpa %s5097, 1
    %5099 = vsyncpa [#allocation14], 1
    %s5100 = scalar_lea.sflag [#allocation14], 1
    %5101 = vsyncpa %s5100, 1

</llo_original>
